<compile_context>
chip_gen: v6e
topology: v6e:2x2x1
jax: 0.10.0
libtpu: 0.0.40
codegen_flags: <defaults>
</compile_context>

<pallas_src>
import functools

import numpy as np
import jax
import jax.numpy as jnp
from jax.experimental import pallas as pl
from jax.experimental.pallas import tpu as pltpu


def _round_up(x, m):
    return (x + m - 1) // m * m


# ----------------------------------------------------------------------------
# One-time host-side weight packing: fold a Conv3d into a dense matmul.
# ----------------------------------------------------------------------------
def _conv3d_as_matmul(w, b, in_dhw, stride, pad, in_layout):
    """Fold Conv3d (w:(Cout,Cin,k,k,k), b:(Cout,)) into (w_eff, b_eff, out_shape).

    w_eff: (Cin*D*H*W, Cout*Do*Ho*Wo).  Rows index the *unpadded* input volume
    flattened in `in_layout` order ('DHWC' or 'CDHW'); columns index the output
    flattened channel-major (Cout, Do, Ho, Wo) -- i.e. PyTorch NCDHW flatten.
    Zero padding and stride are baked into the scatter pattern.
    """
    w = np.asarray(w, np.float32)
    b = np.asarray(b, np.float32)
    c_out, c_in, k, _, _ = w.shape
    d_in, h_in, w_in = in_dhw
    d_out = (d_in + 2 * pad - k) // stride + 1
    h_out = (h_in + 2 * pad - k) // stride + 1
    w_out = (w_in + 2 * pad - k) // stride + 1

    eff = np.zeros((c_in, d_in, h_in, w_in, c_out, d_out, h_out, w_out),
                   np.float32)
    for od in range(d_out):
        for kd in range(k):
            d = od * stride + kd - pad
            if d < 0 or d >= d_in:
                continue
            for oh in range(h_out):
                for kh in range(k):
                    h = oh * stride + kh - pad
                    if h < 0 or h >= h_in:
                        continue
                    for ow in range(w_out):
                        for kw in range(k):
                            ww = ow * stride + kw - pad
                            if ww < 0 or ww >= w_in:
                                continue
                            eff[:, d, h, ww, :, od, oh, ow] = w[:, :, kd, kh, kw].T

    if in_layout == "DHWC":
        eff = eff.transpose(1, 2, 3, 0, 4, 5, 6, 7)
    elif in_layout != "CDHW":
        raise ValueError(in_layout)
    k_dim = c_in * d_in * h_in * w_in
    n_dim = c_out * d_out * h_out * w_out
    return eff.reshape(k_dim, n_dim), np.repeat(b, d_out * h_out * w_out), \
        (c_out, d_out, h_out, w_out)


def _pad_kn(w, b, k_to, n_to):
    k_dim, n_dim = w.shape
    return (np.pad(w, ((0, k_to - k_dim), (0, n_to - n_dim))),
            np.pad(b, (0, n_to - n_dim)))


def prepare_params(params, obs_dhwc, fc_size, num_outputs):
    """One-time host-side packing of all weights for the fused kernel."""
    d_in, h_in, w_in, c_in = obs_dhwc

    # conv1 consumes the raw obs flattened in (D,H,W,C) order -> no transpose.
    w1, b1, out1 = _conv3d_as_matmul(params["w_conv1"], params["b_conv1"],
                                     (d_in, h_in, w_in), stride=2, pad=1,
                                     in_layout="DHWC")
    _, d1, h1, w1sp = out1
    # conv2 consumes conv1's output flattened channel-major (NCDHW flatten).
    w2, b2, out2 = _conv3d_as_matmul(params["w_conv2"], params["b_conv2"],
                                     (d1, h1, w1sp), stride=2, pad=1,
                                     in_layout="CDHW")
    pre_fc = int(np.prod(out2))
    assert params["w_fc1"].shape[1] == pre_fc, (params["w_fc1"].shape, pre_fc)

    w3 = np.asarray(params["w_fc1"], np.float32).T      # (pre_fc, fc_size)
    b3 = np.asarray(params["b_fc1"], np.float32)
    w4 = np.asarray(params["w_act"], np.float32).T      # (fc_size, num_outputs)
    b4 = np.asarray(params["b_act"], np.float32)

    # Chain-pad every K / N dim to a multiple of 128 so the MXU sees aligned,
    # lane-dense tiles.  Padded activation columns stay exactly zero
    # (zero weights + zero bias + relu), so results are unchanged.
    k1, n1 = w1.shape
    k1p, n1p = _round_up(k1, 128), _round_up(n1, 128)
    w1, b1 = _pad_kn(w1, b1, k1p, n1p)
    n2p = _round_up(w2.shape[1], 128)
    w2, b2 = _pad_kn(w2, b2, n1p, n2p)
    n3p = _round_up(fc_size, 128)
    w3, b3 = _pad_kn(w3, b3, n2p, n3p)
    n4p = _round_up(num_outputs, 128)
    w4, b4 = _pad_kn(w4, b4, n3p, n4p)

    as_w = lambda a: jnp.asarray(a, jnp.bfloat16)        # bf16 MXU operands
    as_b = lambda a: jnp.asarray(a, jnp.float32).reshape(1, -1)
    return {
        "w1": as_w(w1), "b1": as_b(b1),
        "w2": as_w(w2), "b2": as_b(b2),
        "w3": as_w(w3), "b3": as_b(b3),
        "w4": as_w(w4), "b4": as_b(b4),
        "dims": {"k_in": k1, "k_in_pad": k1p,
                 "fc_size": fc_size, "num_outputs": num_outputs},
    }


# ----------------------------------------------------------------------------
# Fused Pallas kernel: conv1 -> relu -> conv2 -> relu -> fc1 -> relu -> fc2,
# all intermediates kept on-chip; bf16 matmuls with f32 accumulation.
# ----------------------------------------------------------------------------
def _fused_forward_kernel(x_ref, w1_ref, b1_ref, w2_ref, b2_ref,
                          w3_ref, b3_ref, w4_ref, b4_ref,
                          feat_ref, act_ref):
    bf16, f32 = jnp.bfloat16, jnp.float32
    x = x_ref[...].astype(bf16)          # f32 obs tile -> bf16 in VMEM/vregs
    a = jnp.dot(x, w1_ref[...], preferred_element_type=f32)
    a = jnp.maximum(a + b1_ref[...], 0.0)                       # conv1 + relu
    a = jnp.dot(a.astype(bf16), w2_ref[...], preferred_element_type=f32)
    a = jnp.maximum(a + b2_ref[...], 0.0)                       # conv2 + relu
    a = jnp.dot(a.astype(bf16), w3_ref[...], preferred_element_type=f32)
    feats = jnp.maximum(a + b3_ref[...], 0.0)                   # fc1 + relu
    out = jnp.dot(feats.astype(bf16), w4_ref[...], preferred_element_type=f32)
    act_ref[...] = (out + b4_ref[...]).astype(act_ref.dtype)    # action branch
    feat_ref[...] = feats.astype(feat_ref.dtype)                # bf16 writeback


def _pick_batch_tile(b_sz):
    """Generation-aware batch tile.

    - B >= 512: 256/512-row tiles amortize the ~0.35us per-grid-step overhead
      on v6e/v7x (per-step VMEM stays well under the 32 MiB scoped default).
    - B in [128, 256): 64-row tiles force grid >= 2 so v7x's second TensorCore
      is used via the "parallel" batch axis.
    - B < 128: one step, rounded to 16 rows (native bf16 sublane tile (16,128)).
    """
    if b_sz >= 1024:
        return 512
    if b_sz >= 512:
        return 256
    if b_sz >= 256:
        return 128
    if b_sz >= 128:
        return 64
    return _round_up(b_sz, 16)


def _resident_spec(shape):
    """BlockSpec for a grid-invariant (weight / bias) operand.

    Its block index never changes across the grid, so the default second
    pipeline buffer is pure VMEM waste -> request single buffering.  Falls
    back to the default if this jax version lacks pipeline_mode / Buffered.
    """
    idx_map = lambda i: (0, 0)
    try:
        return pl.BlockSpec(shape, idx_map, pipeline_mode=pl.Buffered(1))
    except Exception:                                 # pragma: no cover
        return pl.BlockSpec(shape, idx_map)


def forward(prepped, obs):
    """obs: (B, D, H, W, C) -> (action_out (B, num_outputs) f32, feats (B, fc_size) bf16)."""
    dims = prepped["dims"]
    b_sz = obs.shape[0]
    x = obs.reshape(b_sz, -1)                       # contiguous -> free reshape
    if x.dtype != jnp.float32:                      # module does input.float()
        x = x.astype(jnp.float32)
    assert x.shape[1] == dims["k_in"], (x.shape, dims["k_in"])

    tb = _pick_batch_tile(b_sz)
    bp = _round_up(b_sz, tb)
    pad_rows, pad_cols = bp - b_sz, dims["k_in_pad"] - dims["k_in"]
    if pad_rows or pad_cols:
        x = jnp.pad(x, ((0, pad_rows), (0, pad_cols)))

    k1p = dims["k_in_pad"]
    n3 = prepped["w3"].shape[1]
    n4 = prepped["w4"].shape[1]

    # VMEM budget at the largest tile (tb=512): 2 x (512x2048 f32 x-tile) +
    # weights (+1 buffer when Buffered(1) is honoured) + 2x2 output buffers +
    # f32 intermediates ~= 15 MiB -- under the 32 MiB scoped default on
    # v5e/v6e/v7x, so no explicit vmem_limit_bytes is needed.
    feats_p, act_p = pl.pallas_call(
        _fused_forward_kernel,
        grid=(bp // tb,),
        in_specs=[
            pl.BlockSpec((tb, k1p), lambda i: (i, 0)),
            _resident_spec(prepped["w1"].shape), _resident_spec(prepped["b1"].shape),
            _resident_spec(prepped["w2"].shape), _resident_spec(prepped["b2"].shape),
            _resident_spec(prepped["w3"].shape), _resident_spec(prepped["b3"].shape),
            _resident_spec(prepped["w4"].shape), _resident_spec(prepped["b4"].shape),
        ],
        out_specs=(
            pl.BlockSpec((tb, n3), lambda i: (i, 0)),
            pl.BlockSpec((tb, n4), lambda i: (i, 0)),
        ),
        out_shape=(
            jax.ShapeDtypeStruct((bp, n3), jnp.bfloat16),   # feats: bf16 writeback
            jax.ShapeDtypeStruct((bp, n4), jnp.float32),    # action logits: f32
        ),
        compiler_params=pltpu.CompilerParams(
            dimension_semantics=("parallel",)),
    )(x, prepped["w1"], prepped["b1"], prepped["w2"], prepped["b2"],
      prepped["w3"], prepped["b3"], prepped["w4"], prepped["b4"])

    feats = feats_p[:b_sz, :dims["fc_size"]]
    action_out = act_p[:b_sz, :dims["num_outputs"]]
    return action_out, feats


# ----------------------------------------------------------------------------
# Pure-JAX reference (ground truth) + parameter init
# ----------------------------------------------------------------------------
def forward_ref(params, obs):
    x = jnp.transpose(obs, (0, 4, 1, 2, 3)).astype(jnp.float32)
    dn = jax.lax.conv_dimension_numbers(x.shape, params["w_conv1"].shape,
                                        ("NCDHW", "OIDHW", "NCDHW"))
    x = jax.lax.conv_general_dilated(x, params["w_conv1"], (2, 2, 2),
                                     [(1, 1)] * 3, dimension_numbers=dn)
    x = jax.nn.relu(x + params["b_conv1"][None, :, None, None, None])
    dn2 = jax.lax.conv_dimension_numbers(x.shape, params["w_conv2"].shape,
                                         ("NCDHW", "OIDHW", "NCDHW"))
    x = jax.lax.conv_general_dilated(x, params["w_conv2"], (2, 2, 2),
                                     [(1, 1)] * 3, dimension_numbers=dn2)
    x = jax.nn.relu(x + params["b_conv2"][None, :, None, None, None])
    x = x.reshape(x.shape[0], -1)
    feats = jax.nn.relu(x @ params["w_fc1"].T + params["b_fc1"])
    action = feats @ params["w_act"].T + params["b_act"]
    return action, feats


def init_params(key, in_channels, conv_filters, fc_size, num_outputs, pre_fc):
    ks = jax.random.split(key, 8)
    scale = 0.05
    return {
        "w_conv1": scale * jax.random.normal(ks[0], (conv_filters, in_channels, 7, 7, 7), jnp.float32),
        "b_conv1": scale * jax.random.normal(ks[1], (conv_filters,), jnp.float32),
        "w_conv2": scale * jax.random.normal(ks[2], (128, 64, 3, 3, 3), jnp.float32),
        "b_conv2": scale * jax.random.normal(ks[3], (128,), jnp.float32),
        "w_fc1":   scale * jax.random.normal(ks[4], (fc_size, pre_fc), jnp.float32),
        "b_fc1":   scale * jax.random.normal(ks[5], (fc_size,), jnp.float32),
        "w_act":   scale * jax.random.normal(ks[6], (num_outputs, fc_size), jnp.float32),
        "b_act":   scale * jax.random.normal(ks[7], (num_outputs,), jnp.float32),
    }


if __name__ == "__main__":
    key = jax.random.PRNGKey(0)
    # obs_space.shape = (D, H, W, C) = (8, 8, 8, 4); batch = 2
    B, D, H, W, C = 2, 8, 8, 8, 4
    conv_filters, fc_size, num_outputs = 64, 128, 8

    k_obs, k_par = jax.random.split(key)
    obs = jax.random.normal(k_obs, (B, D, H, W, C), jnp.float32)

    def _osz(n, k, s, p):
        return (n + 2 * p - k) // s + 1
    pre_fc = 128 * _osz(_osz(D, 7, 2, 1), 3, 2, 1) \
                 * _osz(_osz(H, 7, 2, 1), 3, 2, 1) \
                 * _osz(_osz(W, 7, 2, 1), 3, 2, 1)

    params = init_params(k_par, C, conv_filters, fc_size, num_outputs, pre_fc)
    prepped = prepare_params(params, (D, H, W, C), fc_size, num_outputs)

    fwd = jax.jit(functools.partial(forward, prepped))
    action_out, feats = fwd(obs)
    action_out = jax.block_until_ready(action_out)
    feats = jax.block_until_ready(feats)

    ref_action, ref_feats = forward_ref(params, obs)
    assert action_out.shape == (B, num_outputs), action_out.shape
    assert feats.shape == (B, fc_size), feats.shape
    # bf16 MXU operands (and a bf16 feats writeback) vs the f32 PyTorch model
    # => loose tolerance; acceptable for RL features.
    assert jnp.allclose(action_out, ref_action, rtol=2e-2, atol=2e-2), (
        "Pallas action_out diverges from reference; max abs diff = "
        f"{float(jnp.max(jnp.abs(action_out - ref_action)))}")
    assert jnp.allclose(feats.astype(jnp.float32), ref_feats, rtol=2e-2, atol=2e-2), (
        "Pallas feats diverge from reference; max abs diff = "
        f"{float(jnp.max(jnp.abs(feats.astype(jnp.float32) - ref_feats)))}")

    print("KERNEL_OK")
</pallas_src>

<mosaic_0001>
module attributes {stable_mosaic.version = 11 : i64} {
  func.func @_fused_forward_kernel(%arg0: i32, %arg1: memref<16x2048xf32, #tpu.memory_space<vmem>>, %arg2: memref<2048x512xbf16, #tpu.memory_space<vmem>>, %arg3: memref<1x512xf32, #tpu.memory_space<vmem>>, %arg4: memref<512x128xbf16, #tpu.memory_space<vmem>>, %arg5: memref<1x128xf32, #tpu.memory_space<vmem>>, %arg6: memref<128x128xbf16, #tpu.memory_space<vmem>>, %arg7: memref<1x128xf32, #tpu.memory_space<vmem>>, %arg8: memref<128x128xbf16, #tpu.memory_space<vmem>>, %arg9: memref<1x128xf32, #tpu.memory_space<vmem>>, %arg10: memref<16x128xbf16, #tpu.memory_space<vmem>>, %arg11: memref<16x128xf32, #tpu.memory_space<vmem>>) attributes {dimension_semantics = [#tpu.dimension_semantics<parallel>], iteration_bounds = array<i64: 1>, scalar_prefetch = 0 : i64, scratch_operands = 0 : i64, tpu.core_type = #tpu.core_type<tc>, window_params = [{transform_indices = @transform_0, window_bounds = array<i64: 16, 2048>}, {pipeline_mode = #tpu.pipeline_mode<synchronous>, transform_indices = @transform_1, window_bounds = array<i64: 2048, 512>}, {pipeline_mode = #tpu.pipeline_mode<synchronous>, transform_indices = @transform_2, window_bounds = array<i64: 1, 512>}, {pipeline_mode = #tpu.pipeline_mode<synchronous>, transform_indices = @transform_3, window_bounds = array<i64: 512, 128>}, {pipeline_mode = #tpu.pipeline_mode<synchronous>, transform_indices = @transform_4, window_bounds = array<i64: 1, 128>}, {pipeline_mode = #tpu.pipeline_mode<synchronous>, transform_indices = @transform_5, window_bounds = array<i64: 128, 128>}, {pipeline_mode = #tpu.pipeline_mode<synchronous>, transform_indices = @transform_6, window_bounds = array<i64: 1, 128>}, {pipeline_mode = #tpu.pipeline_mode<synchronous>, transform_indices = @transform_7, window_bounds = array<i64: 128, 128>}, {pipeline_mode = #tpu.pipeline_mode<synchronous>, transform_indices = @transform_8, window_bounds = array<i64: 1, 128>}, {transform_indices = @transform_9, window_bounds = array<i64: 16, 128>}, {transform_indices = @transform_10, window_bounds = array<i64: 16, 128>}]} {
    %c0 = arith.constant 0 : index
    %c0_0 = arith.constant 0 : index
    %0 = vector.load %arg1[%c0, %c0_0] : memref<16x2048xf32, #tpu.memory_space<vmem>>, vector<16x2048xf32>
    %1 = arith.truncf %0 : vector<16x2048xf32> to vector<16x2048xbf16>
    %c0_1 = arith.constant 0 : index
    %c0_2 = arith.constant 0 : index
    %2 = vector.load %arg2[%c0_1, %c0_2] : memref<2048x512xbf16, #tpu.memory_space<vmem>>, vector<2048x512xbf16>
    %cst = arith.constant dense<0.000000e+00> : vector<16x512xf32>
    %3 = tpu.matmul %1, %2, %cst {dimension_numbers = #tpu.dot_dimension_numbers<[1], [0], [0], [1], [0, 0, 1, 1], [], []>} : vector<16x2048xbf16>, vector<2048x512xbf16>, vector<16x512xf32> -> vector<16x512xf32>
    %c0_3 = arith.constant 0 : index
    %c0_4 = arith.constant 0 : index
    %4 = vector.load %arg3[%c0_3, %c0_4] : memref<1x512xf32, #tpu.memory_space<vmem>>, vector<1x512xf32>
    %5 = vector.broadcast %4 : vector<1x512xf32> to vector<16x512xf32>
    %6 = arith.addf %3, %5 : vector<16x512xf32>
    %cst_5 = arith.constant 0.000000e+00 : f32
    %7 = vector.broadcast %cst_5 : f32 to vector<16x512xf32>
    %8 = arith.maximumf %6, %7 : vector<16x512xf32>
    %9 = arith.truncf %8 : vector<16x512xf32> to vector<16x512xbf16>
    %c0_6 = arith.constant 0 : index
    %c0_7 = arith.constant 0 : index
    %10 = vector.load %arg4[%c0_6, %c0_7] : memref<512x128xbf16, #tpu.memory_space<vmem>>, vector<512x128xbf16>
    %cst_8 = arith.constant dense<0.000000e+00> : vector<16x128xf32>
    %11 = tpu.matmul %9, %10, %cst_8 {dimension_numbers = #tpu.dot_dimension_numbers<[1], [0], [0], [1], [0, 0, 1, 1], [], []>} : vector<16x512xbf16>, vector<512x128xbf16>, vector<16x128xf32> -> vector<16x128xf32>
    %c0_9 = arith.constant 0 : index
    %c0_10 = arith.constant 0 : index
    %12 = vector.load %arg5[%c0_9, %c0_10] : memref<1x128xf32, #tpu.memory_space<vmem>>, vector<1x128xf32>
    %13 = vector.broadcast %12 : vector<1x128xf32> to vector<16x128xf32>
    %14 = arith.addf %11, %13 : vector<16x128xf32>
    %cst_11 = arith.constant 0.000000e+00 : f32
    %15 = vector.broadcast %cst_11 : f32 to vector<16x128xf32>
    %16 = arith.maximumf %14, %15 : vector<16x128xf32>
    %17 = arith.truncf %16 : vector<16x128xf32> to vector<16x128xbf16>
    %c0_12 = arith.constant 0 : index
    %c0_13 = arith.constant 0 : index
    %18 = vector.load %arg6[%c0_12, %c0_13] : memref<128x128xbf16, #tpu.memory_space<vmem>>, vector<128x128xbf16>
    %cst_14 = arith.constant dense<0.000000e+00> : vector<16x128xf32>
    %19 = tpu.matmul %17, %18, %cst_14 {dimension_numbers = #tpu.dot_dimension_numbers<[1], [0], [0], [1], [0, 0, 1, 1], [], []>} : vector<16x128xbf16>, vector<128x128xbf16>, vector<16x128xf32> -> vector<16x128xf32>
    %c0_15 = arith.constant 0 : index
    %c0_16 = arith.constant 0 : index
    %20 = vector.load %arg7[%c0_15, %c0_16] : memref<1x128xf32, #tpu.memory_space<vmem>>, vector<1x128xf32>
    %21 = vector.broadcast %20 : vector<1x128xf32> to vector<16x128xf32>
    %22 = arith.addf %19, %21 : vector<16x128xf32>
    %cst_17 = arith.constant 0.000000e+00 : f32
    %23 = vector.broadcast %cst_17 : f32 to vector<16x128xf32>
    %24 = arith.maximumf %22, %23 : vector<16x128xf32>
    %25 = arith.truncf %24 : vector<16x128xf32> to vector<16x128xbf16>
    %c0_18 = arith.constant 0 : index
    %c0_19 = arith.constant 0 : index
    %26 = vector.load %arg8[%c0_18, %c0_19] : memref<128x128xbf16, #tpu.memory_space<vmem>>, vector<128x128xbf16>
    %cst_20 = arith.constant dense<0.000000e+00> : vector<16x128xf32>
    %27 = tpu.matmul %25, %26, %cst_20 {dimension_numbers = #tpu.dot_dimension_numbers<[1], [0], [0], [1], [0, 0, 1, 1], [], []>} : vector<16x128xbf16>, vector<128x128xbf16>, vector<16x128xf32> -> vector<16x128xf32>
    %c0_21 = arith.constant 0 : index
    %c0_22 = arith.constant 0 : index
    %28 = vector.load %arg9[%c0_21, %c0_22] : memref<1x128xf32, #tpu.memory_space<vmem>>, vector<1x128xf32>
    %29 = vector.broadcast %28 : vector<1x128xf32> to vector<16x128xf32>
    %30 = arith.addf %27, %29 : vector<16x128xf32>
    %c0_23 = arith.constant 0 : index
    %c0_24 = arith.constant 0 : index
    %31 = vector.load %arg11[%c0_23, %c0_24] : memref<16x128xf32, #tpu.memory_space<vmem>>, vector<16x128xf32>
    tpu.vector_store %arg11[%c0_23, %c0_24], %30 {strides = array<i32>} : memref<16x128xf32, #tpu.memory_space<vmem>>, vector<16x128xf32>,
    %32 = arith.truncf %24 : vector<16x128xf32> to vector<16x128xbf16>
    %c0_25 = arith.constant 0 : index
    %c0_26 = arith.constant 0 : index
    %33 = vector.load %arg10[%c0_25, %c0_26] : memref<16x128xbf16, #tpu.memory_space<vmem>>, vector<16x128xbf16>
    tpu.vector_store %arg10[%c0_25, %c0_26], %32 {strides = array<i32>} : memref<16x128xbf16, #tpu.memory_space<vmem>>, vector<16x128xbf16>,
    return
  }
  func.func @transform_0(%arg0: i32) -> (i32, i32) {
    %c0_i32 = arith.constant 0 : i32
    %c0_i32_0 = arith.constant 0 : i32
    return %arg0, %c0_i32 : i32, i32
  }
  func.func @transform_1(%arg0: i32) -> (i32, i32) {
    %c0_i32 = arith.constant 0 : i32
    %c0_i32_0 = arith.constant 0 : i32
    %c0_i32_1 = arith.constant 0 : i32
    return %c0_i32, %c0_i32_0 : i32, i32
  }
  func.func @transform_2(%arg0: i32) -> (i32, i32) {
    %c0_i32 = arith.constant 0 : i32
    %c0_i32_0 = arith.constant 0 : i32
    %c0_i32_1 = arith.constant 0 : i32
    return %c0_i32, %c0_i32_0 : i32, i32
  }
  func.func @transform_3(%arg0: i32) -> (i32, i32) {
    %c0_i32 = arith.constant 0 : i32
    %c0_i32_0 = arith.constant 0 : i32
    %c0_i32_1 = arith.constant 0 : i32
    return %c0_i32, %c0_i32_0 : i32, i32
  }
  func.func @transform_4(%arg0: i32) -> (i32, i32) {
    %c0_i32 = arith.constant 0 : i32
    %c0_i32_0 = arith.constant 0 : i32
    %c0_i32_1 = arith.constant 0 : i32
    return %c0_i32, %c0_i32_0 : i32, i32
  }
  func.func @transform_5(%arg0: i32) -> (i32, i32) {
    %c0_i32 = arith.constant 0 : i32
    %c0_i32_0 = arith.constant 0 : i32
    %c0_i32_1 = arith.constant 0 : i32
    return %c0_i32, %c0_i32_0 : i32, i32
  }
  func.func @transform_6(%arg0: i32) -> (i32, i32) {
    %c0_i32 = arith.constant 0 : i32
    %c0_i32_0 = arith.constant 0 : i32
    %c0_i32_1 = arith.constant 0 : i32
    return %c0_i32, %c0_i32_0 : i32, i32
  }
  func.func @transform_7(%arg0: i32) -> (i32, i32) {
    %c0_i32 = arith.constant 0 : i32
    %c0_i32_0 = arith.constant 0 : i32
    %c0_i32_1 = arith.constant 0 : i32
    return %c0_i32, %c0_i32_0 : i32, i32
  }
  func.func @transform_8(%arg0: i32) -> (i32, i32) {
    %c0_i32 = arith.constant 0 : i32
    %c0_i32_0 = arith.constant 0 : i32
    %c0_i32_1 = arith.constant 0 : i32
    return %c0_i32, %c0_i32_0 : i32, i32
  }
  func.func @transform_9(%arg0: i32) -> (i32, i32) {
    %c0_i32 = arith.constant 0 : i32
    %c0_i32_0 = arith.constant 0 : i32
    return %arg0, %c0_i32 : i32, i32
  }
  func.func @transform_10(%arg0: i32) -> (i32, i32) {
    %c0_i32 = arith.constant 0 : i32
    %c0_i32_0 = arith.constant 0 : i32
    return %arg0, %c0_i32 : i32, i32
  }
}

</mosaic_0001>

<llo_original>
// kernel: forward.1
$region0: #{forward.1}
  #allocation0 [shape = 'u32[]', space=smem, size = 0x4, offset = 0x4, fixed_abs, tag = 'smem constant byte address 0x4 - core index']
  #allocation1 [shape = 'u32[144,128]{1,0:T(1,128)}', space=vmem, size = 0x12000, scoped, tag = 'internal scratch']
  %s0 = inlined_call_operand.vmem [shape: f32[16,2048], index: 0, kind: input, shape index: {}]
  %s1 = inlined_call_operand.hbm [shape: bf16[2048,512], index: 1, kind: input, shape index: {}]
  %s2 = inlined_call_operand.hbm [shape: f32[1,512], index: 2, kind: input, shape index: {}]
  %s3 = inlined_call_operand.hbm [shape: bf16[512,128], index: 3, kind: input, shape index: {}]
  %s4 = inlined_call_operand.hbm [shape: f32[1,128], index: 4, kind: input, shape index: {}]
  %s5 = inlined_call_operand.hbm [shape: bf16[128,128], index: 5, kind: input, shape index: {}]
  %s6 = inlined_call_operand.hbm [shape: f32[1,128], index: 6, kind: input, shape index: {}]
  %s7 = inlined_call_operand.hbm [shape: bf16[128,128], index: 7, kind: input, shape index: {}]
  %s8 = inlined_call_operand.hbm [shape: f32[1,128], index: 8, kind: input, shape index: {}]
  %s9 = inlined_call_operand.vmem [shape: bf16[16,128], index: 9, kind: output, shape index: {0}]
  %s10 = inlined_call_operand.vmem [shape: f32[16,128], index: 10, kind: output, shape index: {1}]
  %11 = xla_tuple %s9, %s10
  %s12 = sld [smem:[#allocation0]]
  $region86: #{forward.1} parent=0
    _
  %s14 = ssub.s32 1, %s12
  %s15 = scalar_select 0, %s14, %s12
  $region1: #{forward.1} parent=0
    #allocation2 [shape = 'u8[2097152]{0}', space=vmem, size = 0x200000, scoped, tag = 'input window, operand 1, single buffered']
    #allocation3 [shape = 's32[1]{0}', space=sflag, size = 0x4, scoped, tag = 'scoped memory for forward.1']
    #allocation4 [shape = 'u8[2048]{0}', space=vmem, size = 0x800, scoped, tag = 'input window, operand 2, single buffered']
    #allocation5 [shape = 's32[1]{0}', space=sflag, size = 0x4, scoped, tag = 'scoped memory for forward.1']
    #allocation6 [shape = 'u8[131072]{0}', space=vmem, size = 0x20000, scoped, tag = 'input window, operand 3, single buffered']
    #allocation7 [shape = 'u8[512]{0}', space=vmem, size = 0x400, scoped, tag = 'input window, operand 4, single buffered']
    #allocation8 [shape = 's32[1]{0}', space=sflag, size = 0x4, scoped, tag = 'scoped memory for forward.1']
    #allocation9 [shape = 'u8[32768]{0}', space=vmem, size = 0x8000, scoped, tag = 'input window, operand 5, single buffered']
    #allocation10 [shape = 'u8[512]{0}', space=vmem, size = 0x400, scoped, tag = 'input window, operand 6, single buffered']
    #allocation11 [shape = 's32[1]{0}', space=sflag, size = 0x4, scoped, tag = 'scoped memory for forward.1']
    #allocation12 [shape = 'u8[32768]{0}', space=vmem, size = 0x8000, scoped, tag = 'input window, operand 7, single buffered']
    #allocation13 [shape = 'u8[512]{0}', space=vmem, size = 0x400, scoped, tag = 'input window, operand 8, single buffered']
    #allocation14 [shape = 's32[1]{0}', space=sflag, size = 0x4, scoped, tag = 'scoped memory for forward.1']
    %16 = vsyncpa [#allocation3], 0
    %17 = vsyncpa [#allocation5], 0
    %18 = vsyncpa [#allocation8], 0
    %19 = vsyncpa [#allocation11], 0
    %20 = vsyncpa [#allocation14], 0
    // Predicated region
    $region2: #{forward.1} parent=1 // pred_check
      _
    $region3: #{forward.1} parent=1 // pred_check_branch
      %22 = sbr.rel (0) target = $region5
    $region4: #{forward.1} parent=1 // pred_region
      _
    $region5: #{forward.1} parent=1 // pred_fallthru
      _
    // Predicated region
    $region6: #{forward.1} parent=1 // pred_check
      _
    $region7: #{forward.1} parent=1 // pred_check_branch
      %24 = sbr.rel (0) target = $region9
    $region8: #{forward.1} parent=1 // pred_region
      %s26 = ssub.s32 65536, 65536
      %27 = vsyncadd [#allocation3], %s26
      %s28 = sshll.u32 [#allocation2], 4
      %s29 = int_to_ptr.vmem [resolvable:$true] %s28
      %34 = dma.hbm_to_vmem [thread:$0]  %s1, 65536, %s29, [#allocation3], 256, 256, 16
    $region9: #{forward.1} parent=1 // pred_fallthru
      _
    // Predicated region
    $region10: #{forward.1} parent=1 // pred_check
      _
    $region11: #{forward.1} parent=1 // pred_check_branch
      %36 = sbr.rel (0) target = $region13
    $region12: #{forward.1} parent=1 // pred_region
      %s38 = ssub.s32 64, 64
      %39 = vsyncadd [#allocation5], %s38
      %s41 = sshll.u32 [#allocation4], 4
      %s42 = int_to_ptr.vmem [resolvable:$true] %s41
      %44 = dma.hbm_to_vmem [thread:$0]  %s2, 64, %s42, [#allocation5]
    $region13: #{forward.1} parent=1 // pred_fallthru
      _
    // Predicated region
    $region14: #{forward.1} parent=1 // pred_check
      _
    $region15: #{forward.1} parent=1 // pred_check_branch
      %46 = sbr.rel (0) target = $region17
    $region16: #{forward.1} parent=1 // pred_region
      %s48 = ssub.s32 4096, 4096
      %49 = vsyncadd [#allocation5], %s48
      %s50 = sshll.u32 [#allocation6], 4
      %s51 = int_to_ptr.vmem [resolvable:$true] %s50
      %56 = dma.hbm_to_vmem [thread:$0]  %s3, 4096, %s51, [#allocation5], 64, 64, 4
    $region17: #{forward.1} parent=1 // pred_fallthru
      _
    // Predicated region
    $region18: #{forward.1} parent=1 // pred_check
      _
    $region19: #{forward.1} parent=1 // pred_check_branch
      %58 = sbr.rel (0) target = $region21
    $region20: #{forward.1} parent=1 // pred_region
      %s60 = ssub.s32 16, 16
      %61 = vsyncadd [#allocation8], %s60
      %s63 = sshll.u32 [#allocation7], 4
      %s64 = int_to_ptr.vmem [resolvable:$true] %s63
      %66 = dma.hbm_to_vmem [thread:$0]  %s4, 16, %s64, [#allocation8]
    $region21: #{forward.1} parent=1 // pred_fallthru
      _
    // Predicated region
    $region22: #{forward.1} parent=1 // pred_check
      _
    $region23: #{forward.1} parent=1 // pred_check_branch
      %68 = sbr.rel (0) target = $region25
    $region24: #{forward.1} parent=1 // pred_region
      %s70 = ssub.s32 1024, 1024
      %71 = vsyncadd [#allocation8], %s70
      %s72 = sshll.u32 [#allocation9], 4
      %s73 = int_to_ptr.vmem [resolvable:$true] %s72
      %78 = dma.hbm_to_vmem [thread:$0]  %s5, 1024, %s73, [#allocation8], 64, 64, 4
    $region25: #{forward.1} parent=1 // pred_fallthru
      _
    // Predicated region
    $region26: #{forward.1} parent=1 // pred_check
      _
    $region27: #{forward.1} parent=1 // pred_check_branch
      %80 = sbr.rel (0) target = $region29
    $region28: #{forward.1} parent=1 // pred_region
      %s82 = ssub.s32 16, 16
      %83 = vsyncadd [#allocation11], %s82
      %s85 = sshll.u32 [#allocation10], 4
      %s86 = int_to_ptr.vmem [resolvable:$true] %s85
      %88 = dma.hbm_to_vmem [thread:$0]  %s6, 16, %s86, [#allocation11]
    $region29: #{forward.1} parent=1 // pred_fallthru
      _
    // Predicated region
    $region30: #{forward.1} parent=1 // pred_check
      _
    $region31: #{forward.1} parent=1 // pred_check_branch
      %90 = sbr.rel (0) target = $region33
    $region32: #{forward.1} parent=1 // pred_region
      %s92 = ssub.s32 1024, 1024
      %93 = vsyncadd [#allocation11], %s92
      %s94 = sshll.u32 [#allocation12], 4
      %s95 = int_to_ptr.vmem [resolvable:$true] %s94
      %100 = dma.hbm_to_vmem [thread:$0]  %s7, 1024, %s95, [#allocation11], 64, 64, 4
    $region33: #{forward.1} parent=1 // pred_fallthru
      _
    // Predicated region
    $region34: #{forward.1} parent=1 // pred_check
      _
    $region35: #{forward.1} parent=1 // pred_check_branch
      %102 = sbr.rel (0) target = $region37
    $region36: #{forward.1} parent=1 // pred_region
      %s104 = ssub.s32 16, 16
      %105 = vsyncadd [#allocation14], %s104
      %s107 = sshll.u32 [#allocation13], 4
      %s108 = int_to_ptr.vmem [resolvable:$true] %s107
      %110 = dma.hbm_to_vmem [thread:$0]  %s8, 16, %s108, [#allocation14]
    $region37: #{forward.1} parent=1 // pred_fallthru
      _
    // Predicated region
    $region38: #{forward.1} parent=1 // pred_check
      _
    $region39: #{forward.1} parent=1 // pred_check_branch
      %112 = sbr.rel (0) target = $region41
    $region40: #{forward.1} parent=1 // pred_region
      %113 = dma.done [#allocation3], 65536
    $region41: #{forward.1} parent=1 // pred_fallthru
      _
    // Predicated region
    $region42: #{forward.1} parent=1 // pred_check
      _
    $region43: #{forward.1} parent=1 // pred_check_branch
      %115 = sbr.rel (0) target = $region45
    $region44: #{forward.1} parent=1 // pred_region
      %116 = dma.done [#allocation5], 64
    $region45: #{forward.1} parent=1 // pred_fallthru
      _
    // Predicated region
    $region46: #{forward.1} parent=1 // pred_check
      _
    $region47: #{forward.1} parent=1 // pred_check_branch
      %118 = sbr.rel (0) target = $region49
    $region48: #{forward.1} parent=1 // pred_region
      %119 = dma.done [#allocation5], 4096
    $region49: #{forward.1} parent=1 // pred_fallthru
      _
    // Predicated region
    $region50: #{forward.1} parent=1 // pred_check
      _
    $region51: #{forward.1} parent=1 // pred_check_branch
      %121 = sbr.rel (0) target = $region53
    $region52: #{forward.1} parent=1 // pred_region
      %122 = dma.done [#allocation8], 16
    $region53: #{forward.1} parent=1 // pred_fallthru
      _
    // Predicated region
    $region54: #{forward.1} parent=1 // pred_check
      _
    $region55: #{forward.1} parent=1 // pred_check_branch
      %124 = sbr.rel (0) target = $region57
    $region56: #{forward.1} parent=1 // pred_region
      %125 = dma.done [#allocation8], 1024
    $region57: #{forward.1} parent=1 // pred_fallthru
      _
    // Predicated region
    $region58: #{forward.1} parent=1 // pred_check
      _
    $region59: #{forward.1} parent=1 // pred_check_branch
      %127 = sbr.rel (0) target = $region61
    $region60: #{forward.1} parent=1 // pred_region
      %128 = dma.done [#allocation11], 16
    $region61: #{forward.1} parent=1 // pred_fallthru
      _
    // Predicated region
    $region62: #{forward.1} parent=1 // pred_check
      _
    $region63: #{forward.1} parent=1 // pred_check_branch
      %130 = sbr.rel (0) target = $region65
    $region64: #{forward.1} parent=1 // pred_region
      %131 = dma.done [#allocation11], 1024
    $region65: #{forward.1} parent=1 // pred_fallthru
      _
    // Predicated region
    $region66: #{forward.1} parent=1 // pred_check
      _
    $region67: #{forward.1} parent=1 // pred_check_branch
      %133 = sbr.rel (0) target = $region69
    $region68: #{forward.1} parent=1 // pred_region
      %134 = dma.done [#allocation14], 16
    $region69: #{forward.1} parent=1 // pred_fallthru
      _
    %v136 = vld [vmem:[%s0] sm:$0xff]
    %v137 = vld [vmem:[%s0 + $0x8] sm:$0xff]
    %v138 = vld [vmem:[%s0 + $0x10] sm:$0xff]
    %v139 = vld [vmem:[%s0 + $0x18] sm:$0xff]
    %v140 = vld [vmem:[%s0 + $0x20] sm:$0xff]
    %v141 = vld [vmem:[%s0 + $0x28] sm:$0xff]
    %v142 = vld [vmem:[%s0 + $0x30] sm:$0xff]
    %v143 = vld [vmem:[%s0 + $0x38] sm:$0xff]
    %v144 = vld [vmem:[%s0 + $0x40] sm:$0xff]
    %v145 = vld [vmem:[%s0 + $0x48] sm:$0xff]
    %v146 = vld [vmem:[%s0 + $0x50] sm:$0xff]
    %v147 = vld [vmem:[%s0 + $0x58] sm:$0xff]
    %v148 = vld [vmem:[%s0 + $0x60] sm:$0xff]
    %v149 = vld [vmem:[%s0 + $0x68] sm:$0xff]
    %v150 = vld [vmem:[%s0 + $0x70] sm:$0xff]
    %v151 = vld [vmem:[%s0 + $0x78] sm:$0xff]
    %v152 = vld [vmem:[%s0 + $0x80] sm:$0xff]
    %v153 = vld [vmem:[%s0 + $0x88] sm:$0xff]
    %v154 = vld [vmem:[%s0 + $0x90] sm:$0xff]
    %v155 = vld [vmem:[%s0 + $0x98] sm:$0xff]
    %v156 = vld [vmem:[%s0 + $0xa0] sm:$0xff]
    %v157 = vld [vmem:[%s0 + $0xa8] sm:$0xff]
    %v158 = vld [vmem:[%s0 + $0xb0] sm:$0xff]
    %v159 = vld [vmem:[%s0 + $0xb8] sm:$0xff]
    %v160 = vld [vmem:[%s0 + $0xc0] sm:$0xff]
    %v161 = vld [vmem:[%s0 + $0xc8] sm:$0xff]
    %v162 = vld [vmem:[%s0 + $0xd0] sm:$0xff]
    %v163 = vld [vmem:[%s0 + $0xd8] sm:$0xff]
    %v164 = vld [vmem:[%s0 + $0xe0] sm:$0xff]
    %v165 = vld [vmem:[%s0 + $0xe8] sm:$0xff]
    %v166 = vld [vmem:[%s0 + $0xf0] sm:$0xff]
    %v167 = vld [vmem:[%s0 + $0xf8] sm:$0xff]
    %v168 = vpack.c.bf16 %v152, %v136
    %v169 = vpack.c.bf16 %v153, %v137
    %v170 = vpack.c.bf16 %v154, %v138
    %v171 = vpack.c.bf16 %v155, %v139
    %v172 = vpack.c.bf16 %v156, %v140
    %v173 = vpack.c.bf16 %v157, %v141
    %v174 = vpack.c.bf16 %v158, %v142
    %v175 = vpack.c.bf16 %v159, %v143
    %v176 = vpack.c.bf16 %v160, %v144
    %v177 = vpack.c.bf16 %v161, %v145
    %v178 = vpack.c.bf16 %v162, %v146
    %v179 = vpack.c.bf16 %v163, %v147
    %v180 = vpack.c.bf16 %v164, %v148
    %v181 = vpack.c.bf16 %v165, %v149
    %v182 = vpack.c.bf16 %v166, %v150
    %v183 = vpack.c.bf16 %v167, %v151
    %v184 = vld [vmem:[#allocation2] sm:$0xff]
    %v185 = vld [vmem:[#allocation2 + $0x8] sm:$0xff]
    %v186 = vld [vmem:[#allocation2 + $0x10] sm:$0xff]
    %v187 = vld [vmem:[#allocation2 + $0x18] sm:$0xff]
    %v188 = vld [vmem:[#allocation2 + $0x20] sm:$0xff]
    %v189 = vld [vmem:[#allocation2 + $0x28] sm:$0xff]
    %v190 = vld [vmem:[#allocation2 + $0x30] sm:$0xff]
    %v191 = vld [vmem:[#allocation2 + $0x38] sm:$0xff]
    %v192 = vld [vmem:[#allocation2 + $0x40] sm:$0xff]
    %v193 = vld [vmem:[#allocation2 + $0x48] sm:$0xff]
    %v194 = vld [vmem:[#allocation2 + $0x50] sm:$0xff]
    %v195 = vld [vmem:[#allocation2 + $0x58] sm:$0xff]
    %v196 = vld [vmem:[#allocation2 + $0x60] sm:$0xff]
    %v197 = vld [vmem:[#allocation2 + $0x68] sm:$0xff]
    %v198 = vld [vmem:[#allocation2 + $0x70] sm:$0xff]
    %v199 = vld [vmem:[#allocation2 + $0x78] sm:$0xff]
    %v200 = vld [vmem:[#allocation2 + $0x80] sm:$0xff]
    %v201 = vld [vmem:[#allocation2 + $0x88] sm:$0xff]
    %v202 = vld [vmem:[#allocation2 + $0x90] sm:$0xff]
    %v203 = vld [vmem:[#allocation2 + $0x98] sm:$0xff]
    %v204 = vld [vmem:[#allocation2 + $0xa0] sm:$0xff]
    %v205 = vld [vmem:[#allocation2 + $0xa8] sm:$0xff]
    %v206 = vld [vmem:[#allocation2 + $0xb0] sm:$0xff]
    %v207 = vld [vmem:[#allocation2 + $0xb8] sm:$0xff]
    %v208 = vld [vmem:[#allocation2 + $0xc0] sm:$0xff]
    %v209 = vld [vmem:[#allocation2 + $0xc8] sm:$0xff]
    %v210 = vld [vmem:[#allocation2 + $0xd0] sm:$0xff]
    %v211 = vld [vmem:[#allocation2 + $0xd8] sm:$0xff]
    %v212 = vld [vmem:[#allocation2 + $0xe0] sm:$0xff]
    %v213 = vld [vmem:[#allocation2 + $0xe8] sm:$0xff]
    %v214 = vld [vmem:[#allocation2 + $0xf0] sm:$0xff]
    %v215 = vld [vmem:[#allocation2 + $0xf8] sm:$0xff]
    %v216 = vld [vmem:[#allocation2 + $0x100] sm:$0xff]
    %v217 = vld [vmem:[#allocation2 + $0x108] sm:$0xff]
    %v218 = vld [vmem:[#allocation2 + $0x110] sm:$0xff]
    %v219 = vld [vmem:[#allocation2 + $0x118] sm:$0xff]
    %v220 = vld [vmem:[#allocation2 + $0x120] sm:$0xff]
    %v221 = vld [vmem:[#allocation2 + $0x128] sm:$0xff]
    %v222 = vld [vmem:[#allocation2 + $0x130] sm:$0xff]
    %v223 = vld [vmem:[#allocation2 + $0x138] sm:$0xff]
    %v224 = vld [vmem:[#allocation2 + $0x140] sm:$0xff]
    %v225 = vld [vmem:[#allocation2 + $0x148] sm:$0xff]
    %v226 = vld [vmem:[#allocation2 + $0x150] sm:$0xff]
    %v227 = vld [vmem:[#allocation2 + $0x158] sm:$0xff]
    %v228 = vld [vmem:[#allocation2 + $0x160] sm:$0xff]
    %v229 = vld [vmem:[#allocation2 + $0x168] sm:$0xff]
    %v230 = vld [vmem:[#allocation2 + $0x170] sm:$0xff]
    %v231 = vld [vmem:[#allocation2 + $0x178] sm:$0xff]
    %v232 = vld [vmem:[#allocation2 + $0x180] sm:$0xff]
    %v233 = vld [vmem:[#allocation2 + $0x188] sm:$0xff]
    %v234 = vld [vmem:[#allocation2 + $0x190] sm:$0xff]
    %v235 = vld [vmem:[#allocation2 + $0x198] sm:$0xff]
    %v236 = vld [vmem:[#allocation2 + $0x1a0] sm:$0xff]
    %v237 = vld [vmem:[#allocation2 + $0x1a8] sm:$0xff]
    %v238 = vld [vmem:[#allocation2 + $0x1b0] sm:$0xff]
    %v239 = vld [vmem:[#allocation2 + $0x1b8] sm:$0xff]
    %v240 = vld [vmem:[#allocation2 + $0x1c0] sm:$0xff]
    %v241 = vld [vmem:[#allocation2 + $0x1c8] sm:$0xff]
    %v242 = vld [vmem:[#allocation2 + $0x1d0] sm:$0xff]
    %v243 = vld [vmem:[#allocation2 + $0x1d8] sm:$0xff]
    %v244 = vld [vmem:[#allocation2 + $0x1e0] sm:$0xff]
    %v245 = vld [vmem:[#allocation2 + $0x1e8] sm:$0xff]
    %v246 = vld [vmem:[#allocation2 + $0x1f0] sm:$0xff]
    %v247 = vld [vmem:[#allocation2 + $0x1f8] sm:$0xff]
    %v248 = vld [vmem:[#allocation2 + $0x200] sm:$0xff]
    %v249 = vld [vmem:[#allocation2 + $0x208] sm:$0xff]
    %v250 = vld [vmem:[#allocation2 + $0x210] sm:$0xff]
    %v251 = vld [vmem:[#allocation2 + $0x218] sm:$0xff]
    %v252 = vld [vmem:[#allocation2 + $0x220] sm:$0xff]
    %v253 = vld [vmem:[#allocation2 + $0x228] sm:$0xff]
    %v254 = vld [vmem:[#allocation2 + $0x230] sm:$0xff]
    %v255 = vld [vmem:[#allocation2 + $0x238] sm:$0xff]
    %v256 = vld [vmem:[#allocation2 + $0x240] sm:$0xff]
    %v257 = vld [vmem:[#allocation2 + $0x248] sm:$0xff]
    %v258 = vld [vmem:[#allocation2 + $0x250] sm:$0xff]
    %v259 = vld [vmem:[#allocation2 + $0x258] sm:$0xff]
    %v260 = vld [vmem:[#allocation2 + $0x260] sm:$0xff]
    %v261 = vld [vmem:[#allocation2 + $0x268] sm:$0xff]
    %v262 = vld [vmem:[#allocation2 + $0x270] sm:$0xff]
    %v263 = vld [vmem:[#allocation2 + $0x278] sm:$0xff]
    %v264 = vld [vmem:[#allocation2 + $0x280] sm:$0xff]
    %v265 = vld [vmem:[#allocation2 + $0x288] sm:$0xff]
    %v266 = vld [vmem:[#allocation2 + $0x290] sm:$0xff]
    %v267 = vld [vmem:[#allocation2 + $0x298] sm:$0xff]
    %v268 = vld [vmem:[#allocation2 + $0x2a0] sm:$0xff]
    %v269 = vld [vmem:[#allocation2 + $0x2a8] sm:$0xff]
    %v270 = vld [vmem:[#allocation2 + $0x2b0] sm:$0xff]
    %v271 = vld [vmem:[#allocation2 + $0x2b8] sm:$0xff]
    %v272 = vld [vmem:[#allocation2 + $0x2c0] sm:$0xff]
    %v273 = vld [vmem:[#allocation2 + $0x2c8] sm:$0xff]
    %v274 = vld [vmem:[#allocation2 + $0x2d0] sm:$0xff]
    %v275 = vld [vmem:[#allocation2 + $0x2d8] sm:$0xff]
    %v276 = vld [vmem:[#allocation2 + $0x2e0] sm:$0xff]
    %v277 = vld [vmem:[#allocation2 + $0x2e8] sm:$0xff]
    %v278 = vld [vmem:[#allocation2 + $0x2f0] sm:$0xff]
    %v279 = vld [vmem:[#allocation2 + $0x2f8] sm:$0xff]
    %v280 = vld [vmem:[#allocation2 + $0x300] sm:$0xff]
    %v281 = vld [vmem:[#allocation2 + $0x308] sm:$0xff]
    %v282 = vld [vmem:[#allocation2 + $0x310] sm:$0xff]
    %v283 = vld [vmem:[#allocation2 + $0x318] sm:$0xff]
    %v284 = vld [vmem:[#allocation2 + $0x320] sm:$0xff]
    %v285 = vld [vmem:[#allocation2 + $0x328] sm:$0xff]
    %v286 = vld [vmem:[#allocation2 + $0x330] sm:$0xff]
    %v287 = vld [vmem:[#allocation2 + $0x338] sm:$0xff]
    %v288 = vld [vmem:[#allocation2 + $0x340] sm:$0xff]
    %v289 = vld [vmem:[#allocation2 + $0x348] sm:$0xff]
    %v290 = vld [vmem:[#allocation2 + $0x350] sm:$0xff]
    %v291 = vld [vmem:[#allocation2 + $0x358] sm:$0xff]
    %v292 = vld [vmem:[#allocation2 + $0x360] sm:$0xff]
    %v293 = vld [vmem:[#allocation2 + $0x368] sm:$0xff]
    %v294 = vld [vmem:[#allocation2 + $0x370] sm:$0xff]
    %v295 = vld [vmem:[#allocation2 + $0x378] sm:$0xff]
    %v296 = vld [vmem:[#allocation2 + $0x380] sm:$0xff]
    %v297 = vld [vmem:[#allocation2 + $0x388] sm:$0xff]
    %v298 = vld [vmem:[#allocation2 + $0x390] sm:$0xff]
    %v299 = vld [vmem:[#allocation2 + $0x398] sm:$0xff]
    %v300 = vld [vmem:[#allocation2 + $0x3a0] sm:$0xff]
    %v301 = vld [vmem:[#allocation2 + $0x3a8] sm:$0xff]
    %v302 = vld [vmem:[#allocation2 + $0x3b0] sm:$0xff]
    %v303 = vld [vmem:[#allocation2 + $0x3b8] sm:$0xff]
    %v304 = vld [vmem:[#allocation2 + $0x3c0] sm:$0xff]
    %v305 = vld [vmem:[#allocation2 + $0x3c8] sm:$0xff]
    %v306 = vld [vmem:[#allocation2 + $0x3d0] sm:$0xff]
    %v307 = vld [vmem:[#allocation2 + $0x3d8] sm:$0xff]
    %v308 = vld [vmem:[#allocation2 + $0x3e0] sm:$0xff]
    %v309 = vld [vmem:[#allocation2 + $0x3e8] sm:$0xff]
    %v310 = vld [vmem:[#allocation2 + $0x3f0] sm:$0xff]
    %v311 = vld [vmem:[#allocation2 + $0x3f8] sm:$0xff]
    %v312 = vld [vmem:[#allocation2 + $0x400] sm:$0xff]
    %v313 = vld [vmem:[#allocation2 + $0x408] sm:$0xff]
    %v314 = vld [vmem:[#allocation2 + $0x410] sm:$0xff]
    %v315 = vld [vmem:[#allocation2 + $0x418] sm:$0xff]
    %v316 = vld [vmem:[#allocation2 + $0x420] sm:$0xff]
    %v317 = vld [vmem:[#allocation2 + $0x428] sm:$0xff]
    %v318 = vld [vmem:[#allocation2 + $0x430] sm:$0xff]
    %v319 = vld [vmem:[#allocation2 + $0x438] sm:$0xff]
    %v320 = vld [vmem:[#allocation2 + $0x440] sm:$0xff]
    %v321 = vld [vmem:[#allocation2 + $0x448] sm:$0xff]
    %v322 = vld [vmem:[#allocation2 + $0x450] sm:$0xff]
    %v323 = vld [vmem:[#allocation2 + $0x458] sm:$0xff]
    %v324 = vld [vmem:[#allocation2 + $0x460] sm:$0xff]
    %v325 = vld [vmem:[#allocation2 + $0x468] sm:$0xff]
    %v326 = vld [vmem:[#allocation2 + $0x470] sm:$0xff]
    %v327 = vld [vmem:[#allocation2 + $0x478] sm:$0xff]
    %v328 = vld [vmem:[#allocation2 + $0x480] sm:$0xff]
    %v329 = vld [vmem:[#allocation2 + $0x488] sm:$0xff]
    %v330 = vld [vmem:[#allocation2 + $0x490] sm:$0xff]
    %v331 = vld [vmem:[#allocation2 + $0x498] sm:$0xff]
    %v332 = vld [vmem:[#allocation2 + $0x4a0] sm:$0xff]
    %v333 = vld [vmem:[#allocation2 + $0x4a8] sm:$0xff]
    %v334 = vld [vmem:[#allocation2 + $0x4b0] sm:$0xff]
    %v335 = vld [vmem:[#allocation2 + $0x4b8] sm:$0xff]
    %v336 = vld [vmem:[#allocation2 + $0x4c0] sm:$0xff]
    %v337 = vld [vmem:[#allocation2 + $0x4c8] sm:$0xff]
    %v338 = vld [vmem:[#allocation2 + $0x4d0] sm:$0xff]
    %v339 = vld [vmem:[#allocation2 + $0x4d8] sm:$0xff]
    %v340 = vld [vmem:[#allocation2 + $0x4e0] sm:$0xff]
    %v341 = vld [vmem:[#allocation2 + $0x4e8] sm:$0xff]
    %v342 = vld [vmem:[#allocation2 + $0x4f0] sm:$0xff]
    %v343 = vld [vmem:[#allocation2 + $0x4f8] sm:$0xff]
    %v344 = vld [vmem:[#allocation2 + $0x500] sm:$0xff]
    %v345 = vld [vmem:[#allocation2 + $0x508] sm:$0xff]
    %v346 = vld [vmem:[#allocation2 + $0x510] sm:$0xff]
    %v347 = vld [vmem:[#allocation2 + $0x518] sm:$0xff]
    %v348 = vld [vmem:[#allocation2 + $0x520] sm:$0xff]
    %v349 = vld [vmem:[#allocation2 + $0x528] sm:$0xff]
    %v350 = vld [vmem:[#allocation2 + $0x530] sm:$0xff]
    %v351 = vld [vmem:[#allocation2 + $0x538] sm:$0xff]
    %v352 = vld [vmem:[#allocation2 + $0x540] sm:$0xff]
    %v353 = vld [vmem:[#allocation2 + $0x548] sm:$0xff]
    %v354 = vld [vmem:[#allocation2 + $0x550] sm:$0xff]
    %v355 = vld [vmem:[#allocation2 + $0x558] sm:$0xff]
    %v356 = vld [vmem:[#allocation2 + $0x560] sm:$0xff]
    %v357 = vld [vmem:[#allocation2 + $0x568] sm:$0xff]
    %v358 = vld [vmem:[#allocation2 + $0x570] sm:$0xff]
    %v359 = vld [vmem:[#allocation2 + $0x578] sm:$0xff]
    %v360 = vld [vmem:[#allocation2 + $0x580] sm:$0xff]
    %v361 = vld [vmem:[#allocation2 + $0x588] sm:$0xff]
    %v362 = vld [vmem:[#allocation2 + $0x590] sm:$0xff]
    %v363 = vld [vmem:[#allocation2 + $0x598] sm:$0xff]
    %v364 = vld [vmem:[#allocation2 + $0x5a0] sm:$0xff]
    %v365 = vld [vmem:[#allocation2 + $0x5a8] sm:$0xff]
    %v366 = vld [vmem:[#allocation2 + $0x5b0] sm:$0xff]
    %v367 = vld [vmem:[#allocation2 + $0x5b8] sm:$0xff]
    %v368 = vld [vmem:[#allocation2 + $0x5c0] sm:$0xff]
    %v369 = vld [vmem:[#allocation2 + $0x5c8] sm:$0xff]
    %v370 = vld [vmem:[#allocation2 + $0x5d0] sm:$0xff]
    %v371 = vld [vmem:[#allocation2 + $0x5d8] sm:$0xff]
    %v372 = vld [vmem:[#allocation2 + $0x5e0] sm:$0xff]
    %v373 = vld [vmem:[#allocation2 + $0x5e8] sm:$0xff]
    %v374 = vld [vmem:[#allocation2 + $0x5f0] sm:$0xff]
    %v375 = vld [vmem:[#allocation2 + $0x5f8] sm:$0xff]
    %v376 = vld [vmem:[#allocation2 + $0x600] sm:$0xff]
    %v377 = vld [vmem:[#allocation2 + $0x608] sm:$0xff]
    %v378 = vld [vmem:[#allocation2 + $0x610] sm:$0xff]
    %v379 = vld [vmem:[#allocation2 + $0x618] sm:$0xff]
    %v380 = vld [vmem:[#allocation2 + $0x620] sm:$0xff]
    %v381 = vld [vmem:[#allocation2 + $0x628] sm:$0xff]
    %v382 = vld [vmem:[#allocation2 + $0x630] sm:$0xff]
    %v383 = vld [vmem:[#allocation2 + $0x638] sm:$0xff]
    %v384 = vld [vmem:[#allocation2 + $0x640] sm:$0xff]
    %v385 = vld [vmem:[#allocation2 + $0x648] sm:$0xff]
    %v386 = vld [vmem:[#allocation2 + $0x650] sm:$0xff]
    %v387 = vld [vmem:[#allocation2 + $0x658] sm:$0xff]
    %v388 = vld [vmem:[#allocation2 + $0x660] sm:$0xff]
    %v389 = vld [vmem:[#allocation2 + $0x668] sm:$0xff]
    %v390 = vld [vmem:[#allocation2 + $0x670] sm:$0xff]
    %v391 = vld [vmem:[#allocation2 + $0x678] sm:$0xff]
    %v392 = vld [vmem:[#allocation2 + $0x680] sm:$0xff]
    %v393 = vld [vmem:[#allocation2 + $0x688] sm:$0xff]
    %v394 = vld [vmem:[#allocation2 + $0x690] sm:$0xff]
    %v395 = vld [vmem:[#allocation2 + $0x698] sm:$0xff]
    %v396 = vld [vmem:[#allocation2 + $0x6a0] sm:$0xff]
    %v397 = vld [vmem:[#allocation2 + $0x6a8] sm:$0xff]
    %v398 = vld [vmem:[#allocation2 + $0x6b0] sm:$0xff]
    %v399 = vld [vmem:[#allocation2 + $0x6b8] sm:$0xff]
    %v400 = vld [vmem:[#allocation2 + $0x6c0] sm:$0xff]
    %v401 = vld [vmem:[#allocation2 + $0x6c8] sm:$0xff]
    %v402 = vld [vmem:[#allocation2 + $0x6d0] sm:$0xff]
    %v403 = vld [vmem:[#allocation2 + $0x6d8] sm:$0xff]
    %v404 = vld [vmem:[#allocation2 + $0x6e0] sm:$0xff]
    %v405 = vld [vmem:[#allocation2 + $0x6e8] sm:$0xff]
    %v406 = vld [vmem:[#allocation2 + $0x6f0] sm:$0xff]
    %v407 = vld [vmem:[#allocation2 + $0x6f8] sm:$0xff]
    %v408 = vld [vmem:[#allocation2 + $0x700] sm:$0xff]
    %v409 = vld [vmem:[#allocation2 + $0x708] sm:$0xff]
    %v410 = vld [vmem:[#allocation2 + $0x710] sm:$0xff]
    %v411 = vld [vmem:[#allocation2 + $0x718] sm:$0xff]
    %v412 = vld [vmem:[#allocation2 + $0x720] sm:$0xff]
    %v413 = vld [vmem:[#allocation2 + $0x728] sm:$0xff]
    %v414 = vld [vmem:[#allocation2 + $0x730] sm:$0xff]
    %v415 = vld [vmem:[#allocation2 + $0x738] sm:$0xff]
    %v416 = vld [vmem:[#allocation2 + $0x740] sm:$0xff]
    %v417 = vld [vmem:[#allocation2 + $0x748] sm:$0xff]
    %v418 = vld [vmem:[#allocation2 + $0x750] sm:$0xff]
    %v419 = vld [vmem:[#allocation2 + $0x758] sm:$0xff]
    %v420 = vld [vmem:[#allocation2 + $0x760] sm:$0xff]
    %v421 = vld [vmem:[#allocation2 + $0x768] sm:$0xff]
    %v422 = vld [vmem:[#allocation2 + $0x770] sm:$0xff]
    %v423 = vld [vmem:[#allocation2 + $0x778] sm:$0xff]
    %v424 = vld [vmem:[#allocation2 + $0x780] sm:$0xff]
    %v425 = vld [vmem:[#allocation2 + $0x788] sm:$0xff]
    %v426 = vld [vmem:[#allocation2 + $0x790] sm:$0xff]
    %v427 = vld [vmem:[#allocation2 + $0x798] sm:$0xff]
    %v428 = vld [vmem:[#allocation2 + $0x7a0] sm:$0xff]
    %v429 = vld [vmem:[#allocation2 + $0x7a8] sm:$0xff]
    %v430 = vld [vmem:[#allocation2 + $0x7b0] sm:$0xff]
    %v431 = vld [vmem:[#allocation2 + $0x7b8] sm:$0xff]
    %v432 = vld [vmem:[#allocation2 + $0x7c0] sm:$0xff]
    %v433 = vld [vmem:[#allocation2 + $0x7c8] sm:$0xff]
    %v434 = vld [vmem:[#allocation2 + $0x7d0] sm:$0xff]
    %v435 = vld [vmem:[#allocation2 + $0x7d8] sm:$0xff]
    %v436 = vld [vmem:[#allocation2 + $0x7e0] sm:$0xff]
    %v437 = vld [vmem:[#allocation2 + $0x7e8] sm:$0xff]
    %v438 = vld [vmem:[#allocation2 + $0x7f0] sm:$0xff]
    %v439 = vld [vmem:[#allocation2 + $0x7f8] sm:$0xff]
    %v440 = vld [vmem:[#allocation2 + $0x800] sm:$0xff]
    %v441 = vld [vmem:[#allocation2 + $0x808] sm:$0xff]
    %v442 = vld [vmem:[#allocation2 + $0x810] sm:$0xff]
    %v443 = vld [vmem:[#allocation2 + $0x818] sm:$0xff]
    %v444 = vld [vmem:[#allocation2 + $0x820] sm:$0xff]
    %v445 = vld [vmem:[#allocation2 + $0x828] sm:$0xff]
    %v446 = vld [vmem:[#allocation2 + $0x830] sm:$0xff]
    %v447 = vld [vmem:[#allocation2 + $0x838] sm:$0xff]
    %v448 = vld [vmem:[#allocation2 + $0x840] sm:$0xff]
    %v449 = vld [vmem:[#allocation2 + $0x848] sm:$0xff]
    %v450 = vld [vmem:[#allocation2 + $0x850] sm:$0xff]
    %v451 = vld [vmem:[#allocation2 + $0x858] sm:$0xff]
    %v452 = vld [vmem:[#allocation2 + $0x860] sm:$0xff]
    %v453 = vld [vmem:[#allocation2 + $0x868] sm:$0xff]
    %v454 = vld [vmem:[#allocation2 + $0x870] sm:$0xff]
    %v455 = vld [vmem:[#allocation2 + $0x878] sm:$0xff]
    %v456 = vld [vmem:[#allocation2 + $0x880] sm:$0xff]
    %v457 = vld [vmem:[#allocation2 + $0x888] sm:$0xff]
    %v458 = vld [vmem:[#allocation2 + $0x890] sm:$0xff]
    %v459 = vld [vmem:[#allocation2 + $0x898] sm:$0xff]
    %v460 = vld [vmem:[#allocation2 + $0x8a0] sm:$0xff]
    %v461 = vld [vmem:[#allocation2 + $0x8a8] sm:$0xff]
    %v462 = vld [vmem:[#allocation2 + $0x8b0] sm:$0xff]
    %v463 = vld [vmem:[#allocation2 + $0x8b8] sm:$0xff]
    %v464 = vld [vmem:[#allocation2 + $0x8c0] sm:$0xff]
    %v465 = vld [vmem:[#allocation2 + $0x8c8] sm:$0xff]
    %v466 = vld [vmem:[#allocation2 + $0x8d0] sm:$0xff]
    %v467 = vld [vmem:[#allocation2 + $0x8d8] sm:$0xff]
    %v468 = vld [vmem:[#allocation2 + $0x8e0] sm:$0xff]
    %v469 = vld [vmem:[#allocation2 + $0x8e8] sm:$0xff]
    %v470 = vld [vmem:[#allocation2 + $0x8f0] sm:$0xff]
    %v471 = vld [vmem:[#allocation2 + $0x8f8] sm:$0xff]
    %v472 = vld [vmem:[#allocation2 + $0x900] sm:$0xff]
    %v473 = vld [vmem:[#allocation2 + $0x908] sm:$0xff]
    %v474 = vld [vmem:[#allocation2 + $0x910] sm:$0xff]
    %v475 = vld [vmem:[#allocation2 + $0x918] sm:$0xff]
    %v476 = vld [vmem:[#allocation2 + $0x920] sm:$0xff]
    %v477 = vld [vmem:[#allocation2 + $0x928] sm:$0xff]
    %v478 = vld [vmem:[#allocation2 + $0x930] sm:$0xff]
    %v479 = vld [vmem:[#allocation2 + $0x938] sm:$0xff]
    %v480 = vld [vmem:[#allocation2 + $0x940] sm:$0xff]
    %v481 = vld [vmem:[#allocation2 + $0x948] sm:$0xff]
    %v482 = vld [vmem:[#allocation2 + $0x950] sm:$0xff]
    %v483 = vld [vmem:[#allocation2 + $0x958] sm:$0xff]
    %v484 = vld [vmem:[#allocation2 + $0x960] sm:$0xff]
    %v485 = vld [vmem:[#allocation2 + $0x968] sm:$0xff]
    %v486 = vld [vmem:[#allocation2 + $0x970] sm:$0xff]
    %v487 = vld [vmem:[#allocation2 + $0x978] sm:$0xff]
    %v488 = vld [vmem:[#allocation2 + $0x980] sm:$0xff]
    %v489 = vld [vmem:[#allocation2 + $0x988] sm:$0xff]
    %v490 = vld [vmem:[#allocation2 + $0x990] sm:$0xff]
    %v491 = vld [vmem:[#allocation2 + $0x998] sm:$0xff]
    %v492 = vld [vmem:[#allocation2 + $0x9a0] sm:$0xff]
    %v493 = vld [vmem:[#allocation2 + $0x9a8] sm:$0xff]
    %v494 = vld [vmem:[#allocation2 + $0x9b0] sm:$0xff]
    %v495 = vld [vmem:[#allocation2 + $0x9b8] sm:$0xff]
    %v496 = vld [vmem:[#allocation2 + $0x9c0] sm:$0xff]
    %v497 = vld [vmem:[#allocation2 + $0x9c8] sm:$0xff]
    %v498 = vld [vmem:[#allocation2 + $0x9d0] sm:$0xff]
    %v499 = vld [vmem:[#allocation2 + $0x9d8] sm:$0xff]
    %v500 = vld [vmem:[#allocation2 + $0x9e0] sm:$0xff]
    %v501 = vld [vmem:[#allocation2 + $0x9e8] sm:$0xff]
    %v502 = vld [vmem:[#allocation2 + $0x9f0] sm:$0xff]
    %v503 = vld [vmem:[#allocation2 + $0x9f8] sm:$0xff]
    %v504 = vld [vmem:[#allocation2 + $0xa00] sm:$0xff]
    %v505 = vld [vmem:[#allocation2 + $0xa08] sm:$0xff]
    %v506 = vld [vmem:[#allocation2 + $0xa10] sm:$0xff]
    %v507 = vld [vmem:[#allocation2 + $0xa18] sm:$0xff]
    %v508 = vld [vmem:[#allocation2 + $0xa20] sm:$0xff]
    %v509 = vld [vmem:[#allocation2 + $0xa28] sm:$0xff]
    %v510 = vld [vmem:[#allocation2 + $0xa30] sm:$0xff]
    %v511 = vld [vmem:[#allocation2 + $0xa38] sm:$0xff]
    %v512 = vld [vmem:[#allocation2 + $0xa40] sm:$0xff]
    %v513 = vld [vmem:[#allocation2 + $0xa48] sm:$0xff]
    %v514 = vld [vmem:[#allocation2 + $0xa50] sm:$0xff]
    %v515 = vld [vmem:[#allocation2 + $0xa58] sm:$0xff]
    %v516 = vld [vmem:[#allocation2 + $0xa60] sm:$0xff]
    %v517 = vld [vmem:[#allocation2 + $0xa68] sm:$0xff]
    %v518 = vld [vmem:[#allocation2 + $0xa70] sm:$0xff]
    %v519 = vld [vmem:[#allocation2 + $0xa78] sm:$0xff]
    %v520 = vld [vmem:[#allocation2 + $0xa80] sm:$0xff]
    %v521 = vld [vmem:[#allocation2 + $0xa88] sm:$0xff]
    %v522 = vld [vmem:[#allocation2 + $0xa90] sm:$0xff]
    %v523 = vld [vmem:[#allocation2 + $0xa98] sm:$0xff]
    %v524 = vld [vmem:[#allocation2 + $0xaa0] sm:$0xff]
    %v525 = vld [vmem:[#allocation2 + $0xaa8] sm:$0xff]
    %v526 = vld [vmem:[#allocation2 + $0xab0] sm:$0xff]
    %v527 = vld [vmem:[#allocation2 + $0xab8] sm:$0xff]
    %v528 = vld [vmem:[#allocation2 + $0xac0] sm:$0xff]
    %v529 = vld [vmem:[#allocation2 + $0xac8] sm:$0xff]
    %v530 = vld [vmem:[#allocation2 + $0xad0] sm:$0xff]
    %v531 = vld [vmem:[#allocation2 + $0xad8] sm:$0xff]
    %v532 = vld [vmem:[#allocation2 + $0xae0] sm:$0xff]
    %v533 = vld [vmem:[#allocation2 + $0xae8] sm:$0xff]
    %v534 = vld [vmem:[#allocation2 + $0xaf0] sm:$0xff]
    %v535 = vld [vmem:[#allocation2 + $0xaf8] sm:$0xff]
    %v536 = vld [vmem:[#allocation2 + $0xb00] sm:$0xff]
    %v537 = vld [vmem:[#allocation2 + $0xb08] sm:$0xff]
    %v538 = vld [vmem:[#allocation2 + $0xb10] sm:$0xff]
    %v539 = vld [vmem:[#allocation2 + $0xb18] sm:$0xff]
    %v540 = vld [vmem:[#allocation2 + $0xb20] sm:$0xff]
    %v541 = vld [vmem:[#allocation2 + $0xb28] sm:$0xff]
    %v542 = vld [vmem:[#allocation2 + $0xb30] sm:$0xff]
    %v543 = vld [vmem:[#allocation2 + $0xb38] sm:$0xff]
    %v544 = vld [vmem:[#allocation2 + $0xb40] sm:$0xff]
    %v545 = vld [vmem:[#allocation2 + $0xb48] sm:$0xff]
    %v546 = vld [vmem:[#allocation2 + $0xb50] sm:$0xff]
    %v547 = vld [vmem:[#allocation2 + $0xb58] sm:$0xff]
    %v548 = vld [vmem:[#allocation2 + $0xb60] sm:$0xff]
    %v549 = vld [vmem:[#allocation2 + $0xb68] sm:$0xff]
    %v550 = vld [vmem:[#allocation2 + $0xb70] sm:$0xff]
    %v551 = vld [vmem:[#allocation2 + $0xb78] sm:$0xff]
    %v552 = vld [vmem:[#allocation2 + $0xb80] sm:$0xff]
    %v553 = vld [vmem:[#allocation2 + $0xb88] sm:$0xff]
    %v554 = vld [vmem:[#allocation2 + $0xb90] sm:$0xff]
    %v555 = vld [vmem:[#allocation2 + $0xb98] sm:$0xff]
    %v556 = vld [vmem:[#allocation2 + $0xba0] sm:$0xff]
    %v557 = vld [vmem:[#allocation2 + $0xba8] sm:$0xff]
    %v558 = vld [vmem:[#allocation2 + $0xbb0] sm:$0xff]
    %v559 = vld [vmem:[#allocation2 + $0xbb8] sm:$0xff]
    %v560 = vld [vmem:[#allocation2 + $0xbc0] sm:$0xff]
    %v561 = vld [vmem:[#allocation2 + $0xbc8] sm:$0xff]
    %v562 = vld [vmem:[#allocation2 + $0xbd0] sm:$0xff]
    %v563 = vld [vmem:[#allocation2 + $0xbd8] sm:$0xff]
    %v564 = vld [vmem:[#allocation2 + $0xbe0] sm:$0xff]
    %v565 = vld [vmem:[#allocation2 + $0xbe8] sm:$0xff]
    %v566 = vld [vmem:[#allocation2 + $0xbf0] sm:$0xff]
    %v567 = vld [vmem:[#allocation2 + $0xbf8] sm:$0xff]
    %v568 = vld [vmem:[#allocation2 + $0xc00] sm:$0xff]
    %v569 = vld [vmem:[#allocation2 + $0xc08] sm:$0xff]
    %v570 = vld [vmem:[#allocation2 + $0xc10] sm:$0xff]
    %v571 = vld [vmem:[#allocation2 + $0xc18] sm:$0xff]
    %v572 = vld [vmem:[#allocation2 + $0xc20] sm:$0xff]
    %v573 = vld [vmem:[#allocation2 + $0xc28] sm:$0xff]
    %v574 = vld [vmem:[#allocation2 + $0xc30] sm:$0xff]
    %v575 = vld [vmem:[#allocation2 + $0xc38] sm:$0xff]
    %v576 = vld [vmem:[#allocation2 + $0xc40] sm:$0xff]
    %v577 = vld [vmem:[#allocation2 + $0xc48] sm:$0xff]
    %v578 = vld [vmem:[#allocation2 + $0xc50] sm:$0xff]
    %v579 = vld [vmem:[#allocation2 + $0xc58] sm:$0xff]
    %v580 = vld [vmem:[#allocation2 + $0xc60] sm:$0xff]
    %v581 = vld [vmem:[#allocation2 + $0xc68] sm:$0xff]
    %v582 = vld [vmem:[#allocation2 + $0xc70] sm:$0xff]
    %v583 = vld [vmem:[#allocation2 + $0xc78] sm:$0xff]
    %v584 = vld [vmem:[#allocation2 + $0xc80] sm:$0xff]
    %v585 = vld [vmem:[#allocation2 + $0xc88] sm:$0xff]
    %v586 = vld [vmem:[#allocation2 + $0xc90] sm:$0xff]
    %v587 = vld [vmem:[#allocation2 + $0xc98] sm:$0xff]
    %v588 = vld [vmem:[#allocation2 + $0xca0] sm:$0xff]
    %v589 = vld [vmem:[#allocation2 + $0xca8] sm:$0xff]
    %v590 = vld [vmem:[#allocation2 + $0xcb0] sm:$0xff]
    %v591 = vld [vmem:[#allocation2 + $0xcb8] sm:$0xff]
    %v592 = vld [vmem:[#allocation2 + $0xcc0] sm:$0xff]
    %v593 = vld [vmem:[#allocation2 + $0xcc8] sm:$0xff]
    %v594 = vld [vmem:[#allocation2 + $0xcd0] sm:$0xff]
    %v595 = vld [vmem:[#allocation2 + $0xcd8] sm:$0xff]
    %v596 = vld [vmem:[#allocation2 + $0xce0] sm:$0xff]
    %v597 = vld [vmem:[#allocation2 + $0xce8] sm:$0xff]
    %v598 = vld [vmem:[#allocation2 + $0xcf0] sm:$0xff]
    %v599 = vld [vmem:[#allocation2 + $0xcf8] sm:$0xff]
    %v600 = vld [vmem:[#allocation2 + $0xd00] sm:$0xff]
    %v601 = vld [vmem:[#allocation2 + $0xd08] sm:$0xff]
    %v602 = vld [vmem:[#allocation2 + $0xd10] sm:$0xff]
    %v603 = vld [vmem:[#allocation2 + $0xd18] sm:$0xff]
    %v604 = vld [vmem:[#allocation2 + $0xd20] sm:$0xff]
    %v605 = vld [vmem:[#allocation2 + $0xd28] sm:$0xff]
    %v606 = vld [vmem:[#allocation2 + $0xd30] sm:$0xff]
    %v607 = vld [vmem:[#allocation2 + $0xd38] sm:$0xff]
    %v608 = vld [vmem:[#allocation2 + $0xd40] sm:$0xff]
    %v609 = vld [vmem:[#allocation2 + $0xd48] sm:$0xff]
    %v610 = vld [vmem:[#allocation2 + $0xd50] sm:$0xff]
    %v611 = vld [vmem:[#allocation2 + $0xd58] sm:$0xff]
    %v612 = vld [vmem:[#allocation2 + $0xd60] sm:$0xff]
    %v613 = vld [vmem:[#allocation2 + $0xd68] sm:$0xff]
    %v614 = vld [vmem:[#allocation2 + $0xd70] sm:$0xff]
    %v615 = vld [vmem:[#allocation2 + $0xd78] sm:$0xff]
    %v616 = vld [vmem:[#allocation2 + $0xd80] sm:$0xff]
    %v617 = vld [vmem:[#allocation2 + $0xd88] sm:$0xff]
    %v618 = vld [vmem:[#allocation2 + $0xd90] sm:$0xff]
    %v619 = vld [vmem:[#allocation2 + $0xd98] sm:$0xff]
    %v620 = vld [vmem:[#allocation2 + $0xda0] sm:$0xff]
    %v621 = vld [vmem:[#allocation2 + $0xda8] sm:$0xff]
    %v622 = vld [vmem:[#allocation2 + $0xdb0] sm:$0xff]
    %v623 = vld [vmem:[#allocation2 + $0xdb8] sm:$0xff]
    %v624 = vld [vmem:[#allocation2 + $0xdc0] sm:$0xff]
    %v625 = vld [vmem:[#allocation2 + $0xdc8] sm:$0xff]
    %v626 = vld [vmem:[#allocation2 + $0xdd0] sm:$0xff]
    %v627 = vld [vmem:[#allocation2 + $0xdd8] sm:$0xff]
    %v628 = vld [vmem:[#allocation2 + $0xde0] sm:$0xff]
    %v629 = vld [vmem:[#allocation2 + $0xde8] sm:$0xff]
    %v630 = vld [vmem:[#allocation2 + $0xdf0] sm:$0xff]
    %v631 = vld [vmem:[#allocation2 + $0xdf8] sm:$0xff]
    %v632 = vld [vmem:[#allocation2 + $0xe00] sm:$0xff]
    %v633 = vld [vmem:[#allocation2 + $0xe08] sm:$0xff]
    %v634 = vld [vmem:[#allocation2 + $0xe10] sm:$0xff]
    %v635 = vld [vmem:[#allocation2 + $0xe18] sm:$0xff]
    %v636 = vld [vmem:[#allocation2 + $0xe20] sm:$0xff]
    %v637 = vld [vmem:[#allocation2 + $0xe28] sm:$0xff]
    %v638 = vld [vmem:[#allocation2 + $0xe30] sm:$0xff]
    %v639 = vld [vmem:[#allocation2 + $0xe38] sm:$0xff]
    %v640 = vld [vmem:[#allocation2 + $0xe40] sm:$0xff]
    %v641 = vld [vmem:[#allocation2 + $0xe48] sm:$0xff]
    %v642 = vld [vmem:[#allocation2 + $0xe50] sm:$0xff]
    %v643 = vld [vmem:[#allocation2 + $0xe58] sm:$0xff]
    %v644 = vld [vmem:[#allocation2 + $0xe60] sm:$0xff]
    %v645 = vld [vmem:[#allocation2 + $0xe68] sm:$0xff]
    %v646 = vld [vmem:[#allocation2 + $0xe70] sm:$0xff]
    %v647 = vld [vmem:[#allocation2 + $0xe78] sm:$0xff]
    %v648 = vld [vmem:[#allocation2 + $0xe80] sm:$0xff]
    %v649 = vld [vmem:[#allocation2 + $0xe88] sm:$0xff]
    %v650 = vld [vmem:[#allocation2 + $0xe90] sm:$0xff]
    %v651 = vld [vmem:[#allocation2 + $0xe98] sm:$0xff]
    %v652 = vld [vmem:[#allocation2 + $0xea0] sm:$0xff]
    %v653 = vld [vmem:[#allocation2 + $0xea8] sm:$0xff]
    %v654 = vld [vmem:[#allocation2 + $0xeb0] sm:$0xff]
    %v655 = vld [vmem:[#allocation2 + $0xeb8] sm:$0xff]
    %v656 = vld [vmem:[#allocation2 + $0xec0] sm:$0xff]
    %v657 = vld [vmem:[#allocation2 + $0xec8] sm:$0xff]
    %v658 = vld [vmem:[#allocation2 + $0xed0] sm:$0xff]
    %v659 = vld [vmem:[#allocation2 + $0xed8] sm:$0xff]
    %v660 = vld [vmem:[#allocation2 + $0xee0] sm:$0xff]
    %v661 = vld [vmem:[#allocation2 + $0xee8] sm:$0xff]
    %v662 = vld [vmem:[#allocation2 + $0xef0] sm:$0xff]
    %v663 = vld [vmem:[#allocation2 + $0xef8] sm:$0xff]
    %v664 = vld [vmem:[#allocation2 + $0xf00] sm:$0xff]
    %v665 = vld [vmem:[#allocation2 + $0xf08] sm:$0xff]
    %v666 = vld [vmem:[#allocation2 + $0xf10] sm:$0xff]
    %v667 = vld [vmem:[#allocation2 + $0xf18] sm:$0xff]
    %v668 = vld [vmem:[#allocation2 + $0xf20] sm:$0xff]
    %v669 = vld [vmem:[#allocation2 + $0xf28] sm:$0xff]
    %v670 = vld [vmem:[#allocation2 + $0xf30] sm:$0xff]
    %v671 = vld [vmem:[#allocation2 + $0xf38] sm:$0xff]
    %v672 = vld [vmem:[#allocation2 + $0xf40] sm:$0xff]
    %v673 = vld [vmem:[#allocation2 + $0xf48] sm:$0xff]
    %v674 = vld [vmem:[#allocation2 + $0xf50] sm:$0xff]
    %v675 = vld [vmem:[#allocation2 + $0xf58] sm:$0xff]
    %v676 = vld [vmem:[#allocation2 + $0xf60] sm:$0xff]
    %v677 = vld [vmem:[#allocation2 + $0xf68] sm:$0xff]
    %v678 = vld [vmem:[#allocation2 + $0xf70] sm:$0xff]
    %v679 = vld [vmem:[#allocation2 + $0xf78] sm:$0xff]
    %v680 = vld [vmem:[#allocation2 + $0xf80] sm:$0xff]
    %v681 = vld [vmem:[#allocation2 + $0xf88] sm:$0xff]
    %v682 = vld [vmem:[#allocation2 + $0xf90] sm:$0xff]
    %v683 = vld [vmem:[#allocation2 + $0xf98] sm:$0xff]
    %v684 = vld [vmem:[#allocation2 + $0xfa0] sm:$0xff]
    %v685 = vld [vmem:[#allocation2 + $0xfa8] sm:$0xff]
    %v686 = vld [vmem:[#allocation2 + $0xfb0] sm:$0xff]
    %v687 = vld [vmem:[#allocation2 + $0xfb8] sm:$0xff]
    %v688 = vld [vmem:[#allocation2 + $0xfc0] sm:$0xff]
    %v689 = vld [vmem:[#allocation2 + $0xfc8] sm:$0xff]
    %v690 = vld [vmem:[#allocation2 + $0xfd0] sm:$0xff]
    %v691 = vld [vmem:[#allocation2 + $0xfd8] sm:$0xff]
    %v692 = vld [vmem:[#allocation2 + $0xfe0] sm:$0xff]
    %v693 = vld [vmem:[#allocation2 + $0xfe8] sm:$0xff]
    %v694 = vld [vmem:[#allocation2 + $0xff0] sm:$0xff]
    %v695 = vld [vmem:[#allocation2 + $0xff8] sm:$0xff]
    %v696 = vld [vmem:[#allocation4] sm:$0xf]
    %v698 = vlaneseq
    %v699 = vshrl.u32 %v698, 7
    %v700 = vsub.s32 0, %v699
    %v701 = vrot.slane %v696, %v700
    %v702 = vlaneseq
    %v703 = vshrl.u32 %v702, 7
    %v704 = vsub.s32 1, %v703
    %v705 = vrot.slane %v696, %v704
    %v706 = vlaneseq
    %v707 = vshrl.u32 %v706, 7
    %v708 = vsub.s32 2, %v707
    %v709 = vrot.slane %v696, %v708
    %v710 = vlaneseq
    %v711 = vshrl.u32 %v710, 7
    %v712 = vsub.s32 3, %v711
    %v713 = vrot.slane %v696, %v712
    %v1230 = vunpack.c.l.b16 %v184
    %v1231 = vunpack.c.h.b16 %v184
    %v1232 = vunpack.c.l.b16 %v185
    %v1233 = vunpack.c.h.b16 %v185
    %v1234 = vunpack.c.l.b16 %v186
    %v1235 = vunpack.c.h.b16 %v186
    %v1236 = vunpack.c.l.b16 %v187
    %v1237 = vunpack.c.h.b16 %v187
    %v1238 = vunpack.c.l.b16 %v188
    %v1239 = vunpack.c.h.b16 %v188
    %v1240 = vunpack.c.l.b16 %v189
    %v1241 = vunpack.c.h.b16 %v189
    %v1242 = vunpack.c.l.b16 %v190
    %v1243 = vunpack.c.h.b16 %v190
    %v1244 = vunpack.c.l.b16 %v191
    %v1245 = vunpack.c.h.b16 %v191
    %v1246 = vunpack.c.l.b16 %v192
    %v1247 = vunpack.c.h.b16 %v192
    %v1248 = vunpack.c.l.b16 %v193
    %v1249 = vunpack.c.h.b16 %v193
    %v1250 = vunpack.c.l.b16 %v194
    %v1251 = vunpack.c.h.b16 %v194
    %v1252 = vunpack.c.l.b16 %v195
    %v1253 = vunpack.c.h.b16 %v195
    %v1254 = vunpack.c.l.b16 %v196
    %v1255 = vunpack.c.h.b16 %v196
    %v1256 = vunpack.c.l.b16 %v197
    %v1257 = vunpack.c.h.b16 %v197
    %v1258 = vunpack.c.l.b16 %v198
    %v1259 = vunpack.c.h.b16 %v198
    %v1260 = vunpack.c.l.b16 %v199
    %v1261 = vunpack.c.h.b16 %v199
    %v1262 = vunpack.c.l.b16 %v200
    %v1263 = vunpack.c.h.b16 %v200
    %v1264 = vunpack.c.l.b16 %v201
    %v1265 = vunpack.c.h.b16 %v201
    %v1266 = vunpack.c.l.b16 %v202
    %v1267 = vunpack.c.h.b16 %v202
    %v1268 = vunpack.c.l.b16 %v203
    %v1269 = vunpack.c.h.b16 %v203
    %v1270 = vunpack.c.l.b16 %v204
    %v1271 = vunpack.c.h.b16 %v204
    %v1272 = vunpack.c.l.b16 %v205
    %v1273 = vunpack.c.h.b16 %v205
    %v1274 = vunpack.c.l.b16 %v206
    %v1275 = vunpack.c.h.b16 %v206
    %v1276 = vunpack.c.l.b16 %v207
    %v1277 = vunpack.c.h.b16 %v207
    %v1278 = vunpack.c.l.b16 %v208
    %v1279 = vunpack.c.h.b16 %v208
    %v1280 = vunpack.c.l.b16 %v209
    %v1281 = vunpack.c.h.b16 %v209
    %v1282 = vunpack.c.l.b16 %v210
    %v1283 = vunpack.c.h.b16 %v210
    %v1284 = vunpack.c.l.b16 %v211
    %v1285 = vunpack.c.h.b16 %v211
    %v1286 = vunpack.c.l.b16 %v212
    %v1287 = vunpack.c.h.b16 %v212
    %v1288 = vunpack.c.l.b16 %v213
    %v1289 = vunpack.c.h.b16 %v213
    %v1290 = vunpack.c.l.b16 %v214
    %v1291 = vunpack.c.h.b16 %v214
    %v1292 = vunpack.c.l.b16 %v215
    %v1293 = vunpack.c.h.b16 %v215
    %v1294 = vunpack.c.l.b16 %v216
    %v1295 = vunpack.c.h.b16 %v216
    %v1296 = vunpack.c.l.b16 %v217
    %v1297 = vunpack.c.h.b16 %v217
    %v1298 = vunpack.c.l.b16 %v218
    %v1299 = vunpack.c.h.b16 %v218
    %v1300 = vunpack.c.l.b16 %v219
    %v1301 = vunpack.c.h.b16 %v219
    %v1302 = vunpack.c.l.b16 %v220
    %v1303 = vunpack.c.h.b16 %v220
    %v1304 = vunpack.c.l.b16 %v221
    %v1305 = vunpack.c.h.b16 %v221
    %v1306 = vunpack.c.l.b16 %v222
    %v1307 = vunpack.c.h.b16 %v222
    %v1308 = vunpack.c.l.b16 %v223
    %v1309 = vunpack.c.h.b16 %v223
    %v1310 = vunpack.c.l.b16 %v224
    %v1311 = vunpack.c.h.b16 %v224
    %v1312 = vunpack.c.l.b16 %v225
    %v1313 = vunpack.c.h.b16 %v225
    %v1314 = vunpack.c.l.b16 %v226
    %v1315 = vunpack.c.h.b16 %v226
    %v1316 = vunpack.c.l.b16 %v227
    %v1317 = vunpack.c.h.b16 %v227
    %v1318 = vunpack.c.l.b16 %v228
    %v1319 = vunpack.c.h.b16 %v228
    %v1320 = vunpack.c.l.b16 %v229
    %v1321 = vunpack.c.h.b16 %v229
    %v1322 = vunpack.c.l.b16 %v230
    %v1323 = vunpack.c.h.b16 %v230
    %v1324 = vunpack.c.l.b16 %v231
    %v1325 = vunpack.c.h.b16 %v231
    %v1326 = vunpack.c.l.b16 %v232
    %v1327 = vunpack.c.h.b16 %v232
    %v1328 = vunpack.c.l.b16 %v233
    %v1329 = vunpack.c.h.b16 %v233
    %v1330 = vunpack.c.l.b16 %v234
    %v1331 = vunpack.c.h.b16 %v234
    %v1332 = vunpack.c.l.b16 %v235
    %v1333 = vunpack.c.h.b16 %v235
    %v1334 = vunpack.c.l.b16 %v236
    %v1335 = vunpack.c.h.b16 %v236
    %v1336 = vunpack.c.l.b16 %v237
    %v1337 = vunpack.c.h.b16 %v237
    %v1338 = vunpack.c.l.b16 %v238
    %v1339 = vunpack.c.h.b16 %v238
    %v1340 = vunpack.c.l.b16 %v239
    %v1341 = vunpack.c.h.b16 %v239
    %v1342 = vunpack.c.l.b16 %v240
    %v1343 = vunpack.c.h.b16 %v240
    %v1344 = vunpack.c.l.b16 %v241
    %v1345 = vunpack.c.h.b16 %v241
    %v1346 = vunpack.c.l.b16 %v242
    %v1347 = vunpack.c.h.b16 %v242
    %v1348 = vunpack.c.l.b16 %v243
    %v1349 = vunpack.c.h.b16 %v243
    %v1350 = vunpack.c.l.b16 %v244
    %v1351 = vunpack.c.h.b16 %v244
    %v1352 = vunpack.c.l.b16 %v245
    %v1353 = vunpack.c.h.b16 %v245
    %v1354 = vunpack.c.l.b16 %v246
    %v1355 = vunpack.c.h.b16 %v246
    %v1356 = vunpack.c.l.b16 %v247
    %v1357 = vunpack.c.h.b16 %v247
    %v1358 = vunpack.c.l.b16 %v248
    %v1359 = vunpack.c.h.b16 %v248
    %v1360 = vunpack.c.l.b16 %v249
    %v1361 = vunpack.c.h.b16 %v249
    %v1362 = vunpack.c.l.b16 %v250
    %v1363 = vunpack.c.h.b16 %v250
    %v1364 = vunpack.c.l.b16 %v251
    %v1365 = vunpack.c.h.b16 %v251
    %v1366 = vunpack.c.l.b16 %v252
    %v1367 = vunpack.c.h.b16 %v252
    %v1368 = vunpack.c.l.b16 %v253
    %v1369 = vunpack.c.h.b16 %v253
    %v1370 = vunpack.c.l.b16 %v254
    %v1371 = vunpack.c.h.b16 %v254
    %v1372 = vunpack.c.l.b16 %v255
    %v1373 = vunpack.c.h.b16 %v255
    %v1374 = vunpack.c.l.b16 %v256
    %v1375 = vunpack.c.h.b16 %v256
    %v1376 = vunpack.c.l.b16 %v257
    %v1377 = vunpack.c.h.b16 %v257
    %v1378 = vunpack.c.l.b16 %v258
    %v1379 = vunpack.c.h.b16 %v258
    %v1380 = vunpack.c.l.b16 %v259
    %v1381 = vunpack.c.h.b16 %v259
    %v1382 = vunpack.c.l.b16 %v260
    %v1383 = vunpack.c.h.b16 %v260
    %v1384 = vunpack.c.l.b16 %v261
    %v1385 = vunpack.c.h.b16 %v261
    %v1386 = vunpack.c.l.b16 %v262
    %v1387 = vunpack.c.h.b16 %v262
    %v1388 = vunpack.c.l.b16 %v263
    %v1389 = vunpack.c.h.b16 %v263
    %v1390 = vunpack.c.l.b16 %v264
    %v1391 = vunpack.c.h.b16 %v264
    %v1392 = vunpack.c.l.b16 %v265
    %v1393 = vunpack.c.h.b16 %v265
    %v1394 = vunpack.c.l.b16 %v266
    %v1395 = vunpack.c.h.b16 %v266
    %v1396 = vunpack.c.l.b16 %v267
    %v1397 = vunpack.c.h.b16 %v267
    %v1398 = vunpack.c.l.b16 %v268
    %v1399 = vunpack.c.h.b16 %v268
    %v1400 = vunpack.c.l.b16 %v269
    %v1401 = vunpack.c.h.b16 %v269
    %v1402 = vunpack.c.l.b16 %v270
    %v1403 = vunpack.c.h.b16 %v270
    %v1404 = vunpack.c.l.b16 %v271
    %v1405 = vunpack.c.h.b16 %v271
    %v1406 = vunpack.c.l.b16 %v272
    %v1407 = vunpack.c.h.b16 %v272
    %v1408 = vunpack.c.l.b16 %v273
    %v1409 = vunpack.c.h.b16 %v273
    %v1410 = vunpack.c.l.b16 %v274
    %v1411 = vunpack.c.h.b16 %v274
    %v1412 = vunpack.c.l.b16 %v275
    %v1413 = vunpack.c.h.b16 %v275
    %v1414 = vunpack.c.l.b16 %v276
    %v1415 = vunpack.c.h.b16 %v276
    %v1416 = vunpack.c.l.b16 %v277
    %v1417 = vunpack.c.h.b16 %v277
    %v1418 = vunpack.c.l.b16 %v278
    %v1419 = vunpack.c.h.b16 %v278
    %v1420 = vunpack.c.l.b16 %v279
    %v1421 = vunpack.c.h.b16 %v279
    %v1422 = vunpack.c.l.b16 %v280
    %v1423 = vunpack.c.h.b16 %v280
    %v1424 = vunpack.c.l.b16 %v281
    %v1425 = vunpack.c.h.b16 %v281
    %v1426 = vunpack.c.l.b16 %v282
    %v1427 = vunpack.c.h.b16 %v282
    %v1428 = vunpack.c.l.b16 %v283
    %v1429 = vunpack.c.h.b16 %v283
    %v1430 = vunpack.c.l.b16 %v284
    %v1431 = vunpack.c.h.b16 %v284
    %v1432 = vunpack.c.l.b16 %v285
    %v1433 = vunpack.c.h.b16 %v285
    %v1434 = vunpack.c.l.b16 %v286
    %v1435 = vunpack.c.h.b16 %v286
    %v1436 = vunpack.c.l.b16 %v287
    %v1437 = vunpack.c.h.b16 %v287
    %v1438 = vunpack.c.l.b16 %v288
    %v1439 = vunpack.c.h.b16 %v288
    %v1440 = vunpack.c.l.b16 %v289
    %v1441 = vunpack.c.h.b16 %v289
    %v1442 = vunpack.c.l.b16 %v290
    %v1443 = vunpack.c.h.b16 %v290
    %v1444 = vunpack.c.l.b16 %v291
    %v1445 = vunpack.c.h.b16 %v291
    %v1446 = vunpack.c.l.b16 %v292
    %v1447 = vunpack.c.h.b16 %v292
    %v1448 = vunpack.c.l.b16 %v293
    %v1449 = vunpack.c.h.b16 %v293
    %v1450 = vunpack.c.l.b16 %v294
    %v1451 = vunpack.c.h.b16 %v294
    %v1452 = vunpack.c.l.b16 %v295
    %v1453 = vunpack.c.h.b16 %v295
    %v1454 = vunpack.c.l.b16 %v296
    %v1455 = vunpack.c.h.b16 %v296
    %v1456 = vunpack.c.l.b16 %v297
    %v1457 = vunpack.c.h.b16 %v297
    %v1458 = vunpack.c.l.b16 %v298
    %v1459 = vunpack.c.h.b16 %v298
    %v1460 = vunpack.c.l.b16 %v299
    %v1461 = vunpack.c.h.b16 %v299
    %v1462 = vunpack.c.l.b16 %v300
    %v1463 = vunpack.c.h.b16 %v300
    %v1464 = vunpack.c.l.b16 %v301
    %v1465 = vunpack.c.h.b16 %v301
    %v1466 = vunpack.c.l.b16 %v302
    %v1467 = vunpack.c.h.b16 %v302
    %v1468 = vunpack.c.l.b16 %v303
    %v1469 = vunpack.c.h.b16 %v303
    %v1470 = vunpack.c.l.b16 %v304
    %v1471 = vunpack.c.h.b16 %v304
    %v1472 = vunpack.c.l.b16 %v305
    %v1473 = vunpack.c.h.b16 %v305
    %v1474 = vunpack.c.l.b16 %v306
    %v1475 = vunpack.c.h.b16 %v306
    %v1476 = vunpack.c.l.b16 %v307
    %v1477 = vunpack.c.h.b16 %v307
    %v1478 = vunpack.c.l.b16 %v308
    %v1479 = vunpack.c.h.b16 %v308
    %v1480 = vunpack.c.l.b16 %v309
    %v1481 = vunpack.c.h.b16 %v309
    %v1482 = vunpack.c.l.b16 %v310
    %v1483 = vunpack.c.h.b16 %v310
    %v1484 = vunpack.c.l.b16 %v311
    %v1485 = vunpack.c.h.b16 %v311
    %v1486 = vunpack.c.l.b16 %v312
    %v1487 = vunpack.c.h.b16 %v312
    %v1488 = vunpack.c.l.b16 %v313
    %v1489 = vunpack.c.h.b16 %v313
    %v1490 = vunpack.c.l.b16 %v314
    %v1491 = vunpack.c.h.b16 %v314
    %v1492 = vunpack.c.l.b16 %v315
    %v1493 = vunpack.c.h.b16 %v315
    %v1494 = vunpack.c.l.b16 %v316
    %v1495 = vunpack.c.h.b16 %v316
    %v1496 = vunpack.c.l.b16 %v317
    %v1497 = vunpack.c.h.b16 %v317
    %v1498 = vunpack.c.l.b16 %v318
    %v1499 = vunpack.c.h.b16 %v318
    %v1500 = vunpack.c.l.b16 %v319
    %v1501 = vunpack.c.h.b16 %v319
    %v1502 = vunpack.c.l.b16 %v320
    %v1503 = vunpack.c.h.b16 %v320
    %v1504 = vunpack.c.l.b16 %v321
    %v1505 = vunpack.c.h.b16 %v321
    %v1506 = vunpack.c.l.b16 %v322
    %v1507 = vunpack.c.h.b16 %v322
    %v1508 = vunpack.c.l.b16 %v323
    %v1509 = vunpack.c.h.b16 %v323
    %v1510 = vunpack.c.l.b16 %v324
    %v1511 = vunpack.c.h.b16 %v324
    %v1512 = vunpack.c.l.b16 %v325
    %v1513 = vunpack.c.h.b16 %v325
    %v1514 = vunpack.c.l.b16 %v326
    %v1515 = vunpack.c.h.b16 %v326
    %v1516 = vunpack.c.l.b16 %v327
    %v1517 = vunpack.c.h.b16 %v327
    %v1518 = vunpack.c.l.b16 %v328
    %v1519 = vunpack.c.h.b16 %v328
    %v1520 = vunpack.c.l.b16 %v329
    %v1521 = vunpack.c.h.b16 %v329
    %v1522 = vunpack.c.l.b16 %v330
    %v1523 = vunpack.c.h.b16 %v330
    %v1524 = vunpack.c.l.b16 %v331
    %v1525 = vunpack.c.h.b16 %v331
    %v1526 = vunpack.c.l.b16 %v332
    %v1527 = vunpack.c.h.b16 %v332
    %v1528 = vunpack.c.l.b16 %v333
    %v1529 = vunpack.c.h.b16 %v333
    %v1530 = vunpack.c.l.b16 %v334
    %v1531 = vunpack.c.h.b16 %v334
    %v1532 = vunpack.c.l.b16 %v335
    %v1533 = vunpack.c.h.b16 %v335
    %v1534 = vunpack.c.l.b16 %v336
    %v1535 = vunpack.c.h.b16 %v336
    %v1536 = vunpack.c.l.b16 %v337
    %v1537 = vunpack.c.h.b16 %v337
    %v1538 = vunpack.c.l.b16 %v338
    %v1539 = vunpack.c.h.b16 %v338
    %v1540 = vunpack.c.l.b16 %v339
    %v1541 = vunpack.c.h.b16 %v339
    %v1542 = vunpack.c.l.b16 %v340
    %v1543 = vunpack.c.h.b16 %v340
    %v1544 = vunpack.c.l.b16 %v341
    %v1545 = vunpack.c.h.b16 %v341
    %v1546 = vunpack.c.l.b16 %v342
    %v1547 = vunpack.c.h.b16 %v342
    %v1548 = vunpack.c.l.b16 %v343
    %v1549 = vunpack.c.h.b16 %v343
    %v1550 = vunpack.c.l.b16 %v344
    %v1551 = vunpack.c.h.b16 %v344
    %v1552 = vunpack.c.l.b16 %v345
    %v1553 = vunpack.c.h.b16 %v345
    %v1554 = vunpack.c.l.b16 %v346
    %v1555 = vunpack.c.h.b16 %v346
    %v1556 = vunpack.c.l.b16 %v347
    %v1557 = vunpack.c.h.b16 %v347
    %v1558 = vunpack.c.l.b16 %v348
    %v1559 = vunpack.c.h.b16 %v348
    %v1560 = vunpack.c.l.b16 %v349
    %v1561 = vunpack.c.h.b16 %v349
    %v1562 = vunpack.c.l.b16 %v350
    %v1563 = vunpack.c.h.b16 %v350
    %v1564 = vunpack.c.l.b16 %v351
    %v1565 = vunpack.c.h.b16 %v351
    %v1566 = vunpack.c.l.b16 %v352
    %v1567 = vunpack.c.h.b16 %v352
    %v1568 = vunpack.c.l.b16 %v353
    %v1569 = vunpack.c.h.b16 %v353
    %v1570 = vunpack.c.l.b16 %v354
    %v1571 = vunpack.c.h.b16 %v354
    %v1572 = vunpack.c.l.b16 %v355
    %v1573 = vunpack.c.h.b16 %v355
    %v1574 = vunpack.c.l.b16 %v356
    %v1575 = vunpack.c.h.b16 %v356
    %v1576 = vunpack.c.l.b16 %v357
    %v1577 = vunpack.c.h.b16 %v357
    %v1578 = vunpack.c.l.b16 %v358
    %v1579 = vunpack.c.h.b16 %v358
    %v1580 = vunpack.c.l.b16 %v359
    %v1581 = vunpack.c.h.b16 %v359
    %v1582 = vunpack.c.l.b16 %v360
    %v1583 = vunpack.c.h.b16 %v360
    %v1584 = vunpack.c.l.b16 %v361
    %v1585 = vunpack.c.h.b16 %v361
    %v1586 = vunpack.c.l.b16 %v362
    %v1587 = vunpack.c.h.b16 %v362
    %v1588 = vunpack.c.l.b16 %v363
    %v1589 = vunpack.c.h.b16 %v363
    %v1590 = vunpack.c.l.b16 %v364
    %v1591 = vunpack.c.h.b16 %v364
    %v1592 = vunpack.c.l.b16 %v365
    %v1593 = vunpack.c.h.b16 %v365
    %v1594 = vunpack.c.l.b16 %v366
    %v1595 = vunpack.c.h.b16 %v366
    %v1596 = vunpack.c.l.b16 %v367
    %v1597 = vunpack.c.h.b16 %v367
    %v1598 = vunpack.c.l.b16 %v368
    %v1599 = vunpack.c.h.b16 %v368
    %v1600 = vunpack.c.l.b16 %v369
    %v1601 = vunpack.c.h.b16 %v369
    %v1602 = vunpack.c.l.b16 %v370
    %v1603 = vunpack.c.h.b16 %v370
    %v1604 = vunpack.c.l.b16 %v371
    %v1605 = vunpack.c.h.b16 %v371
    %v1606 = vunpack.c.l.b16 %v372
    %v1607 = vunpack.c.h.b16 %v372
    %v1608 = vunpack.c.l.b16 %v373
    %v1609 = vunpack.c.h.b16 %v373
    %v1610 = vunpack.c.l.b16 %v374
    %v1611 = vunpack.c.h.b16 %v374
    %v1612 = vunpack.c.l.b16 %v375
    %v1613 = vunpack.c.h.b16 %v375
    %v1614 = vunpack.c.l.b16 %v376
    %v1615 = vunpack.c.h.b16 %v376
    %v1616 = vunpack.c.l.b16 %v377
    %v1617 = vunpack.c.h.b16 %v377
    %v1618 = vunpack.c.l.b16 %v378
    %v1619 = vunpack.c.h.b16 %v378
    %v1620 = vunpack.c.l.b16 %v379
    %v1621 = vunpack.c.h.b16 %v379
    %v1622 = vunpack.c.l.b16 %v380
    %v1623 = vunpack.c.h.b16 %v380
    %v1624 = vunpack.c.l.b16 %v381
    %v1625 = vunpack.c.h.b16 %v381
    %v1626 = vunpack.c.l.b16 %v382
    %v1627 = vunpack.c.h.b16 %v382
    %v1628 = vunpack.c.l.b16 %v383
    %v1629 = vunpack.c.h.b16 %v383
    %v1630 = vunpack.c.l.b16 %v384
    %v1631 = vunpack.c.h.b16 %v384
    %v1632 = vunpack.c.l.b16 %v385
    %v1633 = vunpack.c.h.b16 %v385
    %v1634 = vunpack.c.l.b16 %v386
    %v1635 = vunpack.c.h.b16 %v386
    %v1636 = vunpack.c.l.b16 %v387
    %v1637 = vunpack.c.h.b16 %v387
    %v1638 = vunpack.c.l.b16 %v388
    %v1639 = vunpack.c.h.b16 %v388
    %v1640 = vunpack.c.l.b16 %v389
    %v1641 = vunpack.c.h.b16 %v389
    %v1642 = vunpack.c.l.b16 %v390
    %v1643 = vunpack.c.h.b16 %v390
    %v1644 = vunpack.c.l.b16 %v391
    %v1645 = vunpack.c.h.b16 %v391
    %v1646 = vunpack.c.l.b16 %v392
    %v1647 = vunpack.c.h.b16 %v392
    %v1648 = vunpack.c.l.b16 %v393
    %v1649 = vunpack.c.h.b16 %v393
    %v1650 = vunpack.c.l.b16 %v394
    %v1651 = vunpack.c.h.b16 %v394
    %v1652 = vunpack.c.l.b16 %v395
    %v1653 = vunpack.c.h.b16 %v395
    %v1654 = vunpack.c.l.b16 %v396
    %v1655 = vunpack.c.h.b16 %v396
    %v1656 = vunpack.c.l.b16 %v397
    %v1657 = vunpack.c.h.b16 %v397
    %v1658 = vunpack.c.l.b16 %v398
    %v1659 = vunpack.c.h.b16 %v398
    %v1660 = vunpack.c.l.b16 %v399
    %v1661 = vunpack.c.h.b16 %v399
    %v1662 = vunpack.c.l.b16 %v400
    %v1663 = vunpack.c.h.b16 %v400
    %v1664 = vunpack.c.l.b16 %v401
    %v1665 = vunpack.c.h.b16 %v401
    %v1666 = vunpack.c.l.b16 %v402
    %v1667 = vunpack.c.h.b16 %v402
    %v1668 = vunpack.c.l.b16 %v403
    %v1669 = vunpack.c.h.b16 %v403
    %v1670 = vunpack.c.l.b16 %v404
    %v1671 = vunpack.c.h.b16 %v404
    %v1672 = vunpack.c.l.b16 %v405
    %v1673 = vunpack.c.h.b16 %v405
    %v1674 = vunpack.c.l.b16 %v406
    %v1675 = vunpack.c.h.b16 %v406
    %v1676 = vunpack.c.l.b16 %v407
    %v1677 = vunpack.c.h.b16 %v407
    %v1678 = vunpack.c.l.b16 %v408
    %v1679 = vunpack.c.h.b16 %v408
    %v1680 = vunpack.c.l.b16 %v409
    %v1681 = vunpack.c.h.b16 %v409
    %v1682 = vunpack.c.l.b16 %v410
    %v1683 = vunpack.c.h.b16 %v410
    %v1684 = vunpack.c.l.b16 %v411
    %v1685 = vunpack.c.h.b16 %v411
    %v1686 = vunpack.c.l.b16 %v412
    %v1687 = vunpack.c.h.b16 %v412
    %v1688 = vunpack.c.l.b16 %v413
    %v1689 = vunpack.c.h.b16 %v413
    %v1690 = vunpack.c.l.b16 %v414
    %v1691 = vunpack.c.h.b16 %v414
    %v1692 = vunpack.c.l.b16 %v415
    %v1693 = vunpack.c.h.b16 %v415
    %v1694 = vunpack.c.l.b16 %v416
    %v1695 = vunpack.c.h.b16 %v416
    %v1696 = vunpack.c.l.b16 %v417
    %v1697 = vunpack.c.h.b16 %v417
    %v1698 = vunpack.c.l.b16 %v418
    %v1699 = vunpack.c.h.b16 %v418
    %v1700 = vunpack.c.l.b16 %v419
    %v1701 = vunpack.c.h.b16 %v419
    %v1702 = vunpack.c.l.b16 %v420
    %v1703 = vunpack.c.h.b16 %v420
    %v1704 = vunpack.c.l.b16 %v421
    %v1705 = vunpack.c.h.b16 %v421
    %v1706 = vunpack.c.l.b16 %v422
    %v1707 = vunpack.c.h.b16 %v422
    %v1708 = vunpack.c.l.b16 %v423
    %v1709 = vunpack.c.h.b16 %v423
    %v1710 = vunpack.c.l.b16 %v424
    %v1711 = vunpack.c.h.b16 %v424
    %v1712 = vunpack.c.l.b16 %v425
    %v1713 = vunpack.c.h.b16 %v425
    %v1714 = vunpack.c.l.b16 %v426
    %v1715 = vunpack.c.h.b16 %v426
    %v1716 = vunpack.c.l.b16 %v427
    %v1717 = vunpack.c.h.b16 %v427
    %v1718 = vunpack.c.l.b16 %v428
    %v1719 = vunpack.c.h.b16 %v428
    %v1720 = vunpack.c.l.b16 %v429
    %v1721 = vunpack.c.h.b16 %v429
    %v1722 = vunpack.c.l.b16 %v430
    %v1723 = vunpack.c.h.b16 %v430
    %v1724 = vunpack.c.l.b16 %v431
    %v1725 = vunpack.c.h.b16 %v431
    %v1726 = vunpack.c.l.b16 %v432
    %v1727 = vunpack.c.h.b16 %v432
    %v1728 = vunpack.c.l.b16 %v433
    %v1729 = vunpack.c.h.b16 %v433
    %v1730 = vunpack.c.l.b16 %v434
    %v1731 = vunpack.c.h.b16 %v434
    %v1732 = vunpack.c.l.b16 %v435
    %v1733 = vunpack.c.h.b16 %v435
    %v1734 = vunpack.c.l.b16 %v436
    %v1735 = vunpack.c.h.b16 %v436
    %v1736 = vunpack.c.l.b16 %v437
    %v1737 = vunpack.c.h.b16 %v437
    %v1738 = vunpack.c.l.b16 %v438
    %v1739 = vunpack.c.h.b16 %v438
    %v1740 = vunpack.c.l.b16 %v439
    %v1741 = vunpack.c.h.b16 %v439
    %v1742 = vunpack.c.l.b16 %v440
    %v1743 = vunpack.c.h.b16 %v440
    %v1744 = vunpack.c.l.b16 %v441
    %v1745 = vunpack.c.h.b16 %v441
    %v1746 = vunpack.c.l.b16 %v442
    %v1747 = vunpack.c.h.b16 %v442
    %v1748 = vunpack.c.l.b16 %v443
    %v1749 = vunpack.c.h.b16 %v443
    %v1750 = vunpack.c.l.b16 %v444
    %v1751 = vunpack.c.h.b16 %v444
    %v1752 = vunpack.c.l.b16 %v445
    %v1753 = vunpack.c.h.b16 %v445
    %v1754 = vunpack.c.l.b16 %v446
    %v1755 = vunpack.c.h.b16 %v446
    %v1756 = vunpack.c.l.b16 %v447
    %v1757 = vunpack.c.h.b16 %v447
    %v1758 = vunpack.c.l.b16 %v448
    %v1759 = vunpack.c.h.b16 %v448
    %v1760 = vunpack.c.l.b16 %v449
    %v1761 = vunpack.c.h.b16 %v449
    %v1762 = vunpack.c.l.b16 %v450
    %v1763 = vunpack.c.h.b16 %v450
    %v1764 = vunpack.c.l.b16 %v451
    %v1765 = vunpack.c.h.b16 %v451
    %v1766 = vunpack.c.l.b16 %v452
    %v1767 = vunpack.c.h.b16 %v452
    %v1768 = vunpack.c.l.b16 %v453
    %v1769 = vunpack.c.h.b16 %v453
    %v1770 = vunpack.c.l.b16 %v454
    %v1771 = vunpack.c.h.b16 %v454
    %v1772 = vunpack.c.l.b16 %v455
    %v1773 = vunpack.c.h.b16 %v455
    %v1774 = vunpack.c.l.b16 %v456
    %v1775 = vunpack.c.h.b16 %v456
    %v1776 = vunpack.c.l.b16 %v457
    %v1777 = vunpack.c.h.b16 %v457
    %v1778 = vunpack.c.l.b16 %v458
    %v1779 = vunpack.c.h.b16 %v458
    %v1780 = vunpack.c.l.b16 %v459
    %v1781 = vunpack.c.h.b16 %v459
    %v1782 = vunpack.c.l.b16 %v460
    %v1783 = vunpack.c.h.b16 %v460
    %v1784 = vunpack.c.l.b16 %v461
    %v1785 = vunpack.c.h.b16 %v461
    %v1786 = vunpack.c.l.b16 %v462
    %v1787 = vunpack.c.h.b16 %v462
    %v1788 = vunpack.c.l.b16 %v463
    %v1789 = vunpack.c.h.b16 %v463
    %v1790 = vunpack.c.l.b16 %v464
    %v1791 = vunpack.c.h.b16 %v464
    %v1792 = vunpack.c.l.b16 %v465
    %v1793 = vunpack.c.h.b16 %v465
    %v1794 = vunpack.c.l.b16 %v466
    %v1795 = vunpack.c.h.b16 %v466
    %v1796 = vunpack.c.l.b16 %v467
    %v1797 = vunpack.c.h.b16 %v467
    %v1798 = vunpack.c.l.b16 %v468
    %v1799 = vunpack.c.h.b16 %v468
    %v1800 = vunpack.c.l.b16 %v469
    %v1801 = vunpack.c.h.b16 %v469
    %v1802 = vunpack.c.l.b16 %v470
    %v1803 = vunpack.c.h.b16 %v470
    %v1804 = vunpack.c.l.b16 %v471
    %v1805 = vunpack.c.h.b16 %v471
    %v1806 = vunpack.c.l.b16 %v472
    %v1807 = vunpack.c.h.b16 %v472
    %v1808 = vunpack.c.l.b16 %v473
    %v1809 = vunpack.c.h.b16 %v473
    %v1810 = vunpack.c.l.b16 %v474
    %v1811 = vunpack.c.h.b16 %v474
    %v1812 = vunpack.c.l.b16 %v475
    %v1813 = vunpack.c.h.b16 %v475
    %v1814 = vunpack.c.l.b16 %v476
    %v1815 = vunpack.c.h.b16 %v476
    %v1816 = vunpack.c.l.b16 %v477
    %v1817 = vunpack.c.h.b16 %v477
    %v1818 = vunpack.c.l.b16 %v478
    %v1819 = vunpack.c.h.b16 %v478
    %v1820 = vunpack.c.l.b16 %v479
    %v1821 = vunpack.c.h.b16 %v479
    %v1822 = vunpack.c.l.b16 %v480
    %v1823 = vunpack.c.h.b16 %v480
    %v1824 = vunpack.c.l.b16 %v481
    %v1825 = vunpack.c.h.b16 %v481
    %v1826 = vunpack.c.l.b16 %v482
    %v1827 = vunpack.c.h.b16 %v482
    %v1828 = vunpack.c.l.b16 %v483
    %v1829 = vunpack.c.h.b16 %v483
    %v1830 = vunpack.c.l.b16 %v484
    %v1831 = vunpack.c.h.b16 %v484
    %v1832 = vunpack.c.l.b16 %v485
    %v1833 = vunpack.c.h.b16 %v485
    %v1834 = vunpack.c.l.b16 %v486
    %v1835 = vunpack.c.h.b16 %v486
    %v1836 = vunpack.c.l.b16 %v487
    %v1837 = vunpack.c.h.b16 %v487
    %v1838 = vunpack.c.l.b16 %v488
    %v1839 = vunpack.c.h.b16 %v488
    %v1840 = vunpack.c.l.b16 %v489
    %v1841 = vunpack.c.h.b16 %v489
    %v1842 = vunpack.c.l.b16 %v490
    %v1843 = vunpack.c.h.b16 %v490
    %v1844 = vunpack.c.l.b16 %v491
    %v1845 = vunpack.c.h.b16 %v491
    %v1846 = vunpack.c.l.b16 %v492
    %v1847 = vunpack.c.h.b16 %v492
    %v1848 = vunpack.c.l.b16 %v493
    %v1849 = vunpack.c.h.b16 %v493
    %v1850 = vunpack.c.l.b16 %v494
    %v1851 = vunpack.c.h.b16 %v494
    %v1852 = vunpack.c.l.b16 %v495
    %v1853 = vunpack.c.h.b16 %v495
    %v1854 = vunpack.c.l.b16 %v496
    %v1855 = vunpack.c.h.b16 %v496
    %v1856 = vunpack.c.l.b16 %v497
    %v1857 = vunpack.c.h.b16 %v497
    %v1858 = vunpack.c.l.b16 %v498
    %v1859 = vunpack.c.h.b16 %v498
    %v1860 = vunpack.c.l.b16 %v499
    %v1861 = vunpack.c.h.b16 %v499
    %v1862 = vunpack.c.l.b16 %v500
    %v1863 = vunpack.c.h.b16 %v500
    %v1864 = vunpack.c.l.b16 %v501
    %v1865 = vunpack.c.h.b16 %v501
    %v1866 = vunpack.c.l.b16 %v502
    %v1867 = vunpack.c.h.b16 %v502
    %v1868 = vunpack.c.l.b16 %v503
    %v1869 = vunpack.c.h.b16 %v503
    %v1870 = vunpack.c.l.b16 %v504
    %v1871 = vunpack.c.h.b16 %v504
    %v1872 = vunpack.c.l.b16 %v505
    %v1873 = vunpack.c.h.b16 %v505
    %v1874 = vunpack.c.l.b16 %v506
    %v1875 = vunpack.c.h.b16 %v506
    %v1876 = vunpack.c.l.b16 %v507
    %v1877 = vunpack.c.h.b16 %v507
    %v1878 = vunpack.c.l.b16 %v508
    %v1879 = vunpack.c.h.b16 %v508
    %v1880 = vunpack.c.l.b16 %v509
    %v1881 = vunpack.c.h.b16 %v509
    %v1882 = vunpack.c.l.b16 %v510
    %v1883 = vunpack.c.h.b16 %v510
    %v1884 = vunpack.c.l.b16 %v511
    %v1885 = vunpack.c.h.b16 %v511
    %v1886 = vunpack.c.l.b16 %v512
    %v1887 = vunpack.c.h.b16 %v512
    %v1888 = vunpack.c.l.b16 %v513
    %v1889 = vunpack.c.h.b16 %v513
    %v1890 = vunpack.c.l.b16 %v514
    %v1891 = vunpack.c.h.b16 %v514
    %v1892 = vunpack.c.l.b16 %v515
    %v1893 = vunpack.c.h.b16 %v515
    %v1894 = vunpack.c.l.b16 %v516
    %v1895 = vunpack.c.h.b16 %v516
    %v1896 = vunpack.c.l.b16 %v517
    %v1897 = vunpack.c.h.b16 %v517
    %v1898 = vunpack.c.l.b16 %v518
    %v1899 = vunpack.c.h.b16 %v518
    %v1900 = vunpack.c.l.b16 %v519
    %v1901 = vunpack.c.h.b16 %v519
    %v1902 = vunpack.c.l.b16 %v520
    %v1903 = vunpack.c.h.b16 %v520
    %v1904 = vunpack.c.l.b16 %v521
    %v1905 = vunpack.c.h.b16 %v521
    %v1906 = vunpack.c.l.b16 %v522
    %v1907 = vunpack.c.h.b16 %v522
    %v1908 = vunpack.c.l.b16 %v523
    %v1909 = vunpack.c.h.b16 %v523
    %v1910 = vunpack.c.l.b16 %v524
    %v1911 = vunpack.c.h.b16 %v524
    %v1912 = vunpack.c.l.b16 %v525
    %v1913 = vunpack.c.h.b16 %v525
    %v1914 = vunpack.c.l.b16 %v526
    %v1915 = vunpack.c.h.b16 %v526
    %v1916 = vunpack.c.l.b16 %v527
    %v1917 = vunpack.c.h.b16 %v527
    %v1918 = vunpack.c.l.b16 %v528
    %v1919 = vunpack.c.h.b16 %v528
    %v1920 = vunpack.c.l.b16 %v529
    %v1921 = vunpack.c.h.b16 %v529
    %v1922 = vunpack.c.l.b16 %v530
    %v1923 = vunpack.c.h.b16 %v530
    %v1924 = vunpack.c.l.b16 %v531
    %v1925 = vunpack.c.h.b16 %v531
    %v1926 = vunpack.c.l.b16 %v532
    %v1927 = vunpack.c.h.b16 %v532
    %v1928 = vunpack.c.l.b16 %v533
    %v1929 = vunpack.c.h.b16 %v533
    %v1930 = vunpack.c.l.b16 %v534
    %v1931 = vunpack.c.h.b16 %v534
    %v1932 = vunpack.c.l.b16 %v535
    %v1933 = vunpack.c.h.b16 %v535
    %v1934 = vunpack.c.l.b16 %v536
    %v1935 = vunpack.c.h.b16 %v536
    %v1936 = vunpack.c.l.b16 %v537
    %v1937 = vunpack.c.h.b16 %v537
    %v1938 = vunpack.c.l.b16 %v538
    %v1939 = vunpack.c.h.b16 %v538
    %v1940 = vunpack.c.l.b16 %v539
    %v1941 = vunpack.c.h.b16 %v539
    %v1942 = vunpack.c.l.b16 %v540
    %v1943 = vunpack.c.h.b16 %v540
    %v1944 = vunpack.c.l.b16 %v541
    %v1945 = vunpack.c.h.b16 %v541
    %v1946 = vunpack.c.l.b16 %v542
    %v1947 = vunpack.c.h.b16 %v542
    %v1948 = vunpack.c.l.b16 %v543
    %v1949 = vunpack.c.h.b16 %v543
    %v1950 = vunpack.c.l.b16 %v544
    %v1951 = vunpack.c.h.b16 %v544
    %v1952 = vunpack.c.l.b16 %v545
    %v1953 = vunpack.c.h.b16 %v545
    %v1954 = vunpack.c.l.b16 %v546
    %v1955 = vunpack.c.h.b16 %v546
    %v1956 = vunpack.c.l.b16 %v547
    %v1957 = vunpack.c.h.b16 %v547
    %v1958 = vunpack.c.l.b16 %v548
    %v1959 = vunpack.c.h.b16 %v548
    %v1960 = vunpack.c.l.b16 %v549
    %v1961 = vunpack.c.h.b16 %v549
    %v1962 = vunpack.c.l.b16 %v550
    %v1963 = vunpack.c.h.b16 %v550
    %v1964 = vunpack.c.l.b16 %v551
    %v1965 = vunpack.c.h.b16 %v551
    %v1966 = vunpack.c.l.b16 %v552
    %v1967 = vunpack.c.h.b16 %v552
    %v1968 = vunpack.c.l.b16 %v553
    %v1969 = vunpack.c.h.b16 %v553
    %v1970 = vunpack.c.l.b16 %v554
    %v1971 = vunpack.c.h.b16 %v554
    %v1972 = vunpack.c.l.b16 %v555
    %v1973 = vunpack.c.h.b16 %v555
    %v1974 = vunpack.c.l.b16 %v556
    %v1975 = vunpack.c.h.b16 %v556
    %v1976 = vunpack.c.l.b16 %v557
    %v1977 = vunpack.c.h.b16 %v557
    %v1978 = vunpack.c.l.b16 %v558
    %v1979 = vunpack.c.h.b16 %v558
    %v1980 = vunpack.c.l.b16 %v559
    %v1981 = vunpack.c.h.b16 %v559
    %v1982 = vunpack.c.l.b16 %v560
    %v1983 = vunpack.c.h.b16 %v560
    %v1984 = vunpack.c.l.b16 %v561
    %v1985 = vunpack.c.h.b16 %v561
    %v1986 = vunpack.c.l.b16 %v562
    %v1987 = vunpack.c.h.b16 %v562
    %v1988 = vunpack.c.l.b16 %v563
    %v1989 = vunpack.c.h.b16 %v563
    %v1990 = vunpack.c.l.b16 %v564
    %v1991 = vunpack.c.h.b16 %v564
    %v1992 = vunpack.c.l.b16 %v565
    %v1993 = vunpack.c.h.b16 %v565
    %v1994 = vunpack.c.l.b16 %v566
    %v1995 = vunpack.c.h.b16 %v566
    %v1996 = vunpack.c.l.b16 %v567
    %v1997 = vunpack.c.h.b16 %v567
    %v1998 = vunpack.c.l.b16 %v568
    %v1999 = vunpack.c.h.b16 %v568
    %v2000 = vunpack.c.l.b16 %v569
    %v2001 = vunpack.c.h.b16 %v569
    %v2002 = vunpack.c.l.b16 %v570
    %v2003 = vunpack.c.h.b16 %v570
    %v2004 = vunpack.c.l.b16 %v571
    %v2005 = vunpack.c.h.b16 %v571
    %v2006 = vunpack.c.l.b16 %v572
    %v2007 = vunpack.c.h.b16 %v572
    %v2008 = vunpack.c.l.b16 %v573
    %v2009 = vunpack.c.h.b16 %v573
    %v2010 = vunpack.c.l.b16 %v574
    %v2011 = vunpack.c.h.b16 %v574
    %v2012 = vunpack.c.l.b16 %v575
    %v2013 = vunpack.c.h.b16 %v575
    %v2014 = vunpack.c.l.b16 %v576
    %v2015 = vunpack.c.h.b16 %v576
    %v2016 = vunpack.c.l.b16 %v577
    %v2017 = vunpack.c.h.b16 %v577
    %v2018 = vunpack.c.l.b16 %v578
    %v2019 = vunpack.c.h.b16 %v578
    %v2020 = vunpack.c.l.b16 %v579
    %v2021 = vunpack.c.h.b16 %v579
    %v2022 = vunpack.c.l.b16 %v580
    %v2023 = vunpack.c.h.b16 %v580
    %v2024 = vunpack.c.l.b16 %v581
    %v2025 = vunpack.c.h.b16 %v581
    %v2026 = vunpack.c.l.b16 %v582
    %v2027 = vunpack.c.h.b16 %v582
    %v2028 = vunpack.c.l.b16 %v583
    %v2029 = vunpack.c.h.b16 %v583
    %v2030 = vunpack.c.l.b16 %v584
    %v2031 = vunpack.c.h.b16 %v584
    %v2032 = vunpack.c.l.b16 %v585
    %v2033 = vunpack.c.h.b16 %v585
    %v2034 = vunpack.c.l.b16 %v586
    %v2035 = vunpack.c.h.b16 %v586
    %v2036 = vunpack.c.l.b16 %v587
    %v2037 = vunpack.c.h.b16 %v587
    %v2038 = vunpack.c.l.b16 %v588
    %v2039 = vunpack.c.h.b16 %v588
    %v2040 = vunpack.c.l.b16 %v589
    %v2041 = vunpack.c.h.b16 %v589
    %v2042 = vunpack.c.l.b16 %v590
    %v2043 = vunpack.c.h.b16 %v590
    %v2044 = vunpack.c.l.b16 %v591
    %v2045 = vunpack.c.h.b16 %v591
    %v2046 = vunpack.c.l.b16 %v592
    %v2047 = vunpack.c.h.b16 %v592
    %v2048 = vunpack.c.l.b16 %v593
    %v2049 = vunpack.c.h.b16 %v593
    %v2050 = vunpack.c.l.b16 %v594
    %v2051 = vunpack.c.h.b16 %v594
    %v2052 = vunpack.c.l.b16 %v595
    %v2053 = vunpack.c.h.b16 %v595
    %v2054 = vunpack.c.l.b16 %v596
    %v2055 = vunpack.c.h.b16 %v596
    %v2056 = vunpack.c.l.b16 %v597
    %v2057 = vunpack.c.h.b16 %v597
    %v2058 = vunpack.c.l.b16 %v598
    %v2059 = vunpack.c.h.b16 %v598
    %v2060 = vunpack.c.l.b16 %v599
    %v2061 = vunpack.c.h.b16 %v599
    %v2062 = vunpack.c.l.b16 %v600
    %v2063 = vunpack.c.h.b16 %v600
    %v2064 = vunpack.c.l.b16 %v601
    %v2065 = vunpack.c.h.b16 %v601
    %v2066 = vunpack.c.l.b16 %v602
    %v2067 = vunpack.c.h.b16 %v602
    %v2068 = vunpack.c.l.b16 %v603
    %v2069 = vunpack.c.h.b16 %v603
    %v2070 = vunpack.c.l.b16 %v604
    %v2071 = vunpack.c.h.b16 %v604
    %v2072 = vunpack.c.l.b16 %v605
    %v2073 = vunpack.c.h.b16 %v605
    %v2074 = vunpack.c.l.b16 %v606
    %v2075 = vunpack.c.h.b16 %v606
    %v2076 = vunpack.c.l.b16 %v607
    %v2077 = vunpack.c.h.b16 %v607
    %v2078 = vunpack.c.l.b16 %v608
    %v2079 = vunpack.c.h.b16 %v608
    %v2080 = vunpack.c.l.b16 %v609
    %v2081 = vunpack.c.h.b16 %v609
    %v2082 = vunpack.c.l.b16 %v610
    %v2083 = vunpack.c.h.b16 %v610
    %v2084 = vunpack.c.l.b16 %v611
    %v2085 = vunpack.c.h.b16 %v611
    %v2086 = vunpack.c.l.b16 %v612
    %v2087 = vunpack.c.h.b16 %v612
    %v2088 = vunpack.c.l.b16 %v613
    %v2089 = vunpack.c.h.b16 %v613
    %v2090 = vunpack.c.l.b16 %v614
    %v2091 = vunpack.c.h.b16 %v614
    %v2092 = vunpack.c.l.b16 %v615
    %v2093 = vunpack.c.h.b16 %v615
    %v2094 = vunpack.c.l.b16 %v616
    %v2095 = vunpack.c.h.b16 %v616
    %v2096 = vunpack.c.l.b16 %v617
    %v2097 = vunpack.c.h.b16 %v617
    %v2098 = vunpack.c.l.b16 %v618
    %v2099 = vunpack.c.h.b16 %v618
    %v2100 = vunpack.c.l.b16 %v619
    %v2101 = vunpack.c.h.b16 %v619
    %v2102 = vunpack.c.l.b16 %v620
    %v2103 = vunpack.c.h.b16 %v620
    %v2104 = vunpack.c.l.b16 %v621
    %v2105 = vunpack.c.h.b16 %v621
    %v2106 = vunpack.c.l.b16 %v622
    %v2107 = vunpack.c.h.b16 %v622
    %v2108 = vunpack.c.l.b16 %v623
    %v2109 = vunpack.c.h.b16 %v623
    %v2110 = vunpack.c.l.b16 %v624
    %v2111 = vunpack.c.h.b16 %v624
    %v2112 = vunpack.c.l.b16 %v625
    %v2113 = vunpack.c.h.b16 %v625
    %v2114 = vunpack.c.l.b16 %v626
    %v2115 = vunpack.c.h.b16 %v626
    %v2116 = vunpack.c.l.b16 %v627
    %v2117 = vunpack.c.h.b16 %v627
    %v2118 = vunpack.c.l.b16 %v628
    %v2119 = vunpack.c.h.b16 %v628
    %v2120 = vunpack.c.l.b16 %v629
    %v2121 = vunpack.c.h.b16 %v629
    %v2122 = vunpack.c.l.b16 %v630
    %v2123 = vunpack.c.h.b16 %v630
    %v2124 = vunpack.c.l.b16 %v631
    %v2125 = vunpack.c.h.b16 %v631
    %v2126 = vunpack.c.l.b16 %v632
    %v2127 = vunpack.c.h.b16 %v632
    %v2128 = vunpack.c.l.b16 %v633
    %v2129 = vunpack.c.h.b16 %v633
    %v2130 = vunpack.c.l.b16 %v634
    %v2131 = vunpack.c.h.b16 %v634
    %v2132 = vunpack.c.l.b16 %v635
    %v2133 = vunpack.c.h.b16 %v635
    %v2134 = vunpack.c.l.b16 %v636
    %v2135 = vunpack.c.h.b16 %v636
    %v2136 = vunpack.c.l.b16 %v637
    %v2137 = vunpack.c.h.b16 %v637
    %v2138 = vunpack.c.l.b16 %v638
    %v2139 = vunpack.c.h.b16 %v638
    %v2140 = vunpack.c.l.b16 %v639
    %v2141 = vunpack.c.h.b16 %v639
    %v2142 = vunpack.c.l.b16 %v640
    %v2143 = vunpack.c.h.b16 %v640
    %v2144 = vunpack.c.l.b16 %v641
    %v2145 = vunpack.c.h.b16 %v641
    %v2146 = vunpack.c.l.b16 %v642
    %v2147 = vunpack.c.h.b16 %v642
    %v2148 = vunpack.c.l.b16 %v643
    %v2149 = vunpack.c.h.b16 %v643
    %v2150 = vunpack.c.l.b16 %v644
    %v2151 = vunpack.c.h.b16 %v644
    %v2152 = vunpack.c.l.b16 %v645
    %v2153 = vunpack.c.h.b16 %v645
    %v2154 = vunpack.c.l.b16 %v646
    %v2155 = vunpack.c.h.b16 %v646
    %v2156 = vunpack.c.l.b16 %v647
    %v2157 = vunpack.c.h.b16 %v647
    %v2158 = vunpack.c.l.b16 %v648
    %v2159 = vunpack.c.h.b16 %v648
    %v2160 = vunpack.c.l.b16 %v649
    %v2161 = vunpack.c.h.b16 %v649
    %v2162 = vunpack.c.l.b16 %v650
    %v2163 = vunpack.c.h.b16 %v650
    %v2164 = vunpack.c.l.b16 %v651
    %v2165 = vunpack.c.h.b16 %v651
    %v2166 = vunpack.c.l.b16 %v652
    %v2167 = vunpack.c.h.b16 %v652
    %v2168 = vunpack.c.l.b16 %v653
    %v2169 = vunpack.c.h.b16 %v653
    %v2170 = vunpack.c.l.b16 %v654
    %v2171 = vunpack.c.h.b16 %v654
    %v2172 = vunpack.c.l.b16 %v655
    %v2173 = vunpack.c.h.b16 %v655
    %v2174 = vunpack.c.l.b16 %v656
    %v2175 = vunpack.c.h.b16 %v656
    %v2176 = vunpack.c.l.b16 %v657
    %v2177 = vunpack.c.h.b16 %v657
    %v2178 = vunpack.c.l.b16 %v658
    %v2179 = vunpack.c.h.b16 %v658
    %v2180 = vunpack.c.l.b16 %v659
    %v2181 = vunpack.c.h.b16 %v659
    %v2182 = vunpack.c.l.b16 %v660
    %v2183 = vunpack.c.h.b16 %v660
    %v2184 = vunpack.c.l.b16 %v661
    %v2185 = vunpack.c.h.b16 %v661
    %v2186 = vunpack.c.l.b16 %v662
    %v2187 = vunpack.c.h.b16 %v662
    %v2188 = vunpack.c.l.b16 %v663
    %v2189 = vunpack.c.h.b16 %v663
    %v2190 = vunpack.c.l.b16 %v664
    %v2191 = vunpack.c.h.b16 %v664
    %v2192 = vunpack.c.l.b16 %v665
    %v2193 = vunpack.c.h.b16 %v665
    %v2194 = vunpack.c.l.b16 %v666
    %v2195 = vunpack.c.h.b16 %v666
    %v2196 = vunpack.c.l.b16 %v667
    %v2197 = vunpack.c.h.b16 %v667
    %v2198 = vunpack.c.l.b16 %v668
    %v2199 = vunpack.c.h.b16 %v668
    %v2200 = vunpack.c.l.b16 %v669
    %v2201 = vunpack.c.h.b16 %v669
    %v2202 = vunpack.c.l.b16 %v670
    %v2203 = vunpack.c.h.b16 %v670
    %v2204 = vunpack.c.l.b16 %v671
    %v2205 = vunpack.c.h.b16 %v671
    %v2206 = vunpack.c.l.b16 %v672
    %v2207 = vunpack.c.h.b16 %v672
    %v2208 = vunpack.c.l.b16 %v673
    %v2209 = vunpack.c.h.b16 %v673
    %v2210 = vunpack.c.l.b16 %v674
    %v2211 = vunpack.c.h.b16 %v674
    %v2212 = vunpack.c.l.b16 %v675
    %v2213 = vunpack.c.h.b16 %v675
    %v2214 = vunpack.c.l.b16 %v676
    %v2215 = vunpack.c.h.b16 %v676
    %v2216 = vunpack.c.l.b16 %v677
    %v2217 = vunpack.c.h.b16 %v677
    %v2218 = vunpack.c.l.b16 %v678
    %v2219 = vunpack.c.h.b16 %v678
    %v2220 = vunpack.c.l.b16 %v679
    %v2221 = vunpack.c.h.b16 %v679
    %v2222 = vunpack.c.l.b16 %v680
    %v2223 = vunpack.c.h.b16 %v680
    %v2224 = vunpack.c.l.b16 %v681
    %v2225 = vunpack.c.h.b16 %v681
    %v2226 = vunpack.c.l.b16 %v682
    %v2227 = vunpack.c.h.b16 %v682
    %v2228 = vunpack.c.l.b16 %v683
    %v2229 = vunpack.c.h.b16 %v683
    %v2230 = vunpack.c.l.b16 %v684
    %v2231 = vunpack.c.h.b16 %v684
    %v2232 = vunpack.c.l.b16 %v685
    %v2233 = vunpack.c.h.b16 %v685
    %v2234 = vunpack.c.l.b16 %v686
    %v2235 = vunpack.c.h.b16 %v686
    %v2236 = vunpack.c.l.b16 %v687
    %v2237 = vunpack.c.h.b16 %v687
    %v2238 = vunpack.c.l.b16 %v688
    %v2239 = vunpack.c.h.b16 %v688
    %v2240 = vunpack.c.l.b16 %v689
    %v2241 = vunpack.c.h.b16 %v689
    %v2242 = vunpack.c.l.b16 %v690
    %v2243 = vunpack.c.h.b16 %v690
    %v2244 = vunpack.c.l.b16 %v691
    %v2245 = vunpack.c.h.b16 %v691
    %v2246 = vunpack.c.l.b16 %v692
    %v2247 = vunpack.c.h.b16 %v692
    %v2248 = vunpack.c.l.b16 %v693
    %v2249 = vunpack.c.h.b16 %v693
    %v2250 = vunpack.c.l.b16 %v694
    %v2251 = vunpack.c.h.b16 %v694
    %v2252 = vunpack.c.l.b16 %v695
    %v2253 = vunpack.c.h.b16 %v695
    %v2254 = vpack.c.b16 %v1234, %v1230
    %v2255 = vpack.c.b16 %v1235, %v1231
    %v2256 = vpack.c.b16 %v1236, %v1232
    %v2257 = vpack.c.b16 %v1237, %v1233
    %v2258 = vpack.c.b16 %v1242, %v1238
    %v2259 = vpack.c.b16 %v1243, %v1239
    %v2260 = vpack.c.b16 %v1244, %v1240
    %v2261 = vpack.c.b16 %v1245, %v1241
    %v2262 = vpack.c.b16 %v1250, %v1246
    %v2263 = vpack.c.b16 %v1251, %v1247
    %v2264 = vpack.c.b16 %v1252, %v1248
    %v2265 = vpack.c.b16 %v1253, %v1249
    %v2266 = vpack.c.b16 %v1258, %v1254
    %v2267 = vpack.c.b16 %v1259, %v1255
    %v2268 = vpack.c.b16 %v1260, %v1256
    %v2269 = vpack.c.b16 %v1261, %v1257
    %v2270 = vpack.c.b16 %v1266, %v1262
    %v2271 = vpack.c.b16 %v1267, %v1263
    %v2272 = vpack.c.b16 %v1268, %v1264
    %v2273 = vpack.c.b16 %v1269, %v1265
    %v2274 = vpack.c.b16 %v1274, %v1270
    %v2275 = vpack.c.b16 %v1275, %v1271
    %v2276 = vpack.c.b16 %v1276, %v1272
    %v2277 = vpack.c.b16 %v1277, %v1273
    %v2278 = vpack.c.b16 %v1282, %v1278
    %v2279 = vpack.c.b16 %v1283, %v1279
    %v2280 = vpack.c.b16 %v1284, %v1280
    %v2281 = vpack.c.b16 %v1285, %v1281
    %v2282 = vpack.c.b16 %v1290, %v1286
    %v2283 = vpack.c.b16 %v1291, %v1287
    %v2284 = vpack.c.b16 %v1292, %v1288
    %v2285 = vpack.c.b16 %v1293, %v1289
    %v2286 = vpack.c.b16 %v1298, %v1294
    %v2287 = vpack.c.b16 %v1299, %v1295
    %v2288 = vpack.c.b16 %v1300, %v1296
    %v2289 = vpack.c.b16 %v1301, %v1297
    %v2290 = vpack.c.b16 %v1306, %v1302
    %v2291 = vpack.c.b16 %v1307, %v1303
    %v2292 = vpack.c.b16 %v1308, %v1304
    %v2293 = vpack.c.b16 %v1309, %v1305
    %v2294 = vpack.c.b16 %v1314, %v1310
    %v2295 = vpack.c.b16 %v1315, %v1311
    %v2296 = vpack.c.b16 %v1316, %v1312
    %v2297 = vpack.c.b16 %v1317, %v1313
    %v2298 = vpack.c.b16 %v1322, %v1318
    %v2299 = vpack.c.b16 %v1323, %v1319
    %v2300 = vpack.c.b16 %v1324, %v1320
    %v2301 = vpack.c.b16 %v1325, %v1321
    %v2302 = vpack.c.b16 %v1330, %v1326
    %v2303 = vpack.c.b16 %v1331, %v1327
    %v2304 = vpack.c.b16 %v1332, %v1328
    %v2305 = vpack.c.b16 %v1333, %v1329
    %v2306 = vpack.c.b16 %v1338, %v1334
    %v2307 = vpack.c.b16 %v1339, %v1335
    %v2308 = vpack.c.b16 %v1340, %v1336
    %v2309 = vpack.c.b16 %v1341, %v1337
    %v2310 = vpack.c.b16 %v1346, %v1342
    %v2311 = vpack.c.b16 %v1347, %v1343
    %v2312 = vpack.c.b16 %v1348, %v1344
    %v2313 = vpack.c.b16 %v1349, %v1345
    %v2314 = vpack.c.b16 %v1354, %v1350
    %v2315 = vpack.c.b16 %v1355, %v1351
    %v2316 = vpack.c.b16 %v1356, %v1352
    %v2317 = vpack.c.b16 %v1357, %v1353
    %v2318 = vpack.c.b16 %v1362, %v1358
    %v2319 = vpack.c.b16 %v1363, %v1359
    %v2320 = vpack.c.b16 %v1364, %v1360
    %v2321 = vpack.c.b16 %v1365, %v1361
    %v2322 = vpack.c.b16 %v1370, %v1366
    %v2323 = vpack.c.b16 %v1371, %v1367
    %v2324 = vpack.c.b16 %v1372, %v1368
    %v2325 = vpack.c.b16 %v1373, %v1369
    %v2326 = vpack.c.b16 %v1378, %v1374
    %v2327 = vpack.c.b16 %v1379, %v1375
    %v2328 = vpack.c.b16 %v1380, %v1376
    %v2329 = vpack.c.b16 %v1381, %v1377
    %v2330 = vpack.c.b16 %v1386, %v1382
    %v2331 = vpack.c.b16 %v1387, %v1383
    %v2332 = vpack.c.b16 %v1388, %v1384
    %v2333 = vpack.c.b16 %v1389, %v1385
    %v2334 = vpack.c.b16 %v1394, %v1390
    %v2335 = vpack.c.b16 %v1395, %v1391
    %v2336 = vpack.c.b16 %v1396, %v1392
    %v2337 = vpack.c.b16 %v1397, %v1393
    %v2338 = vpack.c.b16 %v1402, %v1398
    %v2339 = vpack.c.b16 %v1403, %v1399
    %v2340 = vpack.c.b16 %v1404, %v1400
    %v2341 = vpack.c.b16 %v1405, %v1401
    %v2342 = vpack.c.b16 %v1410, %v1406
    %v2343 = vpack.c.b16 %v1411, %v1407
    %v2344 = vpack.c.b16 %v1412, %v1408
    %v2345 = vpack.c.b16 %v1413, %v1409
    %v2346 = vpack.c.b16 %v1418, %v1414
    %v2347 = vpack.c.b16 %v1419, %v1415
    %v2348 = vpack.c.b16 %v1420, %v1416
    %v2349 = vpack.c.b16 %v1421, %v1417
    %v2350 = vpack.c.b16 %v1426, %v1422
    %v2351 = vpack.c.b16 %v1427, %v1423
    %v2352 = vpack.c.b16 %v1428, %v1424
    %v2353 = vpack.c.b16 %v1429, %v1425
    %v2354 = vpack.c.b16 %v1434, %v1430
    %v2355 = vpack.c.b16 %v1435, %v1431
    %v2356 = vpack.c.b16 %v1436, %v1432
    %v2357 = vpack.c.b16 %v1437, %v1433
    %v2358 = vpack.c.b16 %v1442, %v1438
    %v2359 = vpack.c.b16 %v1443, %v1439
    %v2360 = vpack.c.b16 %v1444, %v1440
    %v2361 = vpack.c.b16 %v1445, %v1441
    %v2362 = vpack.c.b16 %v1450, %v1446
    %v2363 = vpack.c.b16 %v1451, %v1447
    %v2364 = vpack.c.b16 %v1452, %v1448
    %v2365 = vpack.c.b16 %v1453, %v1449
    %v2366 = vpack.c.b16 %v1458, %v1454
    %v2367 = vpack.c.b16 %v1459, %v1455
    %v2368 = vpack.c.b16 %v1460, %v1456
    %v2369 = vpack.c.b16 %v1461, %v1457
    %v2370 = vpack.c.b16 %v1466, %v1462
    %v2371 = vpack.c.b16 %v1467, %v1463
    %v2372 = vpack.c.b16 %v1468, %v1464
    %v2373 = vpack.c.b16 %v1469, %v1465
    %v2374 = vpack.c.b16 %v1474, %v1470
    %v2375 = vpack.c.b16 %v1475, %v1471
    %v2376 = vpack.c.b16 %v1476, %v1472
    %v2377 = vpack.c.b16 %v1477, %v1473
    %v2378 = vpack.c.b16 %v1482, %v1478
    %v2379 = vpack.c.b16 %v1483, %v1479
    %v2380 = vpack.c.b16 %v1484, %v1480
    %v2381 = vpack.c.b16 %v1485, %v1481
    %v2382 = vpack.c.b16 %v1490, %v1486
    %v2383 = vpack.c.b16 %v1491, %v1487
    %v2384 = vpack.c.b16 %v1492, %v1488
    %v2385 = vpack.c.b16 %v1493, %v1489
    %v2386 = vpack.c.b16 %v1498, %v1494
    %v2387 = vpack.c.b16 %v1499, %v1495
    %v2388 = vpack.c.b16 %v1500, %v1496
    %v2389 = vpack.c.b16 %v1501, %v1497
    %v2390 = vpack.c.b16 %v1506, %v1502
    %v2391 = vpack.c.b16 %v1507, %v1503
    %v2392 = vpack.c.b16 %v1508, %v1504
    %v2393 = vpack.c.b16 %v1509, %v1505
    %v2394 = vpack.c.b16 %v1514, %v1510
    %v2395 = vpack.c.b16 %v1515, %v1511
    %v2396 = vpack.c.b16 %v1516, %v1512
    %v2397 = vpack.c.b16 %v1517, %v1513
    %v2398 = vpack.c.b16 %v1522, %v1518
    %v2399 = vpack.c.b16 %v1523, %v1519
    %v2400 = vpack.c.b16 %v1524, %v1520
    %v2401 = vpack.c.b16 %v1525, %v1521
    %v2402 = vpack.c.b16 %v1530, %v1526
    %v2403 = vpack.c.b16 %v1531, %v1527
    %v2404 = vpack.c.b16 %v1532, %v1528
    %v2405 = vpack.c.b16 %v1533, %v1529
    %v2406 = vpack.c.b16 %v1538, %v1534
    %v2407 = vpack.c.b16 %v1539, %v1535
    %v2408 = vpack.c.b16 %v1540, %v1536
    %v2409 = vpack.c.b16 %v1541, %v1537
    %v2410 = vpack.c.b16 %v1546, %v1542
    %v2411 = vpack.c.b16 %v1547, %v1543
    %v2412 = vpack.c.b16 %v1548, %v1544
    %v2413 = vpack.c.b16 %v1549, %v1545
    %v2414 = vpack.c.b16 %v1554, %v1550
    %v2415 = vpack.c.b16 %v1555, %v1551
    %v2416 = vpack.c.b16 %v1556, %v1552
    %v2417 = vpack.c.b16 %v1557, %v1553
    %v2418 = vpack.c.b16 %v1562, %v1558
    %v2419 = vpack.c.b16 %v1563, %v1559
    %v2420 = vpack.c.b16 %v1564, %v1560
    %v2421 = vpack.c.b16 %v1565, %v1561
    %v2422 = vpack.c.b16 %v1570, %v1566
    %v2423 = vpack.c.b16 %v1571, %v1567
    %v2424 = vpack.c.b16 %v1572, %v1568
    %v2425 = vpack.c.b16 %v1573, %v1569
    %v2426 = vpack.c.b16 %v1578, %v1574
    %v2427 = vpack.c.b16 %v1579, %v1575
    %v2428 = vpack.c.b16 %v1580, %v1576
    %v2429 = vpack.c.b16 %v1581, %v1577
    %v2430 = vpack.c.b16 %v1586, %v1582
    %v2431 = vpack.c.b16 %v1587, %v1583
    %v2432 = vpack.c.b16 %v1588, %v1584
    %v2433 = vpack.c.b16 %v1589, %v1585
    %v2434 = vpack.c.b16 %v1594, %v1590
    %v2435 = vpack.c.b16 %v1595, %v1591
    %v2436 = vpack.c.b16 %v1596, %v1592
    %v2437 = vpack.c.b16 %v1597, %v1593
    %v2438 = vpack.c.b16 %v1602, %v1598
    %v2439 = vpack.c.b16 %v1603, %v1599
    %v2440 = vpack.c.b16 %v1604, %v1600
    %v2441 = vpack.c.b16 %v1605, %v1601
    %v2442 = vpack.c.b16 %v1610, %v1606
    %v2443 = vpack.c.b16 %v1611, %v1607
    %v2444 = vpack.c.b16 %v1612, %v1608
    %v2445 = vpack.c.b16 %v1613, %v1609
    %v2446 = vpack.c.b16 %v1618, %v1614
    %v2447 = vpack.c.b16 %v1619, %v1615
    %v2448 = vpack.c.b16 %v1620, %v1616
    %v2449 = vpack.c.b16 %v1621, %v1617
    %v2450 = vpack.c.b16 %v1626, %v1622
    %v2451 = vpack.c.b16 %v1627, %v1623
    %v2452 = vpack.c.b16 %v1628, %v1624
    %v2453 = vpack.c.b16 %v1629, %v1625
    %v2454 = vpack.c.b16 %v1634, %v1630
    %v2455 = vpack.c.b16 %v1635, %v1631
    %v2456 = vpack.c.b16 %v1636, %v1632
    %v2457 = vpack.c.b16 %v1637, %v1633
    %v2458 = vpack.c.b16 %v1642, %v1638
    %v2459 = vpack.c.b16 %v1643, %v1639
    %v2460 = vpack.c.b16 %v1644, %v1640
    %v2461 = vpack.c.b16 %v1645, %v1641
    %v2462 = vpack.c.b16 %v1650, %v1646
    %v2463 = vpack.c.b16 %v1651, %v1647
    %v2464 = vpack.c.b16 %v1652, %v1648
    %v2465 = vpack.c.b16 %v1653, %v1649
    %v2466 = vpack.c.b16 %v1658, %v1654
    %v2467 = vpack.c.b16 %v1659, %v1655
    %v2468 = vpack.c.b16 %v1660, %v1656
    %v2469 = vpack.c.b16 %v1661, %v1657
    %v2470 = vpack.c.b16 %v1666, %v1662
    %v2471 = vpack.c.b16 %v1667, %v1663
    %v2472 = vpack.c.b16 %v1668, %v1664
    %v2473 = vpack.c.b16 %v1669, %v1665
    %v2474 = vpack.c.b16 %v1674, %v1670
    %v2475 = vpack.c.b16 %v1675, %v1671
    %v2476 = vpack.c.b16 %v1676, %v1672
    %v2477 = vpack.c.b16 %v1677, %v1673
    %v2478 = vpack.c.b16 %v1682, %v1678
    %v2479 = vpack.c.b16 %v1683, %v1679
    %v2480 = vpack.c.b16 %v1684, %v1680
    %v2481 = vpack.c.b16 %v1685, %v1681
    %v2482 = vpack.c.b16 %v1690, %v1686
    %v2483 = vpack.c.b16 %v1691, %v1687
    %v2484 = vpack.c.b16 %v1692, %v1688
    %v2485 = vpack.c.b16 %v1693, %v1689
    %v2486 = vpack.c.b16 %v1698, %v1694
    %v2487 = vpack.c.b16 %v1699, %v1695
    %v2488 = vpack.c.b16 %v1700, %v1696
    %v2489 = vpack.c.b16 %v1701, %v1697
    %v2490 = vpack.c.b16 %v1706, %v1702
    %v2491 = vpack.c.b16 %v1707, %v1703
    %v2492 = vpack.c.b16 %v1708, %v1704
    %v2493 = vpack.c.b16 %v1709, %v1705
    %v2494 = vpack.c.b16 %v1714, %v1710
    %v2495 = vpack.c.b16 %v1715, %v1711
    %v2496 = vpack.c.b16 %v1716, %v1712
    %v2497 = vpack.c.b16 %v1717, %v1713
    %v2498 = vpack.c.b16 %v1722, %v1718
    %v2499 = vpack.c.b16 %v1723, %v1719
    %v2500 = vpack.c.b16 %v1724, %v1720
    %v2501 = vpack.c.b16 %v1725, %v1721
    %v2502 = vpack.c.b16 %v1730, %v1726
    %v2503 = vpack.c.b16 %v1731, %v1727
    %v2504 = vpack.c.b16 %v1732, %v1728
    %v2505 = vpack.c.b16 %v1733, %v1729
    %v2506 = vpack.c.b16 %v1738, %v1734
    %v2507 = vpack.c.b16 %v1739, %v1735
    %v2508 = vpack.c.b16 %v1740, %v1736
    %v2509 = vpack.c.b16 %v1741, %v1737
    %v2510 = vpack.c.b16 %v1746, %v1742
    %v2511 = vpack.c.b16 %v1747, %v1743
    %v2512 = vpack.c.b16 %v1748, %v1744
    %v2513 = vpack.c.b16 %v1749, %v1745
    %v2514 = vpack.c.b16 %v1754, %v1750
    %v2515 = vpack.c.b16 %v1755, %v1751
    %v2516 = vpack.c.b16 %v1756, %v1752
    %v2517 = vpack.c.b16 %v1757, %v1753
    %v2518 = vpack.c.b16 %v1762, %v1758
    %v2519 = vpack.c.b16 %v1763, %v1759
    %v2520 = vpack.c.b16 %v1764, %v1760
    %v2521 = vpack.c.b16 %v1765, %v1761
    %v2522 = vpack.c.b16 %v1770, %v1766
    %v2523 = vpack.c.b16 %v1771, %v1767
    %v2524 = vpack.c.b16 %v1772, %v1768
    %v2525 = vpack.c.b16 %v1773, %v1769
    %v2526 = vpack.c.b16 %v1778, %v1774
    %v2527 = vpack.c.b16 %v1779, %v1775
    %v2528 = vpack.c.b16 %v1780, %v1776
    %v2529 = vpack.c.b16 %v1781, %v1777
    %v2530 = vpack.c.b16 %v1786, %v1782
    %v2531 = vpack.c.b16 %v1787, %v1783
    %v2532 = vpack.c.b16 %v1788, %v1784
    %v2533 = vpack.c.b16 %v1789, %v1785
    %v2534 = vpack.c.b16 %v1794, %v1790
    %v2535 = vpack.c.b16 %v1795, %v1791
    %v2536 = vpack.c.b16 %v1796, %v1792
    %v2537 = vpack.c.b16 %v1797, %v1793
    %v2538 = vpack.c.b16 %v1802, %v1798
    %v2539 = vpack.c.b16 %v1803, %v1799
    %v2540 = vpack.c.b16 %v1804, %v1800
    %v2541 = vpack.c.b16 %v1805, %v1801
    %v2542 = vpack.c.b16 %v1810, %v1806
    %v2543 = vpack.c.b16 %v1811, %v1807
    %v2544 = vpack.c.b16 %v1812, %v1808
    %v2545 = vpack.c.b16 %v1813, %v1809
    %v2546 = vpack.c.b16 %v1818, %v1814
    %v2547 = vpack.c.b16 %v1819, %v1815
    %v2548 = vpack.c.b16 %v1820, %v1816
    %v2549 = vpack.c.b16 %v1821, %v1817
    %v2550 = vpack.c.b16 %v1826, %v1822
    %v2551 = vpack.c.b16 %v1827, %v1823
    %v2552 = vpack.c.b16 %v1828, %v1824
    %v2553 = vpack.c.b16 %v1829, %v1825
    %v2554 = vpack.c.b16 %v1834, %v1830
    %v2555 = vpack.c.b16 %v1835, %v1831
    %v2556 = vpack.c.b16 %v1836, %v1832
    %v2557 = vpack.c.b16 %v1837, %v1833
    %v2558 = vpack.c.b16 %v1842, %v1838
    %v2559 = vpack.c.b16 %v1843, %v1839
    %v2560 = vpack.c.b16 %v1844, %v1840
    %v2561 = vpack.c.b16 %v1845, %v1841
    %v2562 = vpack.c.b16 %v1850, %v1846
    %v2563 = vpack.c.b16 %v1851, %v1847
    %v2564 = vpack.c.b16 %v1852, %v1848
    %v2565 = vpack.c.b16 %v1853, %v1849
    %v2566 = vpack.c.b16 %v1858, %v1854
    %v2567 = vpack.c.b16 %v1859, %v1855
    %v2568 = vpack.c.b16 %v1860, %v1856
    %v2569 = vpack.c.b16 %v1861, %v1857
    %v2570 = vpack.c.b16 %v1866, %v1862
    %v2571 = vpack.c.b16 %v1867, %v1863
    %v2572 = vpack.c.b16 %v1868, %v1864
    %v2573 = vpack.c.b16 %v1869, %v1865
    %v2574 = vpack.c.b16 %v1874, %v1870
    %v2575 = vpack.c.b16 %v1875, %v1871
    %v2576 = vpack.c.b16 %v1876, %v1872
    %v2577 = vpack.c.b16 %v1877, %v1873
    %v2578 = vpack.c.b16 %v1882, %v1878
    %v2579 = vpack.c.b16 %v1883, %v1879
    %v2580 = vpack.c.b16 %v1884, %v1880
    %v2581 = vpack.c.b16 %v1885, %v1881
    %v2582 = vpack.c.b16 %v1890, %v1886
    %v2583 = vpack.c.b16 %v1891, %v1887
    %v2584 = vpack.c.b16 %v1892, %v1888
    %v2585 = vpack.c.b16 %v1893, %v1889
    %v2586 = vpack.c.b16 %v1898, %v1894
    %v2587 = vpack.c.b16 %v1899, %v1895
    %v2588 = vpack.c.b16 %v1900, %v1896
    %v2589 = vpack.c.b16 %v1901, %v1897
    %v2590 = vpack.c.b16 %v1906, %v1902
    %v2591 = vpack.c.b16 %v1907, %v1903
    %v2592 = vpack.c.b16 %v1908, %v1904
    %v2593 = vpack.c.b16 %v1909, %v1905
    %v2594 = vpack.c.b16 %v1914, %v1910
    %v2595 = vpack.c.b16 %v1915, %v1911
    %v2596 = vpack.c.b16 %v1916, %v1912
    %v2597 = vpack.c.b16 %v1917, %v1913
    %v2598 = vpack.c.b16 %v1922, %v1918
    %v2599 = vpack.c.b16 %v1923, %v1919
    %v2600 = vpack.c.b16 %v1924, %v1920
    %v2601 = vpack.c.b16 %v1925, %v1921
    %v2602 = vpack.c.b16 %v1930, %v1926
    %v2603 = vpack.c.b16 %v1931, %v1927
    %v2604 = vpack.c.b16 %v1932, %v1928
    %v2605 = vpack.c.b16 %v1933, %v1929
    %v2606 = vpack.c.b16 %v1938, %v1934
    %v2607 = vpack.c.b16 %v1939, %v1935
    %v2608 = vpack.c.b16 %v1940, %v1936
    %v2609 = vpack.c.b16 %v1941, %v1937
    %v2610 = vpack.c.b16 %v1946, %v1942
    %v2611 = vpack.c.b16 %v1947, %v1943
    %v2612 = vpack.c.b16 %v1948, %v1944
    %v2613 = vpack.c.b16 %v1949, %v1945
    %v2614 = vpack.c.b16 %v1954, %v1950
    %v2615 = vpack.c.b16 %v1955, %v1951
    %v2616 = vpack.c.b16 %v1956, %v1952
    %v2617 = vpack.c.b16 %v1957, %v1953
    %v2618 = vpack.c.b16 %v1962, %v1958
    %v2619 = vpack.c.b16 %v1963, %v1959
    %v2620 = vpack.c.b16 %v1964, %v1960
    %v2621 = vpack.c.b16 %v1965, %v1961
    %v2622 = vpack.c.b16 %v1970, %v1966
    %v2623 = vpack.c.b16 %v1971, %v1967
    %v2624 = vpack.c.b16 %v1972, %v1968
    %v2625 = vpack.c.b16 %v1973, %v1969
    %v2626 = vpack.c.b16 %v1978, %v1974
    %v2627 = vpack.c.b16 %v1979, %v1975
    %v2628 = vpack.c.b16 %v1980, %v1976
    %v2629 = vpack.c.b16 %v1981, %v1977
    %v2630 = vpack.c.b16 %v1986, %v1982
    %v2631 = vpack.c.b16 %v1987, %v1983
    %v2632 = vpack.c.b16 %v1988, %v1984
    %v2633 = vpack.c.b16 %v1989, %v1985
    %v2634 = vpack.c.b16 %v1994, %v1990
    %v2635 = vpack.c.b16 %v1995, %v1991
    %v2636 = vpack.c.b16 %v1996, %v1992
    %v2637 = vpack.c.b16 %v1997, %v1993
    %v2638 = vpack.c.b16 %v2002, %v1998
    %v2639 = vpack.c.b16 %v2003, %v1999
    %v2640 = vpack.c.b16 %v2004, %v2000
    %v2641 = vpack.c.b16 %v2005, %v2001
    %v2642 = vpack.c.b16 %v2010, %v2006
    %v2643 = vpack.c.b16 %v2011, %v2007
    %v2644 = vpack.c.b16 %v2012, %v2008
    %v2645 = vpack.c.b16 %v2013, %v2009
    %v2646 = vpack.c.b16 %v2018, %v2014
    %v2647 = vpack.c.b16 %v2019, %v2015
    %v2648 = vpack.c.b16 %v2020, %v2016
    %v2649 = vpack.c.b16 %v2021, %v2017
    %v2650 = vpack.c.b16 %v2026, %v2022
    %v2651 = vpack.c.b16 %v2027, %v2023
    %v2652 = vpack.c.b16 %v2028, %v2024
    %v2653 = vpack.c.b16 %v2029, %v2025
    %v2654 = vpack.c.b16 %v2034, %v2030
    %v2655 = vpack.c.b16 %v2035, %v2031
    %v2656 = vpack.c.b16 %v2036, %v2032
    %v2657 = vpack.c.b16 %v2037, %v2033
    %v2658 = vpack.c.b16 %v2042, %v2038
    %v2659 = vpack.c.b16 %v2043, %v2039
    %v2660 = vpack.c.b16 %v2044, %v2040
    %v2661 = vpack.c.b16 %v2045, %v2041
    %v2662 = vpack.c.b16 %v2050, %v2046
    %v2663 = vpack.c.b16 %v2051, %v2047
    %v2664 = vpack.c.b16 %v2052, %v2048
    %v2665 = vpack.c.b16 %v2053, %v2049
    %v2666 = vpack.c.b16 %v2058, %v2054
    %v2667 = vpack.c.b16 %v2059, %v2055
    %v2668 = vpack.c.b16 %v2060, %v2056
    %v2669 = vpack.c.b16 %v2061, %v2057
    %v2670 = vpack.c.b16 %v2066, %v2062
    %v2671 = vpack.c.b16 %v2067, %v2063
    %v2672 = vpack.c.b16 %v2068, %v2064
    %v2673 = vpack.c.b16 %v2069, %v2065
    %v2674 = vpack.c.b16 %v2074, %v2070
    %v2675 = vpack.c.b16 %v2075, %v2071
    %v2676 = vpack.c.b16 %v2076, %v2072
    %v2677 = vpack.c.b16 %v2077, %v2073
    %v2678 = vpack.c.b16 %v2082, %v2078
    %v2679 = vpack.c.b16 %v2083, %v2079
    %v2680 = vpack.c.b16 %v2084, %v2080
    %v2681 = vpack.c.b16 %v2085, %v2081
    %v2682 = vpack.c.b16 %v2090, %v2086
    %v2683 = vpack.c.b16 %v2091, %v2087
    %v2684 = vpack.c.b16 %v2092, %v2088
    %v2685 = vpack.c.b16 %v2093, %v2089
    %v2686 = vpack.c.b16 %v2098, %v2094
    %v2687 = vpack.c.b16 %v2099, %v2095
    %v2688 = vpack.c.b16 %v2100, %v2096
    %v2689 = vpack.c.b16 %v2101, %v2097
    %v2690 = vpack.c.b16 %v2106, %v2102
    %v2691 = vpack.c.b16 %v2107, %v2103
    %v2692 = vpack.c.b16 %v2108, %v2104
    %v2693 = vpack.c.b16 %v2109, %v2105
    %v2694 = vpack.c.b16 %v2114, %v2110
    %v2695 = vpack.c.b16 %v2115, %v2111
    %v2696 = vpack.c.b16 %v2116, %v2112
    %v2697 = vpack.c.b16 %v2117, %v2113
    %v2698 = vpack.c.b16 %v2122, %v2118
    %v2699 = vpack.c.b16 %v2123, %v2119
    %v2700 = vpack.c.b16 %v2124, %v2120
    %v2701 = vpack.c.b16 %v2125, %v2121
    %v2702 = vpack.c.b16 %v2130, %v2126
    %v2703 = vpack.c.b16 %v2131, %v2127
    %v2704 = vpack.c.b16 %v2132, %v2128
    %v2705 = vpack.c.b16 %v2133, %v2129
    %v2706 = vpack.c.b16 %v2138, %v2134
    %v2707 = vpack.c.b16 %v2139, %v2135
    %v2708 = vpack.c.b16 %v2140, %v2136
    %v2709 = vpack.c.b16 %v2141, %v2137
    %v2710 = vpack.c.b16 %v2146, %v2142
    %v2711 = vpack.c.b16 %v2147, %v2143
    %v2712 = vpack.c.b16 %v2148, %v2144
    %v2713 = vpack.c.b16 %v2149, %v2145
    %v2714 = vpack.c.b16 %v2154, %v2150
    %v2715 = vpack.c.b16 %v2155, %v2151
    %v2716 = vpack.c.b16 %v2156, %v2152
    %v2717 = vpack.c.b16 %v2157, %v2153
    %v2718 = vpack.c.b16 %v2162, %v2158
    %v2719 = vpack.c.b16 %v2163, %v2159
    %v2720 = vpack.c.b16 %v2164, %v2160
    %v2721 = vpack.c.b16 %v2165, %v2161
    %v2722 = vpack.c.b16 %v2170, %v2166
    %v2723 = vpack.c.b16 %v2171, %v2167
    %v2724 = vpack.c.b16 %v2172, %v2168
    %v2725 = vpack.c.b16 %v2173, %v2169
    %v2726 = vpack.c.b16 %v2178, %v2174
    %v2727 = vpack.c.b16 %v2179, %v2175
    %v2728 = vpack.c.b16 %v2180, %v2176
    %v2729 = vpack.c.b16 %v2181, %v2177
    %v2730 = vpack.c.b16 %v2186, %v2182
    %v2731 = vpack.c.b16 %v2187, %v2183
    %v2732 = vpack.c.b16 %v2188, %v2184
    %v2733 = vpack.c.b16 %v2189, %v2185
    %v2734 = vpack.c.b16 %v2194, %v2190
    %v2735 = vpack.c.b16 %v2195, %v2191
    %v2736 = vpack.c.b16 %v2196, %v2192
    %v2737 = vpack.c.b16 %v2197, %v2193
    %v2738 = vpack.c.b16 %v2202, %v2198
    %v2739 = vpack.c.b16 %v2203, %v2199
    %v2740 = vpack.c.b16 %v2204, %v2200
    %v2741 = vpack.c.b16 %v2205, %v2201
    %v2742 = vpack.c.b16 %v2210, %v2206
    %v2743 = vpack.c.b16 %v2211, %v2207
    %v2744 = vpack.c.b16 %v2212, %v2208
    %v2745 = vpack.c.b16 %v2213, %v2209
    %v2746 = vpack.c.b16 %v2218, %v2214
    %v2747 = vpack.c.b16 %v2219, %v2215
    %v2748 = vpack.c.b16 %v2220, %v2216
    %v2749 = vpack.c.b16 %v2221, %v2217
    %v2750 = vpack.c.b16 %v2226, %v2222
    %v2751 = vpack.c.b16 %v2227, %v2223
    %v2752 = vpack.c.b16 %v2228, %v2224
    %v2753 = vpack.c.b16 %v2229, %v2225
    %v2754 = vpack.c.b16 %v2234, %v2230
    %v2755 = vpack.c.b16 %v2235, %v2231
    %v2756 = vpack.c.b16 %v2236, %v2232
    %v2757 = vpack.c.b16 %v2237, %v2233
    %v2758 = vpack.c.b16 %v2242, %v2238
    %v2759 = vpack.c.b16 %v2243, %v2239
    %v2760 = vpack.c.b16 %v2244, %v2240
    %v2761 = vpack.c.b16 %v2245, %v2241
    %v2762 = vpack.c.b16 %v2250, %v2246
    %v2763 = vpack.c.b16 %v2251, %v2247
    %v2764 = vpack.c.b16 %v2252, %v2248
    %v2765 = vpack.c.b16 %v2253, %v2249
    %3278 = vmatprep.subr.bf16.mxu0 %v2283
    %3279 = vmatpush1.bf16.msra.mxu0 %v2282
    %3280 = vmatprep.subr.bf16.mxu0 %v2279
    %3281 = vmatpush1.bf16.msra.mxu0 %v2278
    %3282 = vmatprep.subr.bf16.mxu0 %v2275
    %3283 = vmatpush1.bf16.msra.mxu0 %v2274
    %3284 = vmatprep.subr.bf16.mxu0 %v2271
    %3285 = vmatpush1.bf16.msra.mxu0 %v2270
    %3286 = vmatprep.subr.bf16.mxu0 %v2267
    %3287 = vmatpush1.bf16.msra.mxu0 %v2266
    %3288 = vmatprep.subr.bf16.mxu0 %v2263
    %3289 = vmatpush1.bf16.msra.mxu0 %v2262
    %3290 = vmatprep.subr.bf16.mxu0 %v2259
    %3291 = vmatpush1.bf16.msra.mxu0 %v2258
    %3292 = vmatprep.subr.bf16.mxu0 %v2255
    %3293 = vmatpush1.bf16.msra.mxu0 %v2254
    %3294 = vmatprep.subr.bf16.mxu0 %v2315
    %3295 = vmatpush2.bf16.msra.mxu0 %v2314
    %3296 = vmatprep.subr.bf16.mxu0 %v2311
    %3297 = vmatpush2.bf16.msra.mxu0 %v2310
    %3298 = vmatprep.subr.bf16.mxu0 %v2307
    %3299 = vmatpush2.bf16.msra.mxu0 %v2306
    %3300 = vmatprep.subr.bf16.mxu0 %v2303
    %3301 = vmatpush2.bf16.msra.mxu0 %v2302
    %3302 = vmatprep.subr.bf16.mxu0 %v2299
    %3303 = vmatpush2.bf16.msra.mxu0 %v2298
    %3304 = vmatprep.subr.bf16.mxu0 %v2295
    %3305 = vmatpush2.bf16.msra.mxu0 %v2294
    %3306 = vmatprep.subr.bf16.mxu0 %v2291
    %3307 = vmatpush2.bf16.msra.mxu0 %v2290
    %3308 = vmatprep.subr.bf16.mxu0 %v2287
    %3309 = vmatpush2.bf16.msra.mxu0 %v2286
    %3310 = vmatprep.mubr.bf16.mxu0 %v169
    %3311 = vmatmul.mubr.bf16.gmra.mxu0 %v168
    %v3312 = vpop.f32.mrf.mxu0
    %v3313 = vadd.f32 %v701, %v3312
    %v3314 = vpop.f32.mrf.mxu0
    %v3315 = vadd.f32 %v705, %v3314
    %v3316 = vpop.f32.mrf.mxu0
    %v3317 = vadd.f32 %v701, %v3316
    %v3318 = vpop.f32.mrf.mxu0
    %v3319 = vadd.f32 %v705, %v3318
    %3320 = vdwg.mxu0
    %3321 = vmatprep.subr.bf16.mxu0 %v2347
    %3322 = vmatpush1.bf16.msra.mxu0 %v2346
    %3323 = vmatprep.subr.bf16.mxu0 %v2343
    %3324 = vmatpush1.bf16.msra.mxu0 %v2342
    %3325 = vmatprep.subr.bf16.mxu0 %v2339
    %3326 = vmatpush1.bf16.msra.mxu0 %v2338
    %3327 = vmatprep.subr.bf16.mxu0 %v2335
    %3328 = vmatpush1.bf16.msra.mxu0 %v2334
    %3329 = vmatprep.subr.bf16.mxu0 %v2331
    %3330 = vmatpush1.bf16.msra.mxu0 %v2330
    %3331 = vmatprep.subr.bf16.mxu0 %v2327
    %3332 = vmatpush1.bf16.msra.mxu0 %v2326
    %3333 = vmatprep.subr.bf16.mxu0 %v2323
    %3334 = vmatpush1.bf16.msra.mxu0 %v2322
    %3335 = vmatprep.subr.bf16.mxu0 %v2319
    %3336 = vmatpush1.bf16.msra.mxu0 %v2318
    %3337 = vmatprep.subr.bf16.mxu0 %v2379
    %3338 = vmatpush2.bf16.msra.mxu0 %v2378
    %3339 = vmatprep.subr.bf16.mxu0 %v2375
    %3340 = vmatpush2.bf16.msra.mxu0 %v2374
    %3341 = vmatprep.subr.bf16.mxu0 %v2371
    %3342 = vmatpush2.bf16.msra.mxu0 %v2370
    %3343 = vmatprep.subr.bf16.mxu0 %v2367
    %3344 = vmatpush2.bf16.msra.mxu0 %v2366
    %3345 = vmatprep.subr.bf16.mxu0 %v2363
    %3346 = vmatpush2.bf16.msra.mxu0 %v2362
    %3347 = vmatprep.subr.bf16.mxu0 %v2359
    %3348 = vmatpush2.bf16.msra.mxu0 %v2358
    %3349 = vmatprep.subr.bf16.mxu0 %v2355
    %3350 = vmatpush2.bf16.msra.mxu0 %v2354
    %3351 = vmatprep.subr.bf16.mxu0 %v2351
    %3352 = vmatpush2.bf16.msra.mxu0 %v2350
    %3353 = vmatprep.mubr.bf16.mxu0 %v171
    %3354 = vmatmul.mubr.bf16.gmra.mxu0 %v170
    %v3355 = vpop.f32.mrf.mxu0
    %v3356 = vadd.f32 %v3313, %v3355
    %v3357 = vpop.f32.mrf.mxu0
    %v3358 = vadd.f32 %v3315, %v3357
    %v3359 = vpop.f32.mrf.mxu0
    %v3360 = vadd.f32 %v3317, %v3359
    %v3361 = vpop.f32.mrf.mxu0
    %v3362 = vadd.f32 %v3319, %v3361
    %3363 = vdwg.mxu0
    %3364 = vmatprep.subr.bf16.mxu0 %v2411
    %3365 = vmatpush1.bf16.msra.mxu0 %v2410
    %3366 = vmatprep.subr.bf16.mxu0 %v2407
    %3367 = vmatpush1.bf16.msra.mxu0 %v2406
    %3368 = vmatprep.subr.bf16.mxu0 %v2403
    %3369 = vmatpush1.bf16.msra.mxu0 %v2402
    %3370 = vmatprep.subr.bf16.mxu0 %v2399
    %3371 = vmatpush1.bf16.msra.mxu0 %v2398
    %3372 = vmatprep.subr.bf16.mxu0 %v2395
    %3373 = vmatpush1.bf16.msra.mxu0 %v2394
    %3374 = vmatprep.subr.bf16.mxu0 %v2391
    %3375 = vmatpush1.bf16.msra.mxu0 %v2390
    %3376 = vmatprep.subr.bf16.mxu0 %v2387
    %3377 = vmatpush1.bf16.msra.mxu0 %v2386
    %3378 = vmatprep.subr.bf16.mxu0 %v2383
    %3379 = vmatpush1.bf16.msra.mxu0 %v2382
    %3380 = vmatprep.subr.bf16.mxu0 %v2443
    %3381 = vmatpush2.bf16.msra.mxu0 %v2442
    %3382 = vmatprep.subr.bf16.mxu0 %v2439
    %3383 = vmatpush2.bf16.msra.mxu0 %v2438
    %3384 = vmatprep.subr.bf16.mxu0 %v2435
    %3385 = vmatpush2.bf16.msra.mxu0 %v2434
    %3386 = vmatprep.subr.bf16.mxu0 %v2431
    %3387 = vmatpush2.bf16.msra.mxu0 %v2430
    %3388 = vmatprep.subr.bf16.mxu0 %v2427
    %3389 = vmatpush2.bf16.msra.mxu0 %v2426
    %3390 = vmatprep.subr.bf16.mxu0 %v2423
    %3391 = vmatpush2.bf16.msra.mxu0 %v2422
    %3392 = vmatprep.subr.bf16.mxu0 %v2419
    %3393 = vmatpush2.bf16.msra.mxu0 %v2418
    %3394 = vmatprep.subr.bf16.mxu0 %v2415
    %3395 = vmatpush2.bf16.msra.mxu0 %v2414
    %3396 = vmatprep.mubr.bf16.mxu0 %v173
    %3397 = vmatmul.mubr.bf16.gmra.mxu0 %v172
    %v3398 = vpop.f32.mrf.mxu0
    %v3399 = vadd.f32 %v3356, %v3398
    %v3400 = vpop.f32.mrf.mxu0
    %v3401 = vadd.f32 %v3358, %v3400
    %v3402 = vpop.f32.mrf.mxu0
    %v3403 = vadd.f32 %v3360, %v3402
    %v3404 = vpop.f32.mrf.mxu0
    %v3405 = vadd.f32 %v3362, %v3404
    %3406 = vdwg.mxu0
    %3407 = vmatprep.subr.bf16.mxu0 %v2475
    %3408 = vmatpush1.bf16.msra.mxu0 %v2474
    %3409 = vmatprep.subr.bf16.mxu0 %v2471
    %3410 = vmatpush1.bf16.msra.mxu0 %v2470
    %3411 = vmatprep.subr.bf16.mxu0 %v2467
    %3412 = vmatpush1.bf16.msra.mxu0 %v2466
    %3413 = vmatprep.subr.bf16.mxu0 %v2463
    %3414 = vmatpush1.bf16.msra.mxu0 %v2462
    %3415 = vmatprep.subr.bf16.mxu0 %v2459
    %3416 = vmatpush1.bf16.msra.mxu0 %v2458
    %3417 = vmatprep.subr.bf16.mxu0 %v2455
    %3418 = vmatpush1.bf16.msra.mxu0 %v2454
    %3419 = vmatprep.subr.bf16.mxu0 %v2451
    %3420 = vmatpush1.bf16.msra.mxu0 %v2450
    %3421 = vmatprep.subr.bf16.mxu0 %v2447
    %3422 = vmatpush1.bf16.msra.mxu0 %v2446
    %3423 = vmatprep.subr.bf16.mxu0 %v2507
    %3424 = vmatpush2.bf16.msra.mxu0 %v2506
    %3425 = vmatprep.subr.bf16.mxu0 %v2503
    %3426 = vmatpush2.bf16.msra.mxu0 %v2502
    %3427 = vmatprep.subr.bf16.mxu0 %v2499
    %3428 = vmatpush2.bf16.msra.mxu0 %v2498
    %3429 = vmatprep.subr.bf16.mxu0 %v2495
    %3430 = vmatpush2.bf16.msra.mxu0 %v2494
    %3431 = vmatprep.subr.bf16.mxu0 %v2491
    %3432 = vmatpush2.bf16.msra.mxu0 %v2490
    %3433 = vmatprep.subr.bf16.mxu0 %v2487
    %3434 = vmatpush2.bf16.msra.mxu0 %v2486
    %3435 = vmatprep.subr.bf16.mxu0 %v2483
    %3436 = vmatpush2.bf16.msra.mxu0 %v2482
    %3437 = vmatprep.subr.bf16.mxu0 %v2479
    %3438 = vmatpush2.bf16.msra.mxu0 %v2478
    %3439 = vmatprep.mubr.bf16.mxu0 %v175
    %3440 = vmatmul.mubr.bf16.gmra.mxu0 %v174
    %v3441 = vpop.f32.mrf.mxu0
    %v3442 = vadd.f32 %v3399, %v3441
    %v3443 = vpop.f32.mrf.mxu0
    %v3444 = vadd.f32 %v3401, %v3443
    %v3445 = vpop.f32.mrf.mxu0
    %v3446 = vadd.f32 %v3403, %v3445
    %v3447 = vpop.f32.mrf.mxu0
    %v3448 = vadd.f32 %v3405, %v3447
    %3449 = vdwg.mxu0
    %3450 = vmatprep.subr.bf16.mxu0 %v2539
    %3451 = vmatpush1.bf16.msra.mxu0 %v2538
    %3452 = vmatprep.subr.bf16.mxu0 %v2535
    %3453 = vmatpush1.bf16.msra.mxu0 %v2534
    %3454 = vmatprep.subr.bf16.mxu0 %v2531
    %3455 = vmatpush1.bf16.msra.mxu0 %v2530
    %3456 = vmatprep.subr.bf16.mxu0 %v2527
    %3457 = vmatpush1.bf16.msra.mxu0 %v2526
    %3458 = vmatprep.subr.bf16.mxu0 %v2523
    %3459 = vmatpush1.bf16.msra.mxu0 %v2522
    %3460 = vmatprep.subr.bf16.mxu0 %v2519
    %3461 = vmatpush1.bf16.msra.mxu0 %v2518
    %3462 = vmatprep.subr.bf16.mxu0 %v2515
    %3463 = vmatpush1.bf16.msra.mxu0 %v2514
    %3464 = vmatprep.subr.bf16.mxu0 %v2511
    %3465 = vmatpush1.bf16.msra.mxu0 %v2510
    %3466 = vmatprep.subr.bf16.mxu0 %v2571
    %3467 = vmatpush2.bf16.msra.mxu0 %v2570
    %3468 = vmatprep.subr.bf16.mxu0 %v2567
    %3469 = vmatpush2.bf16.msra.mxu0 %v2566
    %3470 = vmatprep.subr.bf16.mxu0 %v2563
    %3471 = vmatpush2.bf16.msra.mxu0 %v2562
    %3472 = vmatprep.subr.bf16.mxu0 %v2559
    %3473 = vmatpush2.bf16.msra.mxu0 %v2558
    %3474 = vmatprep.subr.bf16.mxu0 %v2555
    %3475 = vmatpush2.bf16.msra.mxu0 %v2554
    %3476 = vmatprep.subr.bf16.mxu0 %v2551
    %3477 = vmatpush2.bf16.msra.mxu0 %v2550
    %3478 = vmatprep.subr.bf16.mxu0 %v2547
    %3479 = vmatpush2.bf16.msra.mxu0 %v2546
    %3480 = vmatprep.subr.bf16.mxu0 %v2543
    %3481 = vmatpush2.bf16.msra.mxu0 %v2542
    %3482 = vmatprep.mubr.bf16.mxu0 %v177
    %3483 = vmatmul.mubr.bf16.gmra.mxu0 %v176
    %v3484 = vpop.f32.mrf.mxu0
    %v3485 = vadd.f32 %v3442, %v3484
    %v3486 = vpop.f32.mrf.mxu0
    %v3487 = vadd.f32 %v3444, %v3486
    %v3488 = vpop.f32.mrf.mxu0
    %v3489 = vadd.f32 %v3446, %v3488
    %v3490 = vpop.f32.mrf.mxu0
    %v3491 = vadd.f32 %v3448, %v3490
    %3492 = vdwg.mxu0
    %3493 = vmatprep.subr.bf16.mxu0 %v2603
    %3494 = vmatpush1.bf16.msra.mxu0 %v2602
    %3495 = vmatprep.subr.bf16.mxu0 %v2599
    %3496 = vmatpush1.bf16.msra.mxu0 %v2598
    %3497 = vmatprep.subr.bf16.mxu0 %v2595
    %3498 = vmatpush1.bf16.msra.mxu0 %v2594
    %3499 = vmatprep.subr.bf16.mxu0 %v2591
    %3500 = vmatpush1.bf16.msra.mxu0 %v2590
    %3501 = vmatprep.subr.bf16.mxu0 %v2587
    %3502 = vmatpush1.bf16.msra.mxu0 %v2586
    %3503 = vmatprep.subr.bf16.mxu0 %v2583
    %3504 = vmatpush1.bf16.msra.mxu0 %v2582
    %3505 = vmatprep.subr.bf16.mxu0 %v2579
    %3506 = vmatpush1.bf16.msra.mxu0 %v2578
    %3507 = vmatprep.subr.bf16.mxu0 %v2575
    %3508 = vmatpush1.bf16.msra.mxu0 %v2574
    %3509 = vmatprep.subr.bf16.mxu0 %v2635
    %3510 = vmatpush2.bf16.msra.mxu0 %v2634
    %3511 = vmatprep.subr.bf16.mxu0 %v2631
    %3512 = vmatpush2.bf16.msra.mxu0 %v2630
    %3513 = vmatprep.subr.bf16.mxu0 %v2627
    %3514 = vmatpush2.bf16.msra.mxu0 %v2626
    %3515 = vmatprep.subr.bf16.mxu0 %v2623
    %3516 = vmatpush2.bf16.msra.mxu0 %v2622
    %3517 = vmatprep.subr.bf16.mxu0 %v2619
    %3518 = vmatpush2.bf16.msra.mxu0 %v2618
    %3519 = vmatprep.subr.bf16.mxu0 %v2615
    %3520 = vmatpush2.bf16.msra.mxu0 %v2614
    %3521 = vmatprep.subr.bf16.mxu0 %v2611
    %3522 = vmatpush2.bf16.msra.mxu0 %v2610
    %3523 = vmatprep.subr.bf16.mxu0 %v2607
    %3524 = vmatpush2.bf16.msra.mxu0 %v2606
    %3525 = vmatprep.mubr.bf16.mxu0 %v179
    %3526 = vmatmul.mubr.bf16.gmra.mxu0 %v178
    %v3527 = vpop.f32.mrf.mxu0
    %v3528 = vadd.f32 %v3485, %v3527
    %v3529 = vpop.f32.mrf.mxu0
    %v3530 = vadd.f32 %v3487, %v3529
    %v3531 = vpop.f32.mrf.mxu0
    %v3532 = vadd.f32 %v3489, %v3531
    %v3533 = vpop.f32.mrf.mxu0
    %v3534 = vadd.f32 %v3491, %v3533
    %3535 = vdwg.mxu0
    %3536 = vmatprep.subr.bf16.mxu0 %v2667
    %3537 = vmatpush1.bf16.msra.mxu0 %v2666
    %3538 = vmatprep.subr.bf16.mxu0 %v2663
    %3539 = vmatpush1.bf16.msra.mxu0 %v2662
    %3540 = vmatprep.subr.bf16.mxu0 %v2659
    %3541 = vmatpush1.bf16.msra.mxu0 %v2658
    %3542 = vmatprep.subr.bf16.mxu0 %v2655
    %3543 = vmatpush1.bf16.msra.mxu0 %v2654
    %3544 = vmatprep.subr.bf16.mxu0 %v2651
    %3545 = vmatpush1.bf16.msra.mxu0 %v2650
    %3546 = vmatprep.subr.bf16.mxu0 %v2647
    %3547 = vmatpush1.bf16.msra.mxu0 %v2646
    %3548 = vmatprep.subr.bf16.mxu0 %v2643
    %3549 = vmatpush1.bf16.msra.mxu0 %v2642
    %3550 = vmatprep.subr.bf16.mxu0 %v2639
    %3551 = vmatpush1.bf16.msra.mxu0 %v2638
    %3552 = vmatprep.subr.bf16.mxu0 %v2699
    %3553 = vmatpush2.bf16.msra.mxu0 %v2698
    %3554 = vmatprep.subr.bf16.mxu0 %v2695
    %3555 = vmatpush2.bf16.msra.mxu0 %v2694
    %3556 = vmatprep.subr.bf16.mxu0 %v2691
    %3557 = vmatpush2.bf16.msra.mxu0 %v2690
    %3558 = vmatprep.subr.bf16.mxu0 %v2687
    %3559 = vmatpush2.bf16.msra.mxu0 %v2686
    %3560 = vmatprep.subr.bf16.mxu0 %v2683
    %3561 = vmatpush2.bf16.msra.mxu0 %v2682
    %3562 = vmatprep.subr.bf16.mxu0 %v2679
    %3563 = vmatpush2.bf16.msra.mxu0 %v2678
    %3564 = vmatprep.subr.bf16.mxu0 %v2675
    %3565 = vmatpush2.bf16.msra.mxu0 %v2674
    %3566 = vmatprep.subr.bf16.mxu0 %v2671
    %3567 = vmatpush2.bf16.msra.mxu0 %v2670
    %3568 = vmatprep.mubr.bf16.mxu0 %v181
    %3569 = vmatmul.mubr.bf16.gmra.mxu0 %v180
    %v3570 = vpop.f32.mrf.mxu0
    %v3571 = vadd.f32 %v3528, %v3570
    %v3572 = vpop.f32.mrf.mxu0
    %v3573 = vadd.f32 %v3530, %v3572
    %v3574 = vpop.f32.mrf.mxu0
    %v3575 = vadd.f32 %v3532, %v3574
    %v3576 = vpop.f32.mrf.mxu0
    %v3577 = vadd.f32 %v3534, %v3576
    %3578 = vdwg.mxu0
    %3579 = vmatprep.subr.bf16.mxu0 %v2731
    %3580 = vmatpush1.bf16.msra.mxu0 %v2730
    %3581 = vmatprep.subr.bf16.mxu0 %v2727
    %3582 = vmatpush1.bf16.msra.mxu0 %v2726
    %3583 = vmatprep.subr.bf16.mxu0 %v2723
    %3584 = vmatpush1.bf16.msra.mxu0 %v2722
    %3585 = vmatprep.subr.bf16.mxu0 %v2719
    %3586 = vmatpush1.bf16.msra.mxu0 %v2718
    %3587 = vmatprep.subr.bf16.mxu0 %v2715
    %3588 = vmatpush1.bf16.msra.mxu0 %v2714
    %3589 = vmatprep.subr.bf16.mxu0 %v2711
    %3590 = vmatpush1.bf16.msra.mxu0 %v2710
    %3591 = vmatprep.subr.bf16.mxu0 %v2707
    %3592 = vmatpush1.bf16.msra.mxu0 %v2706
    %3593 = vmatprep.subr.bf16.mxu0 %v2703
    %3594 = vmatpush1.bf16.msra.mxu0 %v2702
    %3595 = vmatprep.subr.bf16.mxu0 %v2763
    %3596 = vmatpush2.bf16.msra.mxu0 %v2762
    %3597 = vmatprep.subr.bf16.mxu0 %v2759
    %3598 = vmatpush2.bf16.msra.mxu0 %v2758
    %3599 = vmatprep.subr.bf16.mxu0 %v2755
    %3600 = vmatpush2.bf16.msra.mxu0 %v2754
    %3601 = vmatprep.subr.bf16.mxu0 %v2751
    %3602 = vmatpush2.bf16.msra.mxu0 %v2750
    %3603 = vmatprep.subr.bf16.mxu0 %v2747
    %3604 = vmatpush2.bf16.msra.mxu0 %v2746
    %3605 = vmatprep.subr.bf16.mxu0 %v2743
    %3606 = vmatpush2.bf16.msra.mxu0 %v2742
    %3607 = vmatprep.subr.bf16.mxu0 %v2739
    %3608 = vmatpush2.bf16.msra.mxu0 %v2738
    %3609 = vmatprep.subr.bf16.mxu0 %v2735
    %3610 = vmatpush2.bf16.msra.mxu0 %v2734
    %3611 = vmatprep.mubr.bf16.mxu0 %v183
    %3612 = vmatmul.mubr.bf16.gmra.mxu0 %v182
    %v3613 = vpop.f32.mrf.mxu0
    %v3614 = vadd.f32 %v3571, %v3613
    %v3615 = vpop.f32.mrf.mxu0
    %v3616 = vadd.f32 %v3573, %v3615
    %v3617 = vpop.f32.mrf.mxu0
    %v3618 = vadd.f32 %v3575, %v3617
    %v3619 = vpop.f32.mrf.mxu0
    %v3620 = vadd.f32 %v3577, %v3619
    %3621 = vdwg.mxu0
    %3622 = vmatprep.subr.bf16.mxu0 %v2285
    %3623 = vmatpush1.bf16.msra.mxu0 %v2284
    %3624 = vmatprep.subr.bf16.mxu0 %v2281
    %3625 = vmatpush1.bf16.msra.mxu0 %v2280
    %3626 = vmatprep.subr.bf16.mxu0 %v2277
    %3627 = vmatpush1.bf16.msra.mxu0 %v2276
    %3628 = vmatprep.subr.bf16.mxu0 %v2273
    %3629 = vmatpush1.bf16.msra.mxu0 %v2272
    %3630 = vmatprep.subr.bf16.mxu0 %v2269
    %3631 = vmatpush1.bf16.msra.mxu0 %v2268
    %3632 = vmatprep.subr.bf16.mxu0 %v2265
    %3633 = vmatpush1.bf16.msra.mxu0 %v2264
    %3634 = vmatprep.subr.bf16.mxu0 %v2261
    %3635 = vmatpush1.bf16.msra.mxu0 %v2260
    %3636 = vmatprep.subr.bf16.mxu0 %v2257
    %3637 = vmatpush1.bf16.msra.mxu0 %v2256
    %3638 = vmatprep.subr.bf16.mxu0 %v2317
    %3639 = vmatpush2.bf16.msra.mxu0 %v2316
    %3640 = vmatprep.subr.bf16.mxu0 %v2313
    %3641 = vmatpush2.bf16.msra.mxu0 %v2312
    %3642 = vmatprep.subr.bf16.mxu0 %v2309
    %3643 = vmatpush2.bf16.msra.mxu0 %v2308
    %3644 = vmatprep.subr.bf16.mxu0 %v2305
    %3645 = vmatpush2.bf16.msra.mxu0 %v2304
    %3646 = vmatprep.subr.bf16.mxu0 %v2301
    %3647 = vmatpush2.bf16.msra.mxu0 %v2300
    %3648 = vmatprep.subr.bf16.mxu0 %v2297
    %3649 = vmatpush2.bf16.msra.mxu0 %v2296
    %3650 = vmatprep.subr.bf16.mxu0 %v2293
    %3651 = vmatpush2.bf16.msra.mxu0 %v2292
    %3652 = vmatprep.subr.bf16.mxu0 %v2289
    %3653 = vmatpush2.bf16.msra.mxu0 %v2288
    %3654 = vmatprep.mubr.bf16.mxu0 %v169
    %3655 = vmatmul.mubr.bf16.gmra.mxu0 %v168
    %v3656 = vpop.f32.mrf.mxu0
    %v3657 = vadd.f32 %v709, %v3656
    %v3658 = vpop.f32.mrf.mxu0
    %v3659 = vadd.f32 %v713, %v3658
    %v3660 = vpop.f32.mrf.mxu0
    %v3661 = vadd.f32 %v709, %v3660
    %v3662 = vpop.f32.mrf.mxu0
    %v3663 = vadd.f32 %v713, %v3662
    %3664 = vdwg.mxu0
    %3665 = vmatprep.subr.bf16.mxu0 %v2349
    %3666 = vmatpush1.bf16.msra.mxu0 %v2348
    %3667 = vmatprep.subr.bf16.mxu0 %v2345
    %3668 = vmatpush1.bf16.msra.mxu0 %v2344
    %3669 = vmatprep.subr.bf16.mxu0 %v2341
    %3670 = vmatpush1.bf16.msra.mxu0 %v2340
    %3671 = vmatprep.subr.bf16.mxu0 %v2337
    %3672 = vmatpush1.bf16.msra.mxu0 %v2336
    %3673 = vmatprep.subr.bf16.mxu0 %v2333
    %3674 = vmatpush1.bf16.msra.mxu0 %v2332
    %3675 = vmatprep.subr.bf16.mxu0 %v2329
    %3676 = vmatpush1.bf16.msra.mxu0 %v2328
    %3677 = vmatprep.subr.bf16.mxu0 %v2325
    %3678 = vmatpush1.bf16.msra.mxu0 %v2324
    %3679 = vmatprep.subr.bf16.mxu0 %v2321
    %3680 = vmatpush1.bf16.msra.mxu0 %v2320
    %3681 = vmatprep.subr.bf16.mxu0 %v2381
    %3682 = vmatpush2.bf16.msra.mxu0 %v2380
    %3683 = vmatprep.subr.bf16.mxu0 %v2377
    %3684 = vmatpush2.bf16.msra.mxu0 %v2376
    %3685 = vmatprep.subr.bf16.mxu0 %v2373
    %3686 = vmatpush2.bf16.msra.mxu0 %v2372
    %3687 = vmatprep.subr.bf16.mxu0 %v2369
    %3688 = vmatpush2.bf16.msra.mxu0 %v2368
    %3689 = vmatprep.subr.bf16.mxu0 %v2365
    %3690 = vmatpush2.bf16.msra.mxu0 %v2364
    %3691 = vmatprep.subr.bf16.mxu0 %v2361
    %3692 = vmatpush2.bf16.msra.mxu0 %v2360
    %3693 = vmatprep.subr.bf16.mxu0 %v2357
    %3694 = vmatpush2.bf16.msra.mxu0 %v2356
    %3695 = vmatprep.subr.bf16.mxu0 %v2353
    %3696 = vmatpush2.bf16.msra.mxu0 %v2352
    %3697 = vmatprep.mubr.bf16.mxu0 %v171
    %3698 = vmatmul.mubr.bf16.gmra.mxu0 %v170
    %v3699 = vpop.f32.mrf.mxu0
    %v3700 = vadd.f32 %v3657, %v3699
    %v3701 = vpop.f32.mrf.mxu0
    %v3702 = vadd.f32 %v3659, %v3701
    %v3703 = vpop.f32.mrf.mxu0
    %v3704 = vadd.f32 %v3661, %v3703
    %v3705 = vpop.f32.mrf.mxu0
    %v3706 = vadd.f32 %v3663, %v3705
    %3707 = vdwg.mxu0
    %3708 = vmatprep.subr.bf16.mxu0 %v2413
    %3709 = vmatpush1.bf16.msra.mxu0 %v2412
    %3710 = vmatprep.subr.bf16.mxu0 %v2409
    %3711 = vmatpush1.bf16.msra.mxu0 %v2408
    %3712 = vmatprep.subr.bf16.mxu0 %v2405
    %3713 = vmatpush1.bf16.msra.mxu0 %v2404
    %3714 = vmatprep.subr.bf16.mxu0 %v2401
    %3715 = vmatpush1.bf16.msra.mxu0 %v2400
    %3716 = vmatprep.subr.bf16.mxu0 %v2397
    %3717 = vmatpush1.bf16.msra.mxu0 %v2396
    %3718 = vmatprep.subr.bf16.mxu0 %v2393
    %3719 = vmatpush1.bf16.msra.mxu0 %v2392
    %3720 = vmatprep.subr.bf16.mxu0 %v2389
    %3721 = vmatpush1.bf16.msra.mxu0 %v2388
    %3722 = vmatprep.subr.bf16.mxu0 %v2385
    %3723 = vmatpush1.bf16.msra.mxu0 %v2384
    %3724 = vmatprep.subr.bf16.mxu0 %v2445
    %3725 = vmatpush2.bf16.msra.mxu0 %v2444
    %3726 = vmatprep.subr.bf16.mxu0 %v2441
    %3727 = vmatpush2.bf16.msra.mxu0 %v2440
    %3728 = vmatprep.subr.bf16.mxu0 %v2437
    %3729 = vmatpush2.bf16.msra.mxu0 %v2436
    %3730 = vmatprep.subr.bf16.mxu0 %v2433
    %3731 = vmatpush2.bf16.msra.mxu0 %v2432
    %3732 = vmatprep.subr.bf16.mxu0 %v2429
    %3733 = vmatpush2.bf16.msra.mxu0 %v2428
    %3734 = vmatprep.subr.bf16.mxu0 %v2425
    %3735 = vmatpush2.bf16.msra.mxu0 %v2424
    %3736 = vmatprep.subr.bf16.mxu0 %v2421
    %3737 = vmatpush2.bf16.msra.mxu0 %v2420
    %3738 = vmatprep.subr.bf16.mxu0 %v2417
    %3739 = vmatpush2.bf16.msra.mxu0 %v2416
    %3740 = vmatprep.mubr.bf16.mxu0 %v173
    %3741 = vmatmul.mubr.bf16.gmra.mxu0 %v172
    %v3742 = vpop.f32.mrf.mxu0
    %v3743 = vadd.f32 %v3700, %v3742
    %v3744 = vpop.f32.mrf.mxu0
    %v3745 = vadd.f32 %v3702, %v3744
    %v3746 = vpop.f32.mrf.mxu0
    %v3747 = vadd.f32 %v3704, %v3746
    %v3748 = vpop.f32.mrf.mxu0
    %v3749 = vadd.f32 %v3706, %v3748
    %3750 = vdwg.mxu0
    %3751 = vmatprep.subr.bf16.mxu0 %v2477
    %3752 = vmatpush1.bf16.msra.mxu0 %v2476
    %3753 = vmatprep.subr.bf16.mxu0 %v2473
    %3754 = vmatpush1.bf16.msra.mxu0 %v2472
    %3755 = vmatprep.subr.bf16.mxu0 %v2469
    %3756 = vmatpush1.bf16.msra.mxu0 %v2468
    %3757 = vmatprep.subr.bf16.mxu0 %v2465
    %3758 = vmatpush1.bf16.msra.mxu0 %v2464
    %3759 = vmatprep.subr.bf16.mxu0 %v2461
    %3760 = vmatpush1.bf16.msra.mxu0 %v2460
    %3761 = vmatprep.subr.bf16.mxu0 %v2457
    %3762 = vmatpush1.bf16.msra.mxu0 %v2456
    %3763 = vmatprep.subr.bf16.mxu0 %v2453
    %3764 = vmatpush1.bf16.msra.mxu0 %v2452
    %3765 = vmatprep.subr.bf16.mxu0 %v2449
    %3766 = vmatpush1.bf16.msra.mxu0 %v2448
    %3767 = vmatprep.subr.bf16.mxu0 %v2509
    %3768 = vmatpush2.bf16.msra.mxu0 %v2508
    %3769 = vmatprep.subr.bf16.mxu0 %v2505
    %3770 = vmatpush2.bf16.msra.mxu0 %v2504
    %3771 = vmatprep.subr.bf16.mxu0 %v2501
    %3772 = vmatpush2.bf16.msra.mxu0 %v2500
    %3773 = vmatprep.subr.bf16.mxu0 %v2497
    %3774 = vmatpush2.bf16.msra.mxu0 %v2496
    %3775 = vmatprep.subr.bf16.mxu0 %v2493
    %3776 = vmatpush2.bf16.msra.mxu0 %v2492
    %3777 = vmatprep.subr.bf16.mxu0 %v2489
    %3778 = vmatpush2.bf16.msra.mxu0 %v2488
    %3779 = vmatprep.subr.bf16.mxu0 %v2485
    %3780 = vmatpush2.bf16.msra.mxu0 %v2484
    %3781 = vmatprep.subr.bf16.mxu0 %v2481
    %3782 = vmatpush2.bf16.msra.mxu0 %v2480
    %3783 = vmatprep.mubr.bf16.mxu0 %v175
    %3784 = vmatmul.mubr.bf16.gmra.mxu0 %v174
    %v3785 = vpop.f32.mrf.mxu0
    %v3786 = vadd.f32 %v3743, %v3785
    %v3787 = vpop.f32.mrf.mxu0
    %v3788 = vadd.f32 %v3745, %v3787
    %v3789 = vpop.f32.mrf.mxu0
    %v3790 = vadd.f32 %v3747, %v3789
    %v3791 = vpop.f32.mrf.mxu0
    %v3792 = vadd.f32 %v3749, %v3791
    %3793 = vdwg.mxu0
    %3794 = vmatprep.subr.bf16.mxu0 %v2541
    %3795 = vmatpush1.bf16.msra.mxu0 %v2540
    %3796 = vmatprep.subr.bf16.mxu0 %v2537
    %3797 = vmatpush1.bf16.msra.mxu0 %v2536
    %3798 = vmatprep.subr.bf16.mxu0 %v2533
    %3799 = vmatpush1.bf16.msra.mxu0 %v2532
    %3800 = vmatprep.subr.bf16.mxu0 %v2529
    %3801 = vmatpush1.bf16.msra.mxu0 %v2528
    %3802 = vmatprep.subr.bf16.mxu0 %v2525
    %3803 = vmatpush1.bf16.msra.mxu0 %v2524
    %3804 = vmatprep.subr.bf16.mxu0 %v2521
    %3805 = vmatpush1.bf16.msra.mxu0 %v2520
    %3806 = vmatprep.subr.bf16.mxu0 %v2517
    %3807 = vmatpush1.bf16.msra.mxu0 %v2516
    %3808 = vmatprep.subr.bf16.mxu0 %v2513
    %3809 = vmatpush1.bf16.msra.mxu0 %v2512
    %3810 = vmatprep.subr.bf16.mxu0 %v2573
    %3811 = vmatpush2.bf16.msra.mxu0 %v2572
    %3812 = vmatprep.subr.bf16.mxu0 %v2569
    %3813 = vmatpush2.bf16.msra.mxu0 %v2568
    %3814 = vmatprep.subr.bf16.mxu0 %v2565
    %3815 = vmatpush2.bf16.msra.mxu0 %v2564
    %3816 = vmatprep.subr.bf16.mxu0 %v2561
    %3817 = vmatpush2.bf16.msra.mxu0 %v2560
    %3818 = vmatprep.subr.bf16.mxu0 %v2557
    %3819 = vmatpush2.bf16.msra.mxu0 %v2556
    %3820 = vmatprep.subr.bf16.mxu0 %v2553
    %3821 = vmatpush2.bf16.msra.mxu0 %v2552
    %3822 = vmatprep.subr.bf16.mxu0 %v2549
    %3823 = vmatpush2.bf16.msra.mxu0 %v2548
    %3824 = vmatprep.subr.bf16.mxu0 %v2545
    %3825 = vmatpush2.bf16.msra.mxu0 %v2544
    %3826 = vmatprep.mubr.bf16.mxu0 %v177
    %3827 = vmatmul.mubr.bf16.gmra.mxu0 %v176
    %v3828 = vpop.f32.mrf.mxu0
    %v3829 = vadd.f32 %v3786, %v3828
    %v3830 = vpop.f32.mrf.mxu0
    %v3831 = vadd.f32 %v3788, %v3830
    %v3832 = vpop.f32.mrf.mxu0
    %v3833 = vadd.f32 %v3790, %v3832
    %v3834 = vpop.f32.mrf.mxu0
    %v3835 = vadd.f32 %v3792, %v3834
    %3836 = vdwg.mxu0
    %3837 = vmatprep.subr.bf16.mxu0 %v2605
    %3838 = vmatpush1.bf16.msra.mxu0 %v2604
    %3839 = vmatprep.subr.bf16.mxu0 %v2601
    %3840 = vmatpush1.bf16.msra.mxu0 %v2600
    %3841 = vmatprep.subr.bf16.mxu0 %v2597
    %3842 = vmatpush1.bf16.msra.mxu0 %v2596
    %3843 = vmatprep.subr.bf16.mxu0 %v2593
    %3844 = vmatpush1.bf16.msra.mxu0 %v2592
    %3845 = vmatprep.subr.bf16.mxu0 %v2589
    %3846 = vmatpush1.bf16.msra.mxu0 %v2588
    %3847 = vmatprep.subr.bf16.mxu0 %v2585
    %3848 = vmatpush1.bf16.msra.mxu0 %v2584
    %3849 = vmatprep.subr.bf16.mxu0 %v2581
    %3850 = vmatpush1.bf16.msra.mxu0 %v2580
    %3851 = vmatprep.subr.bf16.mxu0 %v2577
    %3852 = vmatpush1.bf16.msra.mxu0 %v2576
    %3853 = vmatprep.subr.bf16.mxu0 %v2637
    %3854 = vmatpush2.bf16.msra.mxu0 %v2636
    %3855 = vmatprep.subr.bf16.mxu0 %v2633
    %3856 = vmatpush2.bf16.msra.mxu0 %v2632
    %3857 = vmatprep.subr.bf16.mxu0 %v2629
    %3858 = vmatpush2.bf16.msra.mxu0 %v2628
    %3859 = vmatprep.subr.bf16.mxu0 %v2625
    %3860 = vmatpush2.bf16.msra.mxu0 %v2624
    %3861 = vmatprep.subr.bf16.mxu0 %v2621
    %3862 = vmatpush2.bf16.msra.mxu0 %v2620
    %3863 = vmatprep.subr.bf16.mxu0 %v2617
    %3864 = vmatpush2.bf16.msra.mxu0 %v2616
    %3865 = vmatprep.subr.bf16.mxu0 %v2613
    %3866 = vmatpush2.bf16.msra.mxu0 %v2612
    %3867 = vmatprep.subr.bf16.mxu0 %v2609
    %3868 = vmatpush2.bf16.msra.mxu0 %v2608
    %3869 = vmatprep.mubr.bf16.mxu0 %v179
    %3870 = vmatmul.mubr.bf16.gmra.mxu0 %v178
    %v3871 = vpop.f32.mrf.mxu0
    %v3872 = vadd.f32 %v3829, %v3871
    %v3873 = vpop.f32.mrf.mxu0
    %v3874 = vadd.f32 %v3831, %v3873
    %v3875 = vpop.f32.mrf.mxu0
    %v3876 = vadd.f32 %v3833, %v3875
    %v3877 = vpop.f32.mrf.mxu0
    %v3878 = vadd.f32 %v3835, %v3877
    %3879 = vdwg.mxu0
    %3880 = vmatprep.subr.bf16.mxu0 %v2669
    %3881 = vmatpush1.bf16.msra.mxu0 %v2668
    %3882 = vmatprep.subr.bf16.mxu0 %v2665
    %3883 = vmatpush1.bf16.msra.mxu0 %v2664
    %3884 = vmatprep.subr.bf16.mxu0 %v2661
    %3885 = vmatpush1.bf16.msra.mxu0 %v2660
    %3886 = vmatprep.subr.bf16.mxu0 %v2657
    %3887 = vmatpush1.bf16.msra.mxu0 %v2656
    %3888 = vmatprep.subr.bf16.mxu0 %v2653
    %3889 = vmatpush1.bf16.msra.mxu0 %v2652
    %3890 = vmatprep.subr.bf16.mxu0 %v2649
    %3891 = vmatpush1.bf16.msra.mxu0 %v2648
    %3892 = vmatprep.subr.bf16.mxu0 %v2645
    %3893 = vmatpush1.bf16.msra.mxu0 %v2644
    %3894 = vmatprep.subr.bf16.mxu0 %v2641
    %3895 = vmatpush1.bf16.msra.mxu0 %v2640
    %3896 = vmatprep.subr.bf16.mxu0 %v2701
    %3897 = vmatpush2.bf16.msra.mxu0 %v2700
    %3898 = vmatprep.subr.bf16.mxu0 %v2697
    %3899 = vmatpush2.bf16.msra.mxu0 %v2696
    %3900 = vmatprep.subr.bf16.mxu0 %v2693
    %3901 = vmatpush2.bf16.msra.mxu0 %v2692
    %3902 = vmatprep.subr.bf16.mxu0 %v2689
    %3903 = vmatpush2.bf16.msra.mxu0 %v2688
    %3904 = vmatprep.subr.bf16.mxu0 %v2685
    %3905 = vmatpush2.bf16.msra.mxu0 %v2684
    %3906 = vmatprep.subr.bf16.mxu0 %v2681
    %3907 = vmatpush2.bf16.msra.mxu0 %v2680
    %3908 = vmatprep.subr.bf16.mxu0 %v2677
    %3909 = vmatpush2.bf16.msra.mxu0 %v2676
    %3910 = vmatprep.subr.bf16.mxu0 %v2673
    %3911 = vmatpush2.bf16.msra.mxu0 %v2672
    %3912 = vmatprep.mubr.bf16.mxu0 %v181
    %3913 = vmatmul.mubr.bf16.gmra.mxu0 %v180
    %v3914 = vpop.f32.mrf.mxu0
    %v3915 = vadd.f32 %v3872, %v3914
    %v3916 = vpop.f32.mrf.mxu0
    %v3917 = vadd.f32 %v3874, %v3916
    %v3918 = vpop.f32.mrf.mxu0
    %v3919 = vadd.f32 %v3876, %v3918
    %v3920 = vpop.f32.mrf.mxu0
    %v3921 = vadd.f32 %v3878, %v3920
    %3922 = vdwg.mxu0
    %3923 = vmatprep.subr.bf16.mxu0 %v2733
    %3924 = vmatpush1.bf16.msra.mxu0 %v2732
    %3925 = vmatprep.subr.bf16.mxu0 %v2729
    %3926 = vmatpush1.bf16.msra.mxu0 %v2728
    %3927 = vmatprep.subr.bf16.mxu0 %v2725
    %3928 = vmatpush1.bf16.msra.mxu0 %v2724
    %3929 = vmatprep.subr.bf16.mxu0 %v2721
    %3930 = vmatpush1.bf16.msra.mxu0 %v2720
    %3931 = vmatprep.subr.bf16.mxu0 %v2717
    %3932 = vmatpush1.bf16.msra.mxu0 %v2716
    %3933 = vmatprep.subr.bf16.mxu0 %v2713
    %3934 = vmatpush1.bf16.msra.mxu0 %v2712
    %3935 = vmatprep.subr.bf16.mxu0 %v2709
    %3936 = vmatpush1.bf16.msra.mxu0 %v2708
    %3937 = vmatprep.subr.bf16.mxu0 %v2705
    %3938 = vmatpush1.bf16.msra.mxu0 %v2704
    %3939 = vmatprep.subr.bf16.mxu0 %v2765
    %3940 = vmatpush2.bf16.msra.mxu0 %v2764
    %3941 = vmatprep.subr.bf16.mxu0 %v2761
    %3942 = vmatpush2.bf16.msra.mxu0 %v2760
    %3943 = vmatprep.subr.bf16.mxu0 %v2757
    %3944 = vmatpush2.bf16.msra.mxu0 %v2756
    %3945 = vmatprep.subr.bf16.mxu0 %v2753
    %3946 = vmatpush2.bf16.msra.mxu0 %v2752
    %3947 = vmatprep.subr.bf16.mxu0 %v2749
    %3948 = vmatpush2.bf16.msra.mxu0 %v2748
    %3949 = vmatprep.subr.bf16.mxu0 %v2745
    %3950 = vmatpush2.bf16.msra.mxu0 %v2744
    %3951 = vmatprep.subr.bf16.mxu0 %v2741
    %3952 = vmatpush2.bf16.msra.mxu0 %v2740
    %3953 = vmatprep.subr.bf16.mxu0 %v2737
    %3954 = vmatpush2.bf16.msra.mxu0 %v2736
    %3955 = vmatprep.mubr.bf16.mxu0 %v183
    %3956 = vmatmul.mubr.bf16.gmra.mxu0 %v182
    %v3957 = vpop.f32.mrf.mxu0
    %v3958 = vadd.f32 %v3915, %v3957
    %v3959 = vpop.f32.mrf.mxu0
    %v3960 = vadd.f32 %v3917, %v3959
    %v3961 = vpop.f32.mrf.mxu0
    %v3962 = vadd.f32 %v3919, %v3961
    %v3963 = vpop.f32.mrf.mxu0
    %v3964 = vadd.f32 %v3921, %v3963
    %3965 = vdwg.mxu0
    %v3966 = vmax.f32 %v3614, 0.0
    %v3967 = vmax.f32 %v3616, 0.0
    %v3968 = vmax.f32 %v3958, 0.0
    %v3969 = vmax.f32 %v3960, 0.0
    %v3970 = vmax.f32 %v3618, 0.0
    %v3971 = vmax.f32 %v3620, 0.0
    %v3972 = vmax.f32 %v3962, 0.0
    %v3973 = vmax.f32 %v3964, 0.0
    %v3974 = vpack.c.bf16 %v3970, %v3966
    %v3975 = vpack.c.bf16 %v3971, %v3967
    %v3976 = vpack.c.bf16 %v3972, %v3968
    %v3977 = vpack.c.bf16 %v3973, %v3969
    %v3978 = vld [vmem:[#allocation6] sm:$0xf]
    %v3979 = vld [vmem:[#allocation6 + $0x4] sm:$0xf]
    %v3980 = vld [vmem:[#allocation6 + $0x8] sm:$0xf]
    %v3981 = vld [vmem:[#allocation6 + $0xc] sm:$0xf]
    %v3982 = vld [vmem:[#allocation6 + $0x10] sm:$0xf]
    %v3983 = vld [vmem:[#allocation6 + $0x14] sm:$0xf]
    %v3984 = vld [vmem:[#allocation6 + $0x18] sm:$0xf]
    %v3985 = vld [vmem:[#allocation6 + $0x1c] sm:$0xf]
    %v3986 = vld [vmem:[#allocation6 + $0x20] sm:$0xf]
    %v3987 = vld [vmem:[#allocation6 + $0x24] sm:$0xf]
    %v3988 = vld [vmem:[#allocation6 + $0x28] sm:$0xf]
    %v3989 = vld [vmem:[#allocation6 + $0x2c] sm:$0xf]
    %v3990 = vld [vmem:[#allocation6 + $0x30] sm:$0xf]
    %v3991 = vld [vmem:[#allocation6 + $0x34] sm:$0xf]
    %v3992 = vld [vmem:[#allocation6 + $0x38] sm:$0xf]
    %v3993 = vld [vmem:[#allocation6 + $0x3c] sm:$0xf]
    %v3994 = vld [vmem:[#allocation6 + $0x40] sm:$0xf]
    %v3995 = vld [vmem:[#allocation6 + $0x44] sm:$0xf]
    %v3996 = vld [vmem:[#allocation6 + $0x48] sm:$0xf]
    %v3997 = vld [vmem:[#allocation6 + $0x4c] sm:$0xf]
    %v3998 = vld [vmem:[#allocation6 + $0x50] sm:$0xf]
    %v3999 = vld [vmem:[#allocation6 + $0x54] sm:$0xf]
    %v4000 = vld [vmem:[#allocation6 + $0x58] sm:$0xf]
    %v4001 = vld [vmem:[#allocation6 + $0x5c] sm:$0xf]
    %v4002 = vld [vmem:[#allocation6 + $0x60] sm:$0xf]
    %v4003 = vld [vmem:[#allocation6 + $0x64] sm:$0xf]
    %v4004 = vld [vmem:[#allocation6 + $0x68] sm:$0xf]
    %v4005 = vld [vmem:[#allocation6 + $0x6c] sm:$0xf]
    %v4006 = vld [vmem:[#allocation6 + $0x70] sm:$0xf]
    %v4007 = vld [vmem:[#allocation6 + $0x74] sm:$0xf]
    %v4008 = vld [vmem:[#allocation6 + $0x78] sm:$0xf]
    %v4009 = vld [vmem:[#allocation6 + $0x7c] sm:$0xf]
    %v4010 = vld [vmem:[#allocation6 + $0x80] sm:$0xf]
    %v4011 = vld [vmem:[#allocation6 + $0x84] sm:$0xf]
    %v4012 = vld [vmem:[#allocation6 + $0x88] sm:$0xf]
    %v4013 = vld [vmem:[#allocation6 + $0x8c] sm:$0xf]
    %v4014 = vld [vmem:[#allocation6 + $0x90] sm:$0xf]
    %v4015 = vld [vmem:[#allocation6 + $0x94] sm:$0xf]
    %v4016 = vld [vmem:[#allocation6 + $0x98] sm:$0xf]
    %v4017 = vld [vmem:[#allocation6 + $0x9c] sm:$0xf]
    %v4018 = vld [vmem:[#allocation6 + $0xa0] sm:$0xf]
    %v4019 = vld [vmem:[#allocation6 + $0xa4] sm:$0xf]
    %v4020 = vld [vmem:[#allocation6 + $0xa8] sm:$0xf]
    %v4021 = vld [vmem:[#allocation6 + $0xac] sm:$0xf]
    %v4022 = vld [vmem:[#allocation6 + $0xb0] sm:$0xf]
    %v4023 = vld [vmem:[#allocation6 + $0xb4] sm:$0xf]
    %v4024 = vld [vmem:[#allocation6 + $0xb8] sm:$0xf]
    %v4025 = vld [vmem:[#allocation6 + $0xbc] sm:$0xf]
    %v4026 = vld [vmem:[#allocation6 + $0xc0] sm:$0xf]
    %v4027 = vld [vmem:[#allocation6 + $0xc4] sm:$0xf]
    %v4028 = vld [vmem:[#allocation6 + $0xc8] sm:$0xf]
    %v4029 = vld [vmem:[#allocation6 + $0xcc] sm:$0xf]
    %v4030 = vld [vmem:[#allocation6 + $0xd0] sm:$0xf]
    %v4031 = vld [vmem:[#allocation6 + $0xd4] sm:$0xf]
    %v4032 = vld [vmem:[#allocation6 + $0xd8] sm:$0xf]
    %v4033 = vld [vmem:[#allocation6 + $0xdc] sm:$0xf]
    %v4034 = vld [vmem:[#allocation6 + $0xe0] sm:$0xf]
    %v4035 = vld [vmem:[#allocation6 + $0xe4] sm:$0xf]
    %v4036 = vld [vmem:[#allocation6 + $0xe8] sm:$0xf]
    %v4037 = vld [vmem:[#allocation6 + $0xec] sm:$0xf]
    %v4038 = vld [vmem:[#allocation6 + $0xf0] sm:$0xf]
    %v4039 = vld [vmem:[#allocation6 + $0xf4] sm:$0xf]
    %v4040 = vld [vmem:[#allocation6 + $0xf8] sm:$0xf]
    %v4041 = vld [vmem:[#allocation6 + $0xfc] sm:$0xf]
    %v4042 = vld [vmem:[#allocation7] sm:$0x1]
    %v4044 = vlaneseq
    %v4045 = vshrl.u32 %v4044, 7
    %v4046 = vsub.s32 0, %v4045
    %v4047 = vrot.slane %v4042, %v4046
    %v4113 = vunpack.c.l.b16 %v3978
    %v4114 = vunpack.c.l.b16 %v3979
    %v4115 = vunpack.c.l.b16 %v3980
    %v4116 = vunpack.c.l.b16 %v3981
    %v4117 = vunpack.c.l.b16 %v3982
    %v4118 = vunpack.c.l.b16 %v3983
    %v4119 = vunpack.c.l.b16 %v3984
    %v4120 = vunpack.c.l.b16 %v3985
    %v4121 = vunpack.c.l.b16 %v3986
    %v4122 = vunpack.c.l.b16 %v3987
    %v4123 = vunpack.c.l.b16 %v3988
    %v4124 = vunpack.c.l.b16 %v3989
    %v4125 = vunpack.c.l.b16 %v3990
    %v4126 = vunpack.c.l.b16 %v3991
    %v4127 = vunpack.c.l.b16 %v3992
    %v4128 = vunpack.c.l.b16 %v3993
    %v4129 = vunpack.c.l.b16 %v3994
    %v4130 = vunpack.c.l.b16 %v3995
    %v4131 = vunpack.c.l.b16 %v3996
    %v4132 = vunpack.c.l.b16 %v3997
    %v4133 = vunpack.c.l.b16 %v3998
    %v4134 = vunpack.c.l.b16 %v3999
    %v4135 = vunpack.c.l.b16 %v4000
    %v4136 = vunpack.c.l.b16 %v4001
    %v4137 = vunpack.c.l.b16 %v4002
    %v4138 = vunpack.c.l.b16 %v4003
    %v4139 = vunpack.c.l.b16 %v4004
    %v4140 = vunpack.c.l.b16 %v4005
    %v4141 = vunpack.c.l.b16 %v4006
    %v4142 = vunpack.c.l.b16 %v4007
    %v4143 = vunpack.c.l.b16 %v4008
    %v4144 = vunpack.c.l.b16 %v4009
    %v4145 = vunpack.c.l.b16 %v4010
    %v4146 = vunpack.c.l.b16 %v4011
    %v4147 = vunpack.c.l.b16 %v4012
    %v4148 = vunpack.c.l.b16 %v4013
    %v4149 = vunpack.c.l.b16 %v4014
    %v4150 = vunpack.c.l.b16 %v4015
    %v4151 = vunpack.c.l.b16 %v4016
    %v4152 = vunpack.c.l.b16 %v4017
    %v4153 = vunpack.c.l.b16 %v4018
    %v4154 = vunpack.c.l.b16 %v4019
    %v4155 = vunpack.c.l.b16 %v4020
    %v4156 = vunpack.c.l.b16 %v4021
    %v4157 = vunpack.c.l.b16 %v4022
    %v4158 = vunpack.c.l.b16 %v4023
    %v4159 = vunpack.c.l.b16 %v4024
    %v4160 = vunpack.c.l.b16 %v4025
    %v4161 = vunpack.c.l.b16 %v4026
    %v4162 = vunpack.c.l.b16 %v4027
    %v4163 = vunpack.c.l.b16 %v4028
    %v4164 = vunpack.c.l.b16 %v4029
    %v4165 = vunpack.c.l.b16 %v4030
    %v4166 = vunpack.c.l.b16 %v4031
    %v4167 = vunpack.c.l.b16 %v4032
    %v4168 = vunpack.c.l.b16 %v4033
    %v4169 = vunpack.c.l.b16 %v4034
    %v4170 = vunpack.c.l.b16 %v4035
    %v4171 = vunpack.c.l.b16 %v4036
    %v4172 = vunpack.c.l.b16 %v4037
    %v4173 = vunpack.c.l.b16 %v4038
    %v4174 = vunpack.c.l.b16 %v4039
    %v4175 = vunpack.c.l.b16 %v4040
    %v4176 = vunpack.c.l.b16 %v4041
    %v4177 = vpack.c.b16 %v4114, %v4113
    %v4178 = vpack.c.b16 %v4116, %v4115
    %v4179 = vpack.c.b16 %v4118, %v4117
    %v4180 = vpack.c.b16 %v4120, %v4119
    %v4181 = vpack.c.b16 %v4122, %v4121
    %v4182 = vpack.c.b16 %v4124, %v4123
    %v4183 = vpack.c.b16 %v4126, %v4125
    %v4184 = vpack.c.b16 %v4128, %v4127
    %v4185 = vpack.c.b16 %v4130, %v4129
    %v4186 = vpack.c.b16 %v4132, %v4131
    %v4187 = vpack.c.b16 %v4134, %v4133
    %v4188 = vpack.c.b16 %v4136, %v4135
    %v4189 = vpack.c.b16 %v4138, %v4137
    %v4190 = vpack.c.b16 %v4140, %v4139
    %v4191 = vpack.c.b16 %v4142, %v4141
    %v4192 = vpack.c.b16 %v4144, %v4143
    %v4193 = vpack.c.b16 %v4146, %v4145
    %v4194 = vpack.c.b16 %v4148, %v4147
    %v4195 = vpack.c.b16 %v4150, %v4149
    %v4196 = vpack.c.b16 %v4152, %v4151
    %v4197 = vpack.c.b16 %v4154, %v4153
    %v4198 = vpack.c.b16 %v4156, %v4155
    %v4199 = vpack.c.b16 %v4158, %v4157
    %v4200 = vpack.c.b16 %v4160, %v4159
    %v4201 = vpack.c.b16 %v4162, %v4161
    %v4202 = vpack.c.b16 %v4164, %v4163
    %v4203 = vpack.c.b16 %v4166, %v4165
    %v4204 = vpack.c.b16 %v4168, %v4167
    %v4205 = vpack.c.b16 %v4170, %v4169
    %v4206 = vpack.c.b16 %v4172, %v4171
    %v4207 = vpack.c.b16 %v4174, %v4173
    %v4208 = vpack.c.b16 %v4176, %v4175
    %4241 = vmatprep.subr.bf16.mxu0 0
    %4242 = vmatpush1.bf16.msra.mxu0 %v4184
    %4243 = vmatprep.subr.bf16.mxu0 0
    %4244 = vmatpush1.bf16.msra.mxu0 %v4183
    %4245 = vmatprep.subr.bf16.mxu0 0
    %4246 = vmatpush1.bf16.msra.mxu0 %v4182
    %4247 = vmatprep.subr.bf16.mxu0 0
    %4248 = vmatpush1.bf16.msra.mxu0 %v4181
    %4249 = vmatprep.subr.bf16.mxu0 0
    %4250 = vmatpush1.bf16.msra.mxu0 %v4180
    %4251 = vmatprep.subr.bf16.mxu0 0
    %4252 = vmatpush1.bf16.msra.mxu0 %v4179
    %4253 = vmatprep.subr.bf16.mxu0 0
    %4254 = vmatpush1.bf16.msra.mxu0 %v4178
    %4255 = vmatprep.subr.bf16.mxu0 0
    %4256 = vmatpush1.bf16.msra.mxu0 %v4177
    %4257 = vmatprep.subr.bf16.mxu0 0
    %4258 = vmatpush2.bf16.msra.mxu0 %v4192
    %4259 = vmatprep.subr.bf16.mxu0 0
    %4260 = vmatpush2.bf16.msra.mxu0 %v4191
    %4261 = vmatprep.subr.bf16.mxu0 0
    %4262 = vmatpush2.bf16.msra.mxu0 %v4190
    %4263 = vmatprep.subr.bf16.mxu0 0
    %4264 = vmatpush2.bf16.msra.mxu0 %v4189
    %4265 = vmatprep.subr.bf16.mxu0 0
    %4266 = vmatpush2.bf16.msra.mxu0 %v4188
    %4267 = vmatprep.subr.bf16.mxu0 0
    %4268 = vmatpush2.bf16.msra.mxu0 %v4187
    %4269 = vmatprep.subr.bf16.mxu0 0
    %4270 = vmatpush2.bf16.msra.mxu0 %v4186
    %4271 = vmatprep.subr.bf16.mxu0 0
    %4272 = vmatpush2.bf16.msra.mxu0 %v4185
    %4273 = vmatprep.mubr.bf16.mxu0 %v3975
    %4274 = vmatmul.mubr.bf16.gmra.mxu0 %v3974
    %v4275 = vpop.f32.mrf.mxu0
    %v4276 = vadd.f32 %v4047, %v4275
    %v4277 = vpop.f32.mrf.mxu0
    %v4278 = vpop.f32.mrf.mxu0
    %v4279 = vadd.f32 %v4047, %v4278
    %v4280 = vpop.f32.mrf.mxu0
    %4281 = vdwg.mxu0
    %4282 = vmatprep.subr.bf16.mxu0 0
    %4283 = vmatpush1.bf16.msra.mxu0 %v4200
    %4284 = vmatprep.subr.bf16.mxu0 0
    %4285 = vmatpush1.bf16.msra.mxu0 %v4199
    %4286 = vmatprep.subr.bf16.mxu0 0
    %4287 = vmatpush1.bf16.msra.mxu0 %v4198
    %4288 = vmatprep.subr.bf16.mxu0 0
    %4289 = vmatpush1.bf16.msra.mxu0 %v4197
    %4290 = vmatprep.subr.bf16.mxu0 0
    %4291 = vmatpush1.bf16.msra.mxu0 %v4196
    %4292 = vmatprep.subr.bf16.mxu0 0
    %4293 = vmatpush1.bf16.msra.mxu0 %v4195
    %4294 = vmatprep.subr.bf16.mxu0 0
    %4295 = vmatpush1.bf16.msra.mxu0 %v4194
    %4296 = vmatprep.subr.bf16.mxu0 0
    %4297 = vmatpush1.bf16.msra.mxu0 %v4193
    %4298 = vmatprep.subr.bf16.mxu0 0
    %4299 = vmatpush2.bf16.msra.mxu0 %v4208
    %4300 = vmatprep.subr.bf16.mxu0 0
    %4301 = vmatpush2.bf16.msra.mxu0 %v4207
    %4302 = vmatprep.subr.bf16.mxu0 0
    %4303 = vmatpush2.bf16.msra.mxu0 %v4206
    %4304 = vmatprep.subr.bf16.mxu0 0
    %4305 = vmatpush2.bf16.msra.mxu0 %v4205
    %4306 = vmatprep.subr.bf16.mxu0 0
    %4307 = vmatpush2.bf16.msra.mxu0 %v4204
    %4308 = vmatprep.subr.bf16.mxu0 0
    %4309 = vmatpush2.bf16.msra.mxu0 %v4203
    %4310 = vmatprep.subr.bf16.mxu0 0
    %4311 = vmatpush2.bf16.msra.mxu0 %v4202
    %4312 = vmatprep.subr.bf16.mxu0 0
    %4313 = vmatpush2.bf16.msra.mxu0 %v4201
    %4314 = vmatprep.mubr.bf16.mxu0 %v3977
    %4315 = vmatmul.mubr.bf16.gmra.mxu0 %v3976
    %v4316 = vpop.f32.mrf.mxu0
    %v4317 = vadd.f32 %v4276, %v4316
    %v4318 = vpop.f32.mrf.mxu0
    %v4319 = vpop.f32.mrf.mxu0
    %v4320 = vadd.f32 %v4279, %v4319
    %v4321 = vpop.f32.mrf.mxu0
    %4322 = vdwg.mxu0
    %v4323 = vmax.f32 %v4317, 0.0
    %v4324 = vmax.f32 %v4320, 0.0
    %v4325 = vpack.c.bf16 %v4324, %v4323
    %v4326 = vld [vmem:[#allocation9] sm:$0xf]
    %v4327 = vld [vmem:[#allocation9 + $0x4] sm:$0xf]
    %v4328 = vld [vmem:[#allocation9 + $0x8] sm:$0xf]
    %v4329 = vld [vmem:[#allocation9 + $0xc] sm:$0xf]
    %v4330 = vld [vmem:[#allocation9 + $0x10] sm:$0xf]
    %v4331 = vld [vmem:[#allocation9 + $0x14] sm:$0xf]
    %v4332 = vld [vmem:[#allocation9 + $0x18] sm:$0xf]
    %v4333 = vld [vmem:[#allocation9 + $0x1c] sm:$0xf]
    %v4334 = vld [vmem:[#allocation9 + $0x20] sm:$0xf]
    %v4335 = vld [vmem:[#allocation9 + $0x24] sm:$0xf]
    %v4336 = vld [vmem:[#allocation9 + $0x28] sm:$0xf]
    %v4337 = vld [vmem:[#allocation9 + $0x2c] sm:$0xf]
    %v4338 = vld [vmem:[#allocation9 + $0x30] sm:$0xf]
    %v4339 = vld [vmem:[#allocation9 + $0x34] sm:$0xf]
    %v4340 = vld [vmem:[#allocation9 + $0x38] sm:$0xf]
    %v4341 = vld [vmem:[#allocation9 + $0x3c] sm:$0xf]
    %v4342 = vld [vmem:[#allocation10] sm:$0x1]
    %v4344 = vlaneseq
    %v4345 = vshrl.u32 %v4344, 7
    %v4346 = vsub.s32 0, %v4345
    %v4347 = vrot.slane %v4342, %v4346
    %v4365 = vunpack.c.l.b16 %v4326
    %v4366 = vunpack.c.l.b16 %v4327
    %v4367 = vunpack.c.l.b16 %v4328
    %v4368 = vunpack.c.l.b16 %v4329
    %v4369 = vunpack.c.l.b16 %v4330
    %v4370 = vunpack.c.l.b16 %v4331
    %v4371 = vunpack.c.l.b16 %v4332
    %v4372 = vunpack.c.l.b16 %v4333
    %v4373 = vunpack.c.l.b16 %v4334
    %v4374 = vunpack.c.l.b16 %v4335
    %v4375 = vunpack.c.l.b16 %v4336
    %v4376 = vunpack.c.l.b16 %v4337
    %v4377 = vunpack.c.l.b16 %v4338
    %v4378 = vunpack.c.l.b16 %v4339
    %v4379 = vunpack.c.l.b16 %v4340
    %v4380 = vunpack.c.l.b16 %v4341
    %v4381 = vpack.c.b16 %v4366, %v4365
    %v4382 = vpack.c.b16 %v4368, %v4367
    %v4383 = vpack.c.b16 %v4370, %v4369
    %v4384 = vpack.c.b16 %v4372, %v4371
    %v4385 = vpack.c.b16 %v4374, %v4373
    %v4386 = vpack.c.b16 %v4376, %v4375
    %v4387 = vpack.c.b16 %v4378, %v4377
    %v4388 = vpack.c.b16 %v4380, %v4379
    %4397 = vmatprep.subr.bf16.mxu0 0
    %4398 = vmatpush1.bf16.msra.mxu0 %v4388
    %4399 = vmatprep.subr.bf16.mxu0 0
    %4400 = vmatpush1.bf16.msra.mxu0 %v4387
    %4401 = vmatprep.subr.bf16.mxu0 0
    %4402 = vmatpush1.bf16.msra.mxu0 %v4386
    %4403 = vmatprep.subr.bf16.mxu0 0
    %4404 = vmatpush1.bf16.msra.mxu0 %v4385
    %4405 = vmatprep.subr.bf16.mxu0 0
    %4406 = vmatpush1.bf16.msra.mxu0 %v4384
    %4407 = vmatprep.subr.bf16.mxu0 0
    %4408 = vmatpush1.bf16.msra.mxu0 %v4383
    %4409 = vmatprep.subr.bf16.mxu0 0
    %4410 = vmatpush1.bf16.msra.mxu0 %v4382
    %4411 = vmatprep.subr.bf16.mxu0 0
    %4412 = vmatpush1.bf16.msra.mxu0 %v4381
    %4413 = vmatprep.subr.bf16.mxu0 0
    %4414 = vmatpush2.bf16.msra.mxu0 0
    %4415 = vmatprep.subr.bf16.mxu0 0
    %4416 = vmatpush2.bf16.msra.mxu0 0
    %4417 = vmatprep.subr.bf16.mxu0 0
    %4418 = vmatpush2.bf16.msra.mxu0 0
    %4419 = vmatprep.subr.bf16.mxu0 0
    %4420 = vmatpush2.bf16.msra.mxu0 0
    %4421 = vmatprep.subr.bf16.mxu0 0
    %4422 = vmatpush2.bf16.msra.mxu0 0
    %4423 = vmatprep.subr.bf16.mxu0 0
    %4424 = vmatpush2.bf16.msra.mxu0 0
    %4425 = vmatprep.subr.bf16.mxu0 0
    %4426 = vmatpush2.bf16.msra.mxu0 0
    %4427 = vmatprep.subr.bf16.mxu0 0
    %4428 = vmatpush2.bf16.msra.mxu0 0
    %4429 = vmatprep.mubr.bf16.mxu0 0
    %4430 = vmatmul.mubr.bf16.gmra.mxu0 %v4325
    %v4431 = vpop.f32.mrf.mxu0
    %v4432 = vadd.f32 %v4347, %v4431
    %v4433 = vpop.f32.mrf.mxu0
    %v4434 = vpop.f32.mrf.mxu0
    %v4435 = vadd.f32 %v4347, %v4434
    %v4436 = vpop.f32.mrf.mxu0
    %4437 = vdwg.mxu0
    %v4438 = vmax.f32 %v4432, 0.0
    %v4439 = vmax.f32 %v4435, 0.0
    %v4440 = vpack.c.bf16 %v4439, %v4438
    %v4441 = vld [vmem:[#allocation12] sm:$0xf]
    %v4442 = vld [vmem:[#allocation12 + $0x4] sm:$0xf]
    %v4443 = vld [vmem:[#allocation12 + $0x8] sm:$0xf]
    %v4444 = vld [vmem:[#allocation12 + $0xc] sm:$0xf]
    %v4445 = vld [vmem:[#allocation12 + $0x10] sm:$0xf]
    %v4446 = vld [vmem:[#allocation12 + $0x14] sm:$0xf]
    %v4447 = vld [vmem:[#allocation12 + $0x18] sm:$0xf]
    %v4448 = vld [vmem:[#allocation12 + $0x1c] sm:$0xf]
    %v4449 = vld [vmem:[#allocation12 + $0x20] sm:$0xf]
    %v4450 = vld [vmem:[#allocation12 + $0x24] sm:$0xf]
    %v4451 = vld [vmem:[#allocation12 + $0x28] sm:$0xf]
    %v4452 = vld [vmem:[#allocation12 + $0x2c] sm:$0xf]
    %v4453 = vld [vmem:[#allocation12 + $0x30] sm:$0xf]
    %v4454 = vld [vmem:[#allocation12 + $0x34] sm:$0xf]
    %v4455 = vld [vmem:[#allocation12 + $0x38] sm:$0xf]
    %v4456 = vld [vmem:[#allocation12 + $0x3c] sm:$0xf]
    %v4457 = vld [vmem:[#allocation13] sm:$0x1]
    %v4459 = vlaneseq
    %v4460 = vshrl.u32 %v4459, 7
    %v4461 = vsub.s32 0, %v4460
    %v4462 = vrot.slane %v4457, %v4461
    %v4480 = vunpack.c.l.b16 %v4441
    %v4481 = vunpack.c.l.b16 %v4442
    %v4482 = vunpack.c.l.b16 %v4443
    %v4483 = vunpack.c.l.b16 %v4444
    %v4484 = vunpack.c.l.b16 %v4445
    %v4485 = vunpack.c.l.b16 %v4446
    %v4486 = vunpack.c.l.b16 %v4447
    %v4487 = vunpack.c.l.b16 %v4448
    %v4488 = vunpack.c.l.b16 %v4449
    %v4489 = vunpack.c.l.b16 %v4450
    %v4490 = vunpack.c.l.b16 %v4451
    %v4491 = vunpack.c.l.b16 %v4452
    %v4492 = vunpack.c.l.b16 %v4453
    %v4493 = vunpack.c.l.b16 %v4454
    %v4494 = vunpack.c.l.b16 %v4455
    %v4495 = vunpack.c.l.b16 %v4456
    %v4496 = vpack.c.b16 %v4481, %v4480
    %v4497 = vpack.c.b16 %v4483, %v4482
    %v4498 = vpack.c.b16 %v4485, %v4484
    %v4499 = vpack.c.b16 %v4487, %v4486
    %v4500 = vpack.c.b16 %v4489, %v4488
    %v4501 = vpack.c.b16 %v4491, %v4490
    %v4502 = vpack.c.b16 %v4493, %v4492
    %v4503 = vpack.c.b16 %v4495, %v4494
    %4512 = vmatprep.subr.bf16.mxu0 0
    %4513 = vmatpush1.bf16.msra.mxu0 %v4503
    %4514 = vmatprep.subr.bf16.mxu0 0
    %4515 = vmatpush1.bf16.msra.mxu0 %v4502
    %4516 = vmatprep.subr.bf16.mxu0 0
    %4517 = vmatpush1.bf16.msra.mxu0 %v4501
    %4518 = vmatprep.subr.bf16.mxu0 0
    %4519 = vmatpush1.bf16.msra.mxu0 %v4500
    %4520 = vmatprep.subr.bf16.mxu0 0
    %4521 = vmatpush1.bf16.msra.mxu0 %v4499
    %4522 = vmatprep.subr.bf16.mxu0 0
    %4523 = vmatpush1.bf16.msra.mxu0 %v4498
    %4524 = vmatprep.subr.bf16.mxu0 0
    %4525 = vmatpush1.bf16.msra.mxu0 %v4497
    %4526 = vmatprep.subr.bf16.mxu0 0
    %4527 = vmatpush1.bf16.msra.mxu0 %v4496
    %4528 = vmatprep.subr.bf16.mxu0 0
    %4529 = vmatpush2.bf16.msra.mxu0 0
    %4530 = vmatprep.subr.bf16.mxu0 0
    %4531 = vmatpush2.bf16.msra.mxu0 0
    %4532 = vmatprep.subr.bf16.mxu0 0
    %4533 = vmatpush2.bf16.msra.mxu0 0
    %4534 = vmatprep.subr.bf16.mxu0 0
    %4535 = vmatpush2.bf16.msra.mxu0 0
    %4536 = vmatprep.subr.bf16.mxu0 0
    %4537 = vmatpush2.bf16.msra.mxu0 0
    %4538 = vmatprep.subr.bf16.mxu0 0
    %4539 = vmatpush2.bf16.msra.mxu0 0
    %4540 = vmatprep.subr.bf16.mxu0 0
    %4541 = vmatpush2.bf16.msra.mxu0 0
    %4542 = vmatprep.subr.bf16.mxu0 0
    %4543 = vmatpush2.bf16.msra.mxu0 0
    %4544 = vmatprep.mubr.bf16.mxu0 0
    %4545 = vmatmul.mubr.bf16.gmra.mxu0 %v4440
    %v4546 = vpop.f32.mrf.mxu0
    %v4547 = vadd.f32 %v4462, %v4546
    %v4548 = vpop.f32.mrf.mxu0
    %v4549 = vpop.f32.mrf.mxu0
    %v4550 = vadd.f32 %v4462, %v4549
    %v4551 = vpop.f32.mrf.mxu0
    %4552 = vdwg.mxu0
    %4553 = vst [vmem:[%s10] sm:$0xff] %v4547
    %4554 = vst [vmem:[%s10 + $0x8] sm:$0xff] %v4550
    %v4556 = vunpack.c.l.b16 %v4440
    %v4557 = vunpack.c.h.b16 %v4440
    %v4558 = vpack.c.b16 %v4556, %v4556
    %v4559 = vpack.c.b16 %v4557, %v4557
    %4562 = vst [vmem:[%s9] sm:$0xf] %v4558
    %4563 = vst [vmem:[%s9 + $0x4] sm:$0xf] %v4559
    // Predicated region
    $region70: #{forward.1} parent=1 // pred_check
      _
    $region71: #{forward.1} parent=1 // pred_check_branch
      %4565 = sbr.rel (0) target = $region73
    $region72: #{forward.1} parent=1 // pred_region
      _
    $region73: #{forward.1} parent=1 // pred_fallthru
      _
    // Predicated region
    $region74: #{forward.1} parent=1 // pred_check
      _
    $region75: #{forward.1} parent=1 // pred_check_branch
      %4567 = sbr.rel (0) target = $region77
    $region76: #{forward.1} parent=1 // pred_region
      _
    $region77: #{forward.1} parent=1 // pred_fallthru
      _
    // Predicated region
    $region78: #{forward.1} parent=1 // pred_check
      _
    $region79: #{forward.1} parent=1 // pred_check_branch
      %4569 = sbr.rel (0) target = $region81
    $region80: #{forward.1} parent=1 // pred_region
      _
    $region81: #{forward.1} parent=1 // pred_fallthru
      _
    // Predicated region
    $region82: #{forward.1} parent=1 // pred_check
      _
    $region83: #{forward.1} parent=1 // pred_check_branch
      %4571 = sbr.rel (0) target = $region85
    $region84: #{forward.1} parent=1 // pred_region
      _
    $region85: #{forward.1} parent=1 // pred_fallthru
      _
    %4572 = vsyncpa [#allocation3], 1
    %4573 = vsyncpa [#allocation5], 1
    %4574 = vsyncpa [#allocation8], 1
    %4575 = vsyncpa [#allocation11], 1
    %4576 = vsyncpa [#allocation14], 1

</llo_original>
